<compile_context>
chip_gen: v7x
topology: tpu7x:2x2x1
jax: 0.10.0
libtpu: 0.0.40
codegen_flags: <defaults>
</compile_context>

<pallas_src>
import functools

import jax
import jax.numpy as jnp
from jax import lax
from jax.experimental import pallas as pl
from jax.experimental.pallas import tpu as pltpu

NUM_CLASSES = 3
F16_EPS = 0.0009765625  # torch.finfo(torch.float16).eps
OHEM_BISECT_ITERS = 20  # losses are clamped to [0, 100] -> ~1e-4 resolution


def _bce_logits(x, g):
    # Stable BCE-with-logits, matching x_bce(sigmoid(x), g) with the per-term
    # log clamp at -100 (torch F.binary_cross_entropy semantics).
    #   -log(sigmoid(x))     = max(-x, 0) + log(1 + exp(-|x|))
    #   -log(1 - sigmoid(x)) = max( x, 0) + log(1 + exp(-|x|))
    sp_shared = jnp.log(1.0 + jnp.exp(-jnp.abs(x)))
    neg_log_p = jnp.maximum(-x, 0.0) + sp_shared
    neg_log_1mp = jnp.maximum(x, 0.0) + sp_shared
    return (g * jnp.minimum(neg_log_p, 100.0)
            + (1.0 - g) * jnp.minimum(neg_log_1mp, 100.0))


def _loss_kernel(pconf_ref, pcls_ref, ptxywh_ref, gy_ref, out_ref, *,
                 num_classes, hwa):
    s_ = 1 + num_classes
    rows = pconf_ref.shape[1]            # HWA_pad // 128 (multiple of 8)

    pconf = pconf_ref[0].astype(jnp.float32)     # (rows, 128)
    pcls = pcls_ref[0].astype(jnp.float32)       # (NC, rows, 128)
    ptxywh = ptxywh_ref[0].astype(jnp.float32)   # (4, rows, 128)
    gy = gy_ref[0]                               # (1+NC+4+1, rows, 128) f32

    # Validity mask for the HWA padding (handled in-kernel; no wrapper pass).
    flat = (lax.broadcasted_iota(jnp.int32, (rows, 128), 0) * 128
            + lax.broadcasted_iota(jnp.int32, (rows, 128), 1))
    valid = flat < hwa

    ones_lane = jnp.ones((128, 1), jnp.float32)

    def lane_sum(x):
        # Full sum: small channel axis folded on the VALU, lane axis reduced
        # on the (otherwise idle) MXU, tiny sublane reduce at the end.
        if x.ndim == 3:
            x = jnp.sum(x, axis=0)
        col = jnp.dot(x, ones_lane, preferred_element_type=jnp.float32)
        return jnp.sum(col)

    gconf = gy[0]                                       # (rows, 128)
    mask_pos = jnp.logical_and(gconf > 0.0, valid)
    mask_neg = jnp.logical_and(gconf == 0.0, valid)
    mask_pos_f = mask_pos.astype(jnp.float32)

    nums_pos = jnp.maximum(lane_sum(mask_pos_f), F16_EPS)
    inv_nums = 1.0 / nums_pos                           # hoisted; reused 5x

    # ---------------- cls loss (BCE, weighted by pos mask) ----------------
    bce_cls = _bce_logits(pcls, gy[1:s_])
    l_cls = lane_sum(bce_cls * mask_pos_f) * inv_nums

    # ---------------- conf loss (BCE + OHEM hard negatives) ---------------
    bce_conf = _bce_logits(pconf, gconf)

    # f_ohem: keep the ~3*nums_pos hardest (largest BCE) true negatives.
    # Threshold found by bisection: smallest t with count(loss_det > t) <= k.
    loss_det = jnp.where(mask_neg, bce_conf, 0.0)
    k_target = nums_pos * 3.0
    max_loss = jnp.max(loss_det)

    def _bisect_body(_, carry):
        lo, hi = carry
        mid = 0.5 * (lo + hi)
        cnt = lane_sum((loss_det > mid).astype(jnp.float32))
        take = cnt <= k_target
        return (jnp.where(take, lo, mid), jnp.where(take, mid, hi))

    _, hi_f = lax.fori_loop(0, OHEM_BISECT_ITERS, _bisect_body,
                            (jnp.float32(0.0), max_loss), unroll=True)
    cnt_all = lane_sum((loss_det > 0.0).astype(jnp.float32))
    thresh = jnp.where(cnt_all <= k_target, jnp.float32(0.0), hi_f)
    mask_neg_hard_f = (loss_det > thresh).astype(jnp.float32)

    l_conf_pos = lane_sum(bce_conf * mask_pos_f) * inv_nums
    l_conf_neg = lane_sum(bce_conf * mask_neg_hard_f) * inv_nums

    # ---------------- box loss: xy -> BCE, wh -> MSE -----------------------
    w_pos = mask_pos_f * gy[s_ + 4]                     # (rows, 128)
    bce_xy = _bce_logits(ptxywh[0:2], gy[s_:s_ + 2])
    l_txty = lane_sum(bce_xy * w_pos) * inv_nums
    mse_wh = (ptxywh[2:4] - gy[s_ + 2:s_ + 4]) ** 2
    l_twth = lane_sum(mse_wh * w_pos) * inv_nums

    l_total = l_conf_pos + l_conf_neg + l_cls + l_txty + l_twth

    # Per-batch partials: scalars in lanes 0..5 of a lane-dense (1,8,128) block.
    lane = lax.broadcasted_iota(jnp.int32, (1, 8, 128), 2)
    out_ref[...] = (jnp.where(lane == 0, l_total, 0.0)
                    + jnp.where(lane == 1, l_conf_pos, 0.0)
                    + jnp.where(lane == 2, l_conf_neg, 0.0)
                    + jnp.where(lane == 3, l_cls, 0.0)
                    + jnp.where(lane == 4, l_txty, 0.0)
                    + jnp.where(lane == 5, l_twth, 0.0))


@functools.partial(jax.jit, static_argnames=("num_classes", "pred_dtype"))
def yolo_v3_loss(pconf, pcls, ptxywh, gyolos, num_classes=NUM_CLASSES,
                 pred_dtype=jnp.bfloat16):
    """Returns (l_total, log_dict) like LossYOLO_v3.forward (MODE_TRAIN != 5).

    log_dict holds device scalars (no host sync; jit/grad friendly).
    """
    batch, hwa, _ = ptxywh.shape
    s_ = 1 + num_classes
    c_gy = s_ + 4 + 1                 # conf | cls | txty | twth | weight

    hwa_pad = ((hwa + 1023) // 1024) * 1024   # rows multiple of 8 -> dense vregs
    rows = hwa_pad // 128
    pad = hwa_pad - hwa

    def to_tiles(x, dtype):
        # (B, HWA, C) -> (B, C, rows, 128); XLA fuses transpose+pad+reshape+cast.
        x = jnp.transpose(x, (0, 2, 1))
        if pad:
            x = jnp.pad(x, ((0, 0), (0, 0), (0, pad)))
        return x.reshape(batch, x.shape[1], rows, 128).astype(dtype)

    # Single-channel conf needs no transpose at all.
    pconf_t = pconf[..., 0]
    if pad:
        pconf_t = jnp.pad(pconf_t, ((0, 0), (0, pad)))
    pconf_t = pconf_t.reshape(batch, rows, 128).astype(pred_dtype)

    pcls_t = to_tiles(pcls, pred_dtype)
    ptxywh_t = to_tiles(ptxywh, pred_dtype)
    gy_t = to_tiles(gyolos[..., :c_gy], jnp.float32)

    kernel = functools.partial(_loss_kernel, num_classes=num_classes, hwa=hwa)
    out = pl.pallas_call(
        kernel,
        out_shape=jax.ShapeDtypeStruct((batch, 8, 128), jnp.float32),
        grid_spec=pltpu.PrefetchScalarGridSpec(
            num_scalar_prefetch=0,
            grid=(batch,),
            in_specs=[
                pl.BlockSpec((1, rows, 128), lambda b: (b, 0, 0)),
                pl.BlockSpec((1, num_classes, rows, 128),
                             lambda b: (b, 0, 0, 0)),
                pl.BlockSpec((1, 4, rows, 128), lambda b: (b, 0, 0, 0)),
                pl.BlockSpec((1, c_gy, rows, 128), lambda b: (b, 0, 0, 0)),
            ],
            out_specs=pl.BlockSpec((1, 8, 128), lambda b: (b, 0, 0)),
        ),
        compiler_params=pltpu.CompilerParams(
            # v7x: use an even per-device batch so both TCs get equal work.
            dimension_semantics=("parallel",)),
    )(pconf_t, pcls_t, ptxywh_t, gy_t)

    # Batch-mean of the six components (tiny reduction in plain JAX).
    comps = jnp.mean(out[:, 0, :6], axis=0)
    l_total = comps[0]
    log_dict = {
        "l_total": comps[0],
        "l_conf_pos": comps[1],
        "l_conf_neg": comps[2],
        "l_cls": comps[3],
        "l_xy": comps[4],
        "l_wh": comps[5],
    }
    return l_total, log_dict


if __name__ == "__main__":
    # Small shapes consistent with the module's docstring ([3, 10647, ...]),
    # scaled down: batch=3, hwa=507 (3 anchors x 13x13 cells, exercises the
    # lane-padding path), num_classes=3.
    B, HWA, NC = 3, 507, NUM_CLASSES
    gdim = 1 + NC + 4 + 1 + 4  # conf, onehot cls, txty/twth, weight, ltrb(vis)

    key = jax.random.PRNGKey(0)
    k1, k2, k3, k4, k5, k6, k7, k8 = jax.random.split(key, 8)

    pconf = jax.random.normal(k1, (B, HWA, 1), jnp.float32)
    pcls = jax.random.normal(k2, (B, HWA, NC), jnp.float32)
    ptxywh = jax.random.normal(k3, (B, HWA, 4), jnp.float32)

    # Deterministic synthetic encoded targets (stand-in for fmatch4yolov3_iou).
    u = jax.random.uniform(k4, (B, HWA))
    gconf = jnp.where(u < 0.05, 1.0, jnp.where(u > 0.97, -1.0, 0.0))  # pos/ign/neg
    gcls_onehot = jax.nn.one_hot(
        jax.random.randint(k5, (B, HWA), 0, NC), NC, dtype=jnp.float32)
    gtxty = jax.random.uniform(k6, (B, HWA, 2), jnp.float32)
    gtwth = 0.5 * jax.random.normal(k7, (B, HWA, 2), jnp.float32)
    weight = jax.random.uniform(k8, (B, HWA, 1), jnp.float32,
                                minval=1.0, maxval=2.0)
    gltrb_vis = jnp.zeros((B, HWA, 4), jnp.float32)
    gyolos = jnp.concatenate(
        [gconf[..., None], gcls_onehot, gtxty, gtwth, weight, gltrb_vis], axis=-1)
    assert gyolos.shape == (B, HWA, gdim)

    l_total, log_dict = yolo_v3_loss(pconf, pcls, ptxywh, gyolos)
    jax.block_until_ready(l_total)
    print("KERNEL_OK")
</pallas_src>

<mosaic_0001>
module attributes {stable_mosaic.version = 11 : i64} {
  func.func @_loss_kernel(%arg0: i32, %arg1: memref<1x8x128xbf16, #tpu.memory_space<vmem>>, %arg2: memref<1x3x8x128xbf16, #tpu.memory_space<vmem>>, %arg3: memref<1x4x8x128xbf16, #tpu.memory_space<vmem>>, %arg4: memref<1x9x8x128xf32, #tpu.memory_space<vmem>>, %arg5: memref<1x8x128xf32, #tpu.memory_space<vmem>>) attributes {dimension_semantics = [#tpu.dimension_semantics<parallel>], iteration_bounds = array<i64: 3>, scalar_prefetch = 0 : i64, scratch_operands = 0 : i64, tpu.core_type = #tpu.core_type<tc>, window_params = [{transform_indices = @transform_0, window_bounds = array<i64: 1, 8, 128>}, {transform_indices = @transform_1, window_bounds = array<i64: 1, 3, 8, 128>}, {transform_indices = @transform_2, window_bounds = array<i64: 1, 4, 8, 128>}, {transform_indices = @transform_3, window_bounds = array<i64: 1, 9, 8, 128>}, {transform_indices = @transform_4, window_bounds = array<i64: 1, 8, 128>}]} {
    %c0 = arith.constant 0 : index
    %c0_0 = arith.constant 0 : index
    %c0_1 = arith.constant 0 : index
    %0 = vector.load %arg1[%c0, %c0_0, %c0_1] : memref<1x8x128xbf16, #tpu.memory_space<vmem>>, vector<1x8x128xbf16>
    %1 = vector.shape_cast %0 : vector<1x8x128xbf16> to vector<8x128xbf16>
    %2 = arith.extf %1 : vector<8x128xbf16> to vector<8x128xf32>
    %c0_2 = arith.constant 0 : index
    %c0_3 = arith.constant 0 : index
    %c0_4 = arith.constant 0 : index
    %c0_5 = arith.constant 0 : index
    %3 = vector.load %arg2[%c0_2, %c0_3, %c0_4, %c0_5] : memref<1x3x8x128xbf16, #tpu.memory_space<vmem>>, vector<1x3x8x128xbf16>
    %4 = vector.shape_cast %3 : vector<1x3x8x128xbf16> to vector<3x8x128xbf16>
    %5 = arith.extf %4 : vector<3x8x128xbf16> to vector<3x8x128xf32>
    %c0_6 = arith.constant 0 : index
    %c0_7 = arith.constant 0 : index
    %c0_8 = arith.constant 0 : index
    %c0_9 = arith.constant 0 : index
    %6 = vector.load %arg3[%c0_6, %c0_7, %c0_8, %c0_9] : memref<1x4x8x128xbf16, #tpu.memory_space<vmem>>, vector<1x4x8x128xbf16>
    %7 = vector.shape_cast %6 : vector<1x4x8x128xbf16> to vector<4x8x128xbf16>
    %8 = arith.extf %7 : vector<4x8x128xbf16> to vector<4x8x128xf32>
    %c0_10 = arith.constant 0 : index
    %c0_11 = arith.constant 0 : index
    %c0_12 = arith.constant 0 : index
    %c0_13 = arith.constant 0 : index
    %9 = vector.load %arg4[%c0_10, %c0_11, %c0_12, %c0_13] : memref<1x9x8x128xf32, #tpu.memory_space<vmem>>, vector<1x9x8x128xf32>
    %10 = vector.shape_cast %9 : vector<1x9x8x128xf32> to vector<9x8x128xf32>
    %11 = tpu.iota {dimensions = array<i32: 0>} : vector<8x128xi32>
    %c128_i32 = arith.constant 128 : i32
    %12 = vector.broadcast %c128_i32 : i32 to vector<8x128xi32>
    %13 = arith.muli %11, %12 : vector<8x128xi32>
    %14 = tpu.iota {dimensions = array<i32: 1>} : vector<8x128xi32>
    %15 = arith.addi %13, %14 : vector<8x128xi32>
    %c507_i32 = arith.constant 507 : i32
    %16 = vector.broadcast %c507_i32 : i32 to vector<8x128xi32>
    %17 = arith.cmpi slt, %15, %16 : vector<8x128xi32>
    %cst = arith.constant 1.000000e+00 : f32
    %18 = vector.broadcast %cst : f32 to vector<128x1xf32>
    %19 = vector.extract_strided_slice %10 {offsets = [0, 0, 0], sizes = [1, 8, 128], strides = [1, 1, 1]} : vector<9x8x128xf32> to vector<1x8x128xf32>
    %20 = vector.shape_cast %19 : vector<1x8x128xf32> to vector<8x128xf32>
    %cst_14 = arith.constant 0.000000e+00 : f32
    %21 = vector.broadcast %cst_14 : f32 to vector<8x128xf32>
    %22 = arith.cmpf ogt, %20, %21 : vector<8x128xf32>
    %23 = arith.andi %22, %17 : vector<8x128xi1>
    %cst_15 = arith.constant 0.000000e+00 : f32
    %24 = vector.broadcast %cst_15 : f32 to vector<8x128xf32>
    %25 = arith.cmpf oeq, %20, %24 : vector<8x128xf32>
    %26 = arith.andi %25, %17 : vector<8x128xi1>
    %27 = arith.extui %23 : vector<8x128xi1> to vector<8x128xi32>
    %28 = arith.sitofp %27 : vector<8x128xi32> to vector<8x128xf32>
    %cst_16 = arith.constant dense<0.000000e+00> : vector<8x1xf32>
    %29 = tpu.matmul %28, %18, %cst_16 {dimension_numbers = #tpu.dot_dimension_numbers<[1], [0], [0], [1], [0, 0, 1, 1], [], []>} : vector<8x128xf32>, vector<128x1xf32>, vector<8x1xf32> -> vector<8x1xf32>
    %30 = vector.shape_cast %29 : vector<8x1xf32> to vector<1x8x1xf32>
    %cst_17 = arith.constant dense<0.000000e+00> : vector<1xf32>
    %31 = vector.multi_reduction <add>, %30, %cst_17 [1, 2] : vector<1x8x1xf32> to vector<1xf32>
    %32 = vector.shape_cast %31 : vector<1xf32> to vector<1x1x1xf32>
    %33 = vector.extract %32[0, 0, 0] : f32 from vector<1x1x1xf32>
    %cst_18 = arith.constant 9.765625E-4 : f32
    %34 = arith.maximumf %33, %cst_18 : f32
    %cst_19 = arith.constant 1.000000e+00 : f32
    %35 = arith.divf %cst_19, %34 : f32
    %36 = vector.extract_strided_slice %10 {offsets = [1, 0, 0], sizes = [3, 8, 128], strides = [1, 1, 1]} : vector<9x8x128xf32> to vector<3x8x128xf32>
    %37 = math.absf %5 : vector<3x8x128xf32>
    %cst_20 = arith.constant 0.000000e+00 : f32
    %38 = vector.broadcast %cst_20 : f32 to vector<3x8x128xf32>
    %39 = arith.subf %38, %37 : vector<3x8x128xf32>
    %40 = math.exp %39 : vector<3x8x128xf32>
    %cst_21 = arith.constant 1.000000e+00 : f32
    %41 = vector.broadcast %cst_21 : f32 to vector<3x8x128xf32>
    %42 = arith.addf %41, %40 : vector<3x8x128xf32>
    %43 = math.log %42 : vector<3x8x128xf32>
    %cst_22 = arith.constant 0.000000e+00 : f32
    %44 = vector.broadcast %cst_22 : f32 to vector<3x8x128xf32>
    %45 = arith.subf %44, %5 : vector<3x8x128xf32>
    %cst_23 = arith.constant 0.000000e+00 : f32
    %46 = vector.broadcast %cst_23 : f32 to vector<3x8x128xf32>
    %47 = arith.maximumf %45, %46 : vector<3x8x128xf32>
    %48 = arith.addf %47, %43 : vector<3x8x128xf32>
    %cst_24 = arith.constant 0.000000e+00 : f32
    %49 = vector.broadcast %cst_24 : f32 to vector<3x8x128xf32>
    %50 = arith.maximumf %5, %49 : vector<3x8x128xf32>
    %51 = arith.addf %50, %43 : vector<3x8x128xf32>
    %cst_25 = arith.constant 1.000000e+02 : f32
    %52 = vector.broadcast %cst_25 : f32 to vector<3x8x128xf32>
    %53 = arith.minimumf %48, %52 : vector<3x8x128xf32>
    %54 = arith.mulf %36, %53 : vector<3x8x128xf32>
    %cst_26 = arith.constant 1.000000e+00 : f32
    %55 = vector.broadcast %cst_26 : f32 to vector<3x8x128xf32>
    %56 = arith.subf %55, %36 : vector<3x8x128xf32>
    %cst_27 = arith.constant 1.000000e+02 : f32
    %57 = vector.broadcast %cst_27 : f32 to vector<3x8x128xf32>
    %58 = arith.minimumf %51, %57 : vector<3x8x128xf32>
    %59 = arith.mulf %56, %58 : vector<3x8x128xf32>
    %60 = arith.addf %54, %59 : vector<3x8x128xf32>
    %61 = vector.shape_cast %28 : vector<8x128xf32> to vector<1x8x128xf32>
    %62 = vector.broadcast %61 : vector<1x8x128xf32> to vector<3x8x128xf32>
    %63 = arith.mulf %60, %62 : vector<3x8x128xf32>
    %cst_28 = arith.constant dense<0.000000e+00> : vector<8x128xf32>
    %64 = vector.multi_reduction <add>, %63, %cst_28 [0] : vector<3x8x128xf32> to vector<8x128xf32>
    %cst_29 = arith.constant dense<0.000000e+00> : vector<8x1xf32>
    %65 = tpu.matmul %64, %18, %cst_29 {dimension_numbers = #tpu.dot_dimension_numbers<[1], [0], [0], [1], [0, 0, 1, 1], [], []>} : vector<8x128xf32>, vector<128x1xf32>, vector<8x1xf32> -> vector<8x1xf32>
    %66 = vector.shape_cast %65 : vector<8x1xf32> to vector<1x8x1xf32>
    %cst_30 = arith.constant dense<0.000000e+00> : vector<1xf32>
    %67 = vector.multi_reduction <add>, %66, %cst_30 [1, 2] : vector<1x8x1xf32> to vector<1xf32>
    %68 = vector.shape_cast %67 : vector<1xf32> to vector<1x1x1xf32>
    %69 = vector.extract %68[0, 0, 0] : f32 from vector<1x1x1xf32>
    %70 = arith.mulf %69, %35 : f32
    %71 = math.absf %2 : vector<8x128xf32>
    %cst_31 = arith.constant 0.000000e+00 : f32
    %72 = vector.broadcast %cst_31 : f32 to vector<8x128xf32>
    %73 = arith.subf %72, %71 : vector<8x128xf32>
    %74 = math.exp %73 : vector<8x128xf32>
    %cst_32 = arith.constant 1.000000e+00 : f32
    %75 = vector.broadcast %cst_32 : f32 to vector<8x128xf32>
    %76 = arith.addf %75, %74 : vector<8x128xf32>
    %77 = math.log %76 : vector<8x128xf32>
    %cst_33 = arith.constant 0.000000e+00 : f32
    %78 = vector.broadcast %cst_33 : f32 to vector<8x128xf32>
    %79 = arith.subf %78, %2 : vector<8x128xf32>
    %cst_34 = arith.constant 0.000000e+00 : f32
    %80 = vector.broadcast %cst_34 : f32 to vector<8x128xf32>
    %81 = arith.maximumf %79, %80 : vector<8x128xf32>
    %82 = arith.addf %81, %77 : vector<8x128xf32>
    %cst_35 = arith.constant 0.000000e+00 : f32
    %83 = vector.broadcast %cst_35 : f32 to vector<8x128xf32>
    %84 = arith.maximumf %2, %83 : vector<8x128xf32>
    %85 = arith.addf %84, %77 : vector<8x128xf32>
    %cst_36 = arith.constant 1.000000e+02 : f32
    %86 = vector.broadcast %cst_36 : f32 to vector<8x128xf32>
    %87 = arith.minimumf %82, %86 : vector<8x128xf32>
    %88 = arith.mulf %20, %87 : vector<8x128xf32>
    %cst_37 = arith.constant 1.000000e+00 : f32
    %89 = vector.broadcast %cst_37 : f32 to vector<8x128xf32>
    %90 = arith.subf %89, %20 : vector<8x128xf32>
    %cst_38 = arith.constant 1.000000e+02 : f32
    %91 = vector.broadcast %cst_38 : f32 to vector<8x128xf32>
    %92 = arith.minimumf %85, %91 : vector<8x128xf32>
    %93 = arith.mulf %90, %92 : vector<8x128xf32>
    %94 = arith.addf %88, %93 : vector<8x128xf32>
    %cst_39 = arith.constant 0.000000e+00 : f32
    %95 = vector.broadcast %cst_39 : f32 to vector<8x128xf32>
    %96 = arith.select %26, %94, %95 : vector<8x128xi1>, vector<8x128xf32>
    %cst_40 = arith.constant 3.000000e+00 : f32
    %97 = arith.mulf %34, %cst_40 : f32
    %98 = vector.shape_cast %96 : vector<8x128xf32> to vector<1x8x128xf32>
    %cst_41 = arith.constant dense<0xFF800000> : vector<1xf32>
    %99 = vector.multi_reduction <maximumf>, %98, %cst_41 [1, 2] : vector<1x8x128xf32> to vector<1xf32>
    %100 = vector.shape_cast %99 : vector<1xf32> to vector<1x1x1xf32>
    %101 = vector.extract %100[0, 0, 0] : f32 from vector<1x1x1xf32>
    %cst_42 = arith.constant 0.000000e+00 : f32
    %c0_i32 = arith.constant 0 : i32
    %102 = arith.addf %cst_42, %101 : f32
    %cst_43 = arith.constant 5.000000e-01 : f32
    %103 = arith.mulf %cst_43, %102 : f32
    %104 = vector.broadcast %103 : f32 to vector<8x128xf32>
    %105 = arith.cmpf ogt, %96, %104 : vector<8x128xf32>
    %106 = arith.extui %105 : vector<8x128xi1> to vector<8x128xi32>
    %107 = arith.sitofp %106 : vector<8x128xi32> to vector<8x128xf32>
    %cst_44 = arith.constant dense<0.000000e+00> : vector<8x1xf32>
    %108 = tpu.matmul %107, %18, %cst_44 {dimension_numbers = #tpu.dot_dimension_numbers<[1], [0], [0], [1], [0, 0, 1, 1], [], []>} : vector<8x128xf32>, vector<128x1xf32>, vector<8x1xf32> -> vector<8x1xf32>
    %109 = vector.shape_cast %108 : vector<8x1xf32> to vector<1x8x1xf32>
    %cst_45 = arith.constant dense<0.000000e+00> : vector<1xf32>
    %110 = vector.multi_reduction <add>, %109, %cst_45 [1, 2] : vector<1x8x1xf32> to vector<1xf32>
    %111 = vector.shape_cast %110 : vector<1xf32> to vector<1x1x1xf32>
    %112 = vector.extract %111[0, 0, 0] : f32 from vector<1x1x1xf32>
    %113 = arith.cmpf ole, %112, %97 : f32
    %114 = arith.select %113, %cst_42, %103 : f32
    %115 = arith.select %113, %103, %101 : f32
    %c1_i32 = arith.constant 1 : i32
    %116 = arith.addf %114, %115 : f32
    %cst_46 = arith.constant 5.000000e-01 : f32
    %117 = arith.mulf %cst_46, %116 : f32
    %118 = vector.broadcast %117 : f32 to vector<8x128xf32>
    %119 = arith.cmpf ogt, %96, %118 : vector<8x128xf32>
    %120 = arith.extui %119 : vector<8x128xi1> to vector<8x128xi32>
    %121 = arith.sitofp %120 : vector<8x128xi32> to vector<8x128xf32>
    %cst_47 = arith.constant dense<0.000000e+00> : vector<8x1xf32>
    %122 = tpu.matmul %121, %18, %cst_47 {dimension_numbers = #tpu.dot_dimension_numbers<[1], [0], [0], [1], [0, 0, 1, 1], [], []>} : vector<8x128xf32>, vector<128x1xf32>, vector<8x1xf32> -> vector<8x1xf32>
    %123 = vector.shape_cast %122 : vector<8x1xf32> to vector<1x8x1xf32>
    %cst_48 = arith.constant dense<0.000000e+00> : vector<1xf32>
    %124 = vector.multi_reduction <add>, %123, %cst_48 [1, 2] : vector<1x8x1xf32> to vector<1xf32>
    %125 = vector.shape_cast %124 : vector<1xf32> to vector<1x1x1xf32>
    %126 = vector.extract %125[0, 0, 0] : f32 from vector<1x1x1xf32>
    %127 = arith.cmpf ole, %126, %97 : f32
    %128 = arith.select %127, %114, %117 : f32
    %129 = arith.select %127, %117, %115 : f32
    %c2_i32 = arith.constant 2 : i32
    %130 = arith.addf %128, %129 : f32
    %cst_49 = arith.constant 5.000000e-01 : f32
    %131 = arith.mulf %cst_49, %130 : f32
    %132 = vector.broadcast %131 : f32 to vector<8x128xf32>
    %133 = arith.cmpf ogt, %96, %132 : vector<8x128xf32>
    %134 = arith.extui %133 : vector<8x128xi1> to vector<8x128xi32>
    %135 = arith.sitofp %134 : vector<8x128xi32> to vector<8x128xf32>
    %cst_50 = arith.constant dense<0.000000e+00> : vector<8x1xf32>
    %136 = tpu.matmul %135, %18, %cst_50 {dimension_numbers = #tpu.dot_dimension_numbers<[1], [0], [0], [1], [0, 0, 1, 1], [], []>} : vector<8x128xf32>, vector<128x1xf32>, vector<8x1xf32> -> vector<8x1xf32>
    %137 = vector.shape_cast %136 : vector<8x1xf32> to vector<1x8x1xf32>
    %cst_51 = arith.constant dense<0.000000e+00> : vector<1xf32>
    %138 = vector.multi_reduction <add>, %137, %cst_51 [1, 2] : vector<1x8x1xf32> to vector<1xf32>
    %139 = vector.shape_cast %138 : vector<1xf32> to vector<1x1x1xf32>
    %140 = vector.extract %139[0, 0, 0] : f32 from vector<1x1x1xf32>
    %141 = arith.cmpf ole, %140, %97 : f32
    %142 = arith.select %141, %128, %131 : f32
    %143 = arith.select %141, %131, %129 : f32
    %c3_i32 = arith.constant 3 : i32
    %144 = arith.addf %142, %143 : f32
    %cst_52 = arith.constant 5.000000e-01 : f32
    %145 = arith.mulf %cst_52, %144 : f32
    %146 = vector.broadcast %145 : f32 to vector<8x128xf32>
    %147 = arith.cmpf ogt, %96, %146 : vector<8x128xf32>
    %148 = arith.extui %147 : vector<8x128xi1> to vector<8x128xi32>
    %149 = arith.sitofp %148 : vector<8x128xi32> to vector<8x128xf32>
    %cst_53 = arith.constant dense<0.000000e+00> : vector<8x1xf32>
    %150 = tpu.matmul %149, %18, %cst_53 {dimension_numbers = #tpu.dot_dimension_numbers<[1], [0], [0], [1], [0, 0, 1, 1], [], []>} : vector<8x128xf32>, vector<128x1xf32>, vector<8x1xf32> -> vector<8x1xf32>
    %151 = vector.shape_cast %150 : vector<8x1xf32> to vector<1x8x1xf32>
    %cst_54 = arith.constant dense<0.000000e+00> : vector<1xf32>
    %152 = vector.multi_reduction <add>, %151, %cst_54 [1, 2] : vector<1x8x1xf32> to vector<1xf32>
    %153 = vector.shape_cast %152 : vector<1xf32> to vector<1x1x1xf32>
    %154 = vector.extract %153[0, 0, 0] : f32 from vector<1x1x1xf32>
    %155 = arith.cmpf ole, %154, %97 : f32
    %156 = arith.select %155, %142, %145 : f32
    %157 = arith.select %155, %145, %143 : f32
    %c4_i32 = arith.constant 4 : i32
    %158 = arith.addf %156, %157 : f32
    %cst_55 = arith.constant 5.000000e-01 : f32
    %159 = arith.mulf %cst_55, %158 : f32
    %160 = vector.broadcast %159 : f32 to vector<8x128xf32>
    %161 = arith.cmpf ogt, %96, %160 : vector<8x128xf32>
    %162 = arith.extui %161 : vector<8x128xi1> to vector<8x128xi32>
    %163 = arith.sitofp %162 : vector<8x128xi32> to vector<8x128xf32>
    %cst_56 = arith.constant dense<0.000000e+00> : vector<8x1xf32>
    %164 = tpu.matmul %163, %18, %cst_56 {dimension_numbers = #tpu.dot_dimension_numbers<[1], [0], [0], [1], [0, 0, 1, 1], [], []>} : vector<8x128xf32>, vector<128x1xf32>, vector<8x1xf32> -> vector<8x1xf32>
    %165 = vector.shape_cast %164 : vector<8x1xf32> to vector<1x8x1xf32>
    %cst_57 = arith.constant dense<0.000000e+00> : vector<1xf32>
    %166 = vector.multi_reduction <add>, %165, %cst_57 [1, 2] : vector<1x8x1xf32> to vector<1xf32>
    %167 = vector.shape_cast %166 : vector<1xf32> to vector<1x1x1xf32>
    %168 = vector.extract %167[0, 0, 0] : f32 from vector<1x1x1xf32>
    %169 = arith.cmpf ole, %168, %97 : f32
    %170 = arith.select %169, %156, %159 : f32
    %171 = arith.select %169, %159, %157 : f32
    %c5_i32 = arith.constant 5 : i32
    %172 = arith.addf %170, %171 : f32
    %cst_58 = arith.constant 5.000000e-01 : f32
    %173 = arith.mulf %cst_58, %172 : f32
    %174 = vector.broadcast %173 : f32 to vector<8x128xf32>
    %175 = arith.cmpf ogt, %96, %174 : vector<8x128xf32>
    %176 = arith.extui %175 : vector<8x128xi1> to vector<8x128xi32>
    %177 = arith.sitofp %176 : vector<8x128xi32> to vector<8x128xf32>
    %cst_59 = arith.constant dense<0.000000e+00> : vector<8x1xf32>
    %178 = tpu.matmul %177, %18, %cst_59 {dimension_numbers = #tpu.dot_dimension_numbers<[1], [0], [0], [1], [0, 0, 1, 1], [], []>} : vector<8x128xf32>, vector<128x1xf32>, vector<8x1xf32> -> vector<8x1xf32>
    %179 = vector.shape_cast %178 : vector<8x1xf32> to vector<1x8x1xf32>
    %cst_60 = arith.constant dense<0.000000e+00> : vector<1xf32>
    %180 = vector.multi_reduction <add>, %179, %cst_60 [1, 2] : vector<1x8x1xf32> to vector<1xf32>
    %181 = vector.shape_cast %180 : vector<1xf32> to vector<1x1x1xf32>
    %182 = vector.extract %181[0, 0, 0] : f32 from vector<1x1x1xf32>
    %183 = arith.cmpf ole, %182, %97 : f32
    %184 = arith.select %183, %170, %173 : f32
    %185 = arith.select %183, %173, %171 : f32
    %c6_i32 = arith.constant 6 : i32
    %186 = arith.addf %184, %185 : f32
    %cst_61 = arith.constant 5.000000e-01 : f32
    %187 = arith.mulf %cst_61, %186 : f32
    %188 = vector.broadcast %187 : f32 to vector<8x128xf32>
    %189 = arith.cmpf ogt, %96, %188 : vector<8x128xf32>
    %190 = arith.extui %189 : vector<8x128xi1> to vector<8x128xi32>
    %191 = arith.sitofp %190 : vector<8x128xi32> to vector<8x128xf32>
    %cst_62 = arith.constant dense<0.000000e+00> : vector<8x1xf32>
    %192 = tpu.matmul %191, %18, %cst_62 {dimension_numbers = #tpu.dot_dimension_numbers<[1], [0], [0], [1], [0, 0, 1, 1], [], []>} : vector<8x128xf32>, vector<128x1xf32>, vector<8x1xf32> -> vector<8x1xf32>
    %193 = vector.shape_cast %192 : vector<8x1xf32> to vector<1x8x1xf32>
    %cst_63 = arith.constant dense<0.000000e+00> : vector<1xf32>
    %194 = vector.multi_reduction <add>, %193, %cst_63 [1, 2] : vector<1x8x1xf32> to vector<1xf32>
    %195 = vector.shape_cast %194 : vector<1xf32> to vector<1x1x1xf32>
    %196 = vector.extract %195[0, 0, 0] : f32 from vector<1x1x1xf32>
    %197 = arith.cmpf ole, %196, %97 : f32
    %198 = arith.select %197, %184, %187 : f32
    %199 = arith.select %197, %187, %185 : f32
    %c7_i32 = arith.constant 7 : i32
    %200 = arith.addf %198, %199 : f32
    %cst_64 = arith.constant 5.000000e-01 : f32
    %201 = arith.mulf %cst_64, %200 : f32
    %202 = vector.broadcast %201 : f32 to vector<8x128xf32>
    %203 = arith.cmpf ogt, %96, %202 : vector<8x128xf32>
    %204 = arith.extui %203 : vector<8x128xi1> to vector<8x128xi32>
    %205 = arith.sitofp %204 : vector<8x128xi32> to vector<8x128xf32>
    %cst_65 = arith.constant dense<0.000000e+00> : vector<8x1xf32>
    %206 = tpu.matmul %205, %18, %cst_65 {dimension_numbers = #tpu.dot_dimension_numbers<[1], [0], [0], [1], [0, 0, 1, 1], [], []>} : vector<8x128xf32>, vector<128x1xf32>, vector<8x1xf32> -> vector<8x1xf32>
    %207 = vector.shape_cast %206 : vector<8x1xf32> to vector<1x8x1xf32>
    %cst_66 = arith.constant dense<0.000000e+00> : vector<1xf32>
    %208 = vector.multi_reduction <add>, %207, %cst_66 [1, 2] : vector<1x8x1xf32> to vector<1xf32>
    %209 = vector.shape_cast %208 : vector<1xf32> to vector<1x1x1xf32>
    %210 = vector.extract %209[0, 0, 0] : f32 from vector<1x1x1xf32>
    %211 = arith.cmpf ole, %210, %97 : f32
    %212 = arith.select %211, %198, %201 : f32
    %213 = arith.select %211, %201, %199 : f32
    %c8_i32 = arith.constant 8 : i32
    %214 = arith.addf %212, %213 : f32
    %cst_67 = arith.constant 5.000000e-01 : f32
    %215 = arith.mulf %cst_67, %214 : f32
    %216 = vector.broadcast %215 : f32 to vector<8x128xf32>
    %217 = arith.cmpf ogt, %96, %216 : vector<8x128xf32>
    %218 = arith.extui %217 : vector<8x128xi1> to vector<8x128xi32>
    %219 = arith.sitofp %218 : vector<8x128xi32> to vector<8x128xf32>
    %cst_68 = arith.constant dense<0.000000e+00> : vector<8x1xf32>
    %220 = tpu.matmul %219, %18, %cst_68 {dimension_numbers = #tpu.dot_dimension_numbers<[1], [0], [0], [1], [0, 0, 1, 1], [], []>} : vector<8x128xf32>, vector<128x1xf32>, vector<8x1xf32> -> vector<8x1xf32>
    %221 = vector.shape_cast %220 : vector<8x1xf32> to vector<1x8x1xf32>
    %cst_69 = arith.constant dense<0.000000e+00> : vector<1xf32>
    %222 = vector.multi_reduction <add>, %221, %cst_69 [1, 2] : vector<1x8x1xf32> to vector<1xf32>
    %223 = vector.shape_cast %222 : vector<1xf32> to vector<1x1x1xf32>
    %224 = vector.extract %223[0, 0, 0] : f32 from vector<1x1x1xf32>
    %225 = arith.cmpf ole, %224, %97 : f32
    %226 = arith.select %225, %212, %215 : f32
    %227 = arith.select %225, %215, %213 : f32
    %c9_i32 = arith.constant 9 : i32
    %228 = arith.addf %226, %227 : f32
    %cst_70 = arith.constant 5.000000e-01 : f32
    %229 = arith.mulf %cst_70, %228 : f32
    %230 = vector.broadcast %229 : f32 to vector<8x128xf32>
    %231 = arith.cmpf ogt, %96, %230 : vector<8x128xf32>
    %232 = arith.extui %231 : vector<8x128xi1> to vector<8x128xi32>
    %233 = arith.sitofp %232 : vector<8x128xi32> to vector<8x128xf32>
    %cst_71 = arith.constant dense<0.000000e+00> : vector<8x1xf32>
    %234 = tpu.matmul %233, %18, %cst_71 {dimension_numbers = #tpu.dot_dimension_numbers<[1], [0], [0], [1], [0, 0, 1, 1], [], []>} : vector<8x128xf32>, vector<128x1xf32>, vector<8x1xf32> -> vector<8x1xf32>
    %235 = vector.shape_cast %234 : vector<8x1xf32> to vector<1x8x1xf32>
    %cst_72 = arith.constant dense<0.000000e+00> : vector<1xf32>
    %236 = vector.multi_reduction <add>, %235, %cst_72 [1, 2] : vector<1x8x1xf32> to vector<1xf32>
    %237 = vector.shape_cast %236 : vector<1xf32> to vector<1x1x1xf32>
    %238 = vector.extract %237[0, 0, 0] : f32 from vector<1x1x1xf32>
    %239 = arith.cmpf ole, %238, %97 : f32
    %240 = arith.select %239, %226, %229 : f32
    %241 = arith.select %239, %229, %227 : f32
    %c10_i32 = arith.constant 10 : i32
    %242 = arith.addf %240, %241 : f32
    %cst_73 = arith.constant 5.000000e-01 : f32
    %243 = arith.mulf %cst_73, %242 : f32
    %244 = vector.broadcast %243 : f32 to vector<8x128xf32>
    %245 = arith.cmpf ogt, %96, %244 : vector<8x128xf32>
    %246 = arith.extui %245 : vector<8x128xi1> to vector<8x128xi32>
    %247 = arith.sitofp %246 : vector<8x128xi32> to vector<8x128xf32>
    %cst_74 = arith.constant dense<0.000000e+00> : vector<8x1xf32>
    %248 = tpu.matmul %247, %18, %cst_74 {dimension_numbers = #tpu.dot_dimension_numbers<[1], [0], [0], [1], [0, 0, 1, 1], [], []>} : vector<8x128xf32>, vector<128x1xf32>, vector<8x1xf32> -> vector<8x1xf32>
    %249 = vector.shape_cast %248 : vector<8x1xf32> to vector<1x8x1xf32>
    %cst_75 = arith.constant dense<0.000000e+00> : vector<1xf32>
    %250 = vector.multi_reduction <add>, %249, %cst_75 [1, 2] : vector<1x8x1xf32> to vector<1xf32>
    %251 = vector.shape_cast %250 : vector<1xf32> to vector<1x1x1xf32>
    %252 = vector.extract %251[0, 0, 0] : f32 from vector<1x1x1xf32>
    %253 = arith.cmpf ole, %252, %97 : f32
    %254 = arith.select %253, %240, %243 : f32
    %255 = arith.select %253, %243, %241 : f32
    %c11_i32 = arith.constant 11 : i32
    %256 = arith.addf %254, %255 : f32
    %cst_76 = arith.constant 5.000000e-01 : f32
    %257 = arith.mulf %cst_76, %256 : f32
    %258 = vector.broadcast %257 : f32 to vector<8x128xf32>
    %259 = arith.cmpf ogt, %96, %258 : vector<8x128xf32>
    %260 = arith.extui %259 : vector<8x128xi1> to vector<8x128xi32>
    %261 = arith.sitofp %260 : vector<8x128xi32> to vector<8x128xf32>
    %cst_77 = arith.constant dense<0.000000e+00> : vector<8x1xf32>
    %262 = tpu.matmul %261, %18, %cst_77 {dimension_numbers = #tpu.dot_dimension_numbers<[1], [0], [0], [1], [0, 0, 1, 1], [], []>} : vector<8x128xf32>, vector<128x1xf32>, vector<8x1xf32> -> vector<8x1xf32>
    %263 = vector.shape_cast %262 : vector<8x1xf32> to vector<1x8x1xf32>
    %cst_78 = arith.constant dense<0.000000e+00> : vector<1xf32>
    %264 = vector.multi_reduction <add>, %263, %cst_78 [1, 2] : vector<1x8x1xf32> to vector<1xf32>
    %265 = vector.shape_cast %264 : vector<1xf32> to vector<1x1x1xf32>
    %266 = vector.extract %265[0, 0, 0] : f32 from vector<1x1x1xf32>
    %267 = arith.cmpf ole, %266, %97 : f32
    %268 = arith.select %267, %254, %257 : f32
    %269 = arith.select %267, %257, %255 : f32
    %c12_i32 = arith.constant 12 : i32
    %270 = arith.addf %268, %269 : f32
    %cst_79 = arith.constant 5.000000e-01 : f32
    %271 = arith.mulf %cst_79, %270 : f32
    %272 = vector.broadcast %271 : f32 to vector<8x128xf32>
    %273 = arith.cmpf ogt, %96, %272 : vector<8x128xf32>
    %274 = arith.extui %273 : vector<8x128xi1> to vector<8x128xi32>
    %275 = arith.sitofp %274 : vector<8x128xi32> to vector<8x128xf32>
    %cst_80 = arith.constant dense<0.000000e+00> : vector<8x1xf32>
    %276 = tpu.matmul %275, %18, %cst_80 {dimension_numbers = #tpu.dot_dimension_numbers<[1], [0], [0], [1], [0, 0, 1, 1], [], []>} : vector<8x128xf32>, vector<128x1xf32>, vector<8x1xf32> -> vector<8x1xf32>
    %277 = vector.shape_cast %276 : vector<8x1xf32> to vector<1x8x1xf32>
    %cst_81 = arith.constant dense<0.000000e+00> : vector<1xf32>
    %278 = vector.multi_reduction <add>, %277, %cst_81 [1, 2] : vector<1x8x1xf32> to vector<1xf32>
    %279 = vector.shape_cast %278 : vector<1xf32> to vector<1x1x1xf32>
    %280 = vector.extract %279[0, 0, 0] : f32 from vector<1x1x1xf32>
    %281 = arith.cmpf ole, %280, %97 : f32
    %282 = arith.select %281, %268, %271 : f32
    %283 = arith.select %281, %271, %269 : f32
    %c13_i32 = arith.constant 13 : i32
    %284 = arith.addf %282, %283 : f32
    %cst_82 = arith.constant 5.000000e-01 : f32
    %285 = arith.mulf %cst_82, %284 : f32
    %286 = vector.broadcast %285 : f32 to vector<8x128xf32>
    %287 = arith.cmpf ogt, %96, %286 : vector<8x128xf32>
    %288 = arith.extui %287 : vector<8x128xi1> to vector<8x128xi32>
    %289 = arith.sitofp %288 : vector<8x128xi32> to vector<8x128xf32>
    %cst_83 = arith.constant dense<0.000000e+00> : vector<8x1xf32>
    %290 = tpu.matmul %289, %18, %cst_83 {dimension_numbers = #tpu.dot_dimension_numbers<[1], [0], [0], [1], [0, 0, 1, 1], [], []>} : vector<8x128xf32>, vector<128x1xf32>, vector<8x1xf32> -> vector<8x1xf32>
    %291 = vector.shape_cast %290 : vector<8x1xf32> to vector<1x8x1xf32>
    %cst_84 = arith.constant dense<0.000000e+00> : vector<1xf32>
    %292 = vector.multi_reduction <add>, %291, %cst_84 [1, 2] : vector<1x8x1xf32> to vector<1xf32>
    %293 = vector.shape_cast %292 : vector<1xf32> to vector<1x1x1xf32>
    %294 = vector.extract %293[0, 0, 0] : f32 from vector<1x1x1xf32>
    %295 = arith.cmpf ole, %294, %97 : f32
    %296 = arith.select %295, %282, %285 : f32
    %297 = arith.select %295, %285, %283 : f32
    %c14_i32 = arith.constant 14 : i32
    %298 = arith.addf %296, %297 : f32
    %cst_85 = arith.constant 5.000000e-01 : f32
    %299 = arith.mulf %cst_85, %298 : f32
    %300 = vector.broadcast %299 : f32 to vector<8x128xf32>
    %301 = arith.cmpf ogt, %96, %300 : vector<8x128xf32>
    %302 = arith.extui %301 : vector<8x128xi1> to vector<8x128xi32>
    %303 = arith.sitofp %302 : vector<8x128xi32> to vector<8x128xf32>
    %cst_86 = arith.constant dense<0.000000e+00> : vector<8x1xf32>
    %304 = tpu.matmul %303, %18, %cst_86 {dimension_numbers = #tpu.dot_dimension_numbers<[1], [0], [0], [1], [0, 0, 1, 1], [], []>} : vector<8x128xf32>, vector<128x1xf32>, vector<8x1xf32> -> vector<8x1xf32>
    %305 = vector.shape_cast %304 : vector<8x1xf32> to vector<1x8x1xf32>
    %cst_87 = arith.constant dense<0.000000e+00> : vector<1xf32>
    %306 = vector.multi_reduction <add>, %305, %cst_87 [1, 2] : vector<1x8x1xf32> to vector<1xf32>
    %307 = vector.shape_cast %306 : vector<1xf32> to vector<1x1x1xf32>
    %308 = vector.extract %307[0, 0, 0] : f32 from vector<1x1x1xf32>
    %309 = arith.cmpf ole, %308, %97 : f32
    %310 = arith.select %309, %296, %299 : f32
    %311 = arith.select %309, %299, %297 : f32
    %c15_i32 = arith.constant 15 : i32
    %312 = arith.addf %310, %311 : f32
    %cst_88 = arith.constant 5.000000e-01 : f32
    %313 = arith.mulf %cst_88, %312 : f32
    %314 = vector.broadcast %313 : f32 to vector<8x128xf32>
    %315 = arith.cmpf ogt, %96, %314 : vector<8x128xf32>
    %316 = arith.extui %315 : vector<8x128xi1> to vector<8x128xi32>
    %317 = arith.sitofp %316 : vector<8x128xi32> to vector<8x128xf32>
    %cst_89 = arith.constant dense<0.000000e+00> : vector<8x1xf32>
    %318 = tpu.matmul %317, %18, %cst_89 {dimension_numbers = #tpu.dot_dimension_numbers<[1], [0], [0], [1], [0, 0, 1, 1], [], []>} : vector<8x128xf32>, vector<128x1xf32>, vector<8x1xf32> -> vector<8x1xf32>
    %319 = vector.shape_cast %318 : vector<8x1xf32> to vector<1x8x1xf32>
    %cst_90 = arith.constant dense<0.000000e+00> : vector<1xf32>
    %320 = vector.multi_reduction <add>, %319, %cst_90 [1, 2] : vector<1x8x1xf32> to vector<1xf32>
    %321 = vector.shape_cast %320 : vector<1xf32> to vector<1x1x1xf32>
    %322 = vector.extract %321[0, 0, 0] : f32 from vector<1x1x1xf32>
    %323 = arith.cmpf ole, %322, %97 : f32
    %324 = arith.select %323, %310, %313 : f32
    %325 = arith.select %323, %313, %311 : f32
    %c16_i32 = arith.constant 16 : i32
    %326 = arith.addf %324, %325 : f32
    %cst_91 = arith.constant 5.000000e-01 : f32
    %327 = arith.mulf %cst_91, %326 : f32
    %328 = vector.broadcast %327 : f32 to vector<8x128xf32>
    %329 = arith.cmpf ogt, %96, %328 : vector<8x128xf32>
    %330 = arith.extui %329 : vector<8x128xi1> to vector<8x128xi32>
    %331 = arith.sitofp %330 : vector<8x128xi32> to vector<8x128xf32>
    %cst_92 = arith.constant dense<0.000000e+00> : vector<8x1xf32>
    %332 = tpu.matmul %331, %18, %cst_92 {dimension_numbers = #tpu.dot_dimension_numbers<[1], [0], [0], [1], [0, 0, 1, 1], [], []>} : vector<8x128xf32>, vector<128x1xf32>, vector<8x1xf32> -> vector<8x1xf32>
    %333 = vector.shape_cast %332 : vector<8x1xf32> to vector<1x8x1xf32>
    %cst_93 = arith.constant dense<0.000000e+00> : vector<1xf32>
    %334 = vector.multi_reduction <add>, %333, %cst_93 [1, 2] : vector<1x8x1xf32> to vector<1xf32>
    %335 = vector.shape_cast %334 : vector<1xf32> to vector<1x1x1xf32>
    %336 = vector.extract %335[0, 0, 0] : f32 from vector<1x1x1xf32>
    %337 = arith.cmpf ole, %336, %97 : f32
    %338 = arith.select %337, %324, %327 : f32
    %339 = arith.select %337, %327, %325 : f32
    %c17_i32 = arith.constant 17 : i32
    %340 = arith.addf %338, %339 : f32
    %cst_94 = arith.constant 5.000000e-01 : f32
    %341 = arith.mulf %cst_94, %340 : f32
    %342 = vector.broadcast %341 : f32 to vector<8x128xf32>
    %343 = arith.cmpf ogt, %96, %342 : vector<8x128xf32>
    %344 = arith.extui %343 : vector<8x128xi1> to vector<8x128xi32>
    %345 = arith.sitofp %344 : vector<8x128xi32> to vector<8x128xf32>
    %cst_95 = arith.constant dense<0.000000e+00> : vector<8x1xf32>
    %346 = tpu.matmul %345, %18, %cst_95 {dimension_numbers = #tpu.dot_dimension_numbers<[1], [0], [0], [1], [0, 0, 1, 1], [], []>} : vector<8x128xf32>, vector<128x1xf32>, vector<8x1xf32> -> vector<8x1xf32>
    %347 = vector.shape_cast %346 : vector<8x1xf32> to vector<1x8x1xf32>
    %cst_96 = arith.constant dense<0.000000e+00> : vector<1xf32>
    %348 = vector.multi_reduction <add>, %347, %cst_96 [1, 2] : vector<1x8x1xf32> to vector<1xf32>
    %349 = vector.shape_cast %348 : vector<1xf32> to vector<1x1x1xf32>
    %350 = vector.extract %349[0, 0, 0] : f32 from vector<1x1x1xf32>
    %351 = arith.cmpf ole, %350, %97 : f32
    %352 = arith.select %351, %338, %341 : f32
    %353 = arith.select %351, %341, %339 : f32
    %c18_i32 = arith.constant 18 : i32
    %354 = arith.addf %352, %353 : f32
    %cst_97 = arith.constant 5.000000e-01 : f32
    %355 = arith.mulf %cst_97, %354 : f32
    %356 = vector.broadcast %355 : f32 to vector<8x128xf32>
    %357 = arith.cmpf ogt, %96, %356 : vector<8x128xf32>
    %358 = arith.extui %357 : vector<8x128xi1> to vector<8x128xi32>
    %359 = arith.sitofp %358 : vector<8x128xi32> to vector<8x128xf32>
    %cst_98 = arith.constant dense<0.000000e+00> : vector<8x1xf32>
    %360 = tpu.matmul %359, %18, %cst_98 {dimension_numbers = #tpu.dot_dimension_numbers<[1], [0], [0], [1], [0, 0, 1, 1], [], []>} : vector<8x128xf32>, vector<128x1xf32>, vector<8x1xf32> -> vector<8x1xf32>
    %361 = vector.shape_cast %360 : vector<8x1xf32> to vector<1x8x1xf32>
    %cst_99 = arith.constant dense<0.000000e+00> : vector<1xf32>
    %362 = vector.multi_reduction <add>, %361, %cst_99 [1, 2] : vector<1x8x1xf32> to vector<1xf32>
    %363 = vector.shape_cast %362 : vector<1xf32> to vector<1x1x1xf32>
    %364 = vector.extract %363[0, 0, 0] : f32 from vector<1x1x1xf32>
    %365 = arith.cmpf ole, %364, %97 : f32
    %366 = arith.select %365, %352, %355 : f32
    %367 = arith.select %365, %355, %353 : f32
    %c19_i32 = arith.constant 19 : i32
    %368 = arith.addf %366, %367 : f32
    %cst_100 = arith.constant 5.000000e-01 : f32
    %369 = arith.mulf %cst_100, %368 : f32
    %370 = vector.broadcast %369 : f32 to vector<8x128xf32>
    %371 = arith.cmpf ogt, %96, %370 : vector<8x128xf32>
    %372 = arith.extui %371 : vector<8x128xi1> to vector<8x128xi32>
    %373 = arith.sitofp %372 : vector<8x128xi32> to vector<8x128xf32>
    %cst_101 = arith.constant dense<0.000000e+00> : vector<8x1xf32>
    %374 = tpu.matmul %373, %18, %cst_101 {dimension_numbers = #tpu.dot_dimension_numbers<[1], [0], [0], [1], [0, 0, 1, 1], [], []>} : vector<8x128xf32>, vector<128x1xf32>, vector<8x1xf32> -> vector<8x1xf32>
    %375 = vector.shape_cast %374 : vector<8x1xf32> to vector<1x8x1xf32>
    %cst_102 = arith.constant dense<0.000000e+00> : vector<1xf32>
    %376 = vector.multi_reduction <add>, %375, %cst_102 [1, 2] : vector<1x8x1xf32> to vector<1xf32>
    %377 = vector.shape_cast %376 : vector<1xf32> to vector<1x1x1xf32>
    %378 = vector.extract %377[0, 0, 0] : f32 from vector<1x1x1xf32>
    %379 = arith.cmpf ole, %378, %97 : f32
    %380 = arith.select %379, %366, %369 : f32
    %381 = arith.select %379, %369, %367 : f32
    %cst_103 = arith.constant 0.000000e+00 : f32
    %382 = vector.broadcast %cst_103 : f32 to vector<8x128xf32>
    %383 = arith.cmpf ogt, %96, %382 : vector<8x128xf32>
    %384 = arith.extui %383 : vector<8x128xi1> to vector<8x128xi32>
    %385 = arith.sitofp %384 : vector<8x128xi32> to vector<8x128xf32>
    %cst_104 = arith.constant dense<0.000000e+00> : vector<8x1xf32>
    %386 = tpu.matmul %385, %18, %cst_104 {dimension_numbers = #tpu.dot_dimension_numbers<[1], [0], [0], [1], [0, 0, 1, 1], [], []>} : vector<8x128xf32>, vector<128x1xf32>, vector<8x1xf32> -> vector<8x1xf32>
    %387 = vector.shape_cast %386 : vector<8x1xf32> to vector<1x8x1xf32>
    %cst_105 = arith.constant dense<0.000000e+00> : vector<1xf32>
    %388 = vector.multi_reduction <add>, %387, %cst_105 [1, 2] : vector<1x8x1xf32> to vector<1xf32>
    %389 = vector.shape_cast %388 : vector<1xf32> to vector<1x1x1xf32>
    %390 = vector.extract %389[0, 0, 0] : f32 from vector<1x1x1xf32>
    %391 = arith.cmpf ole, %390, %97 : f32
    %cst_106 = arith.constant 0.000000e+00 : f32
    %392 = arith.select %391, %cst_106, %381 : f32
    %393 = vector.broadcast %392 : f32 to vector<8x128xf32>
    %394 = arith.cmpf ogt, %96, %393 : vector<8x128xf32>
    %395 = arith.extui %394 : vector<8x128xi1> to vector<8x128xi32>
    %396 = arith.sitofp %395 : vector<8x128xi32> to vector<8x128xf32>
    %397 = arith.mulf %94, %28 : vector<8x128xf32>
    %cst_107 = arith.constant dense<0.000000e+00> : vector<8x1xf32>
    %398 = tpu.matmul %397, %18, %cst_107 {dimension_numbers = #tpu.dot_dimension_numbers<[1], [0], [0], [1], [0, 0, 1, 1], [], []>} : vector<8x128xf32>, vector<128x1xf32>, vector<8x1xf32> -> vector<8x1xf32>
    %399 = vector.shape_cast %398 : vector<8x1xf32> to vector<1x8x1xf32>
    %cst_108 = arith.constant dense<0.000000e+00> : vector<1xf32>
    %400 = vector.multi_reduction <add>, %399, %cst_108 [1, 2] : vector<1x8x1xf32> to vector<1xf32>
    %401 = vector.shape_cast %400 : vector<1xf32> to vector<1x1x1xf32>
    %402 = vector.extract %401[0, 0, 0] : f32 from vector<1x1x1xf32>
    %403 = arith.mulf %402, %35 : f32
    %404 = arith.mulf %94, %396 : vector<8x128xf32>
    %cst_109 = arith.constant dense<0.000000e+00> : vector<8x1xf32>
    %405 = tpu.matmul %404, %18, %cst_109 {dimension_numbers = #tpu.dot_dimension_numbers<[1], [0], [0], [1], [0, 0, 1, 1], [], []>} : vector<8x128xf32>, vector<128x1xf32>, vector<8x1xf32> -> vector<8x1xf32>
    %406 = vector.shape_cast %405 : vector<8x1xf32> to vector<1x8x1xf32>
    %cst_110 = arith.constant dense<0.000000e+00> : vector<1xf32>
    %407 = vector.multi_reduction <add>, %406, %cst_110 [1, 2] : vector<1x8x1xf32> to vector<1xf32>
    %408 = vector.shape_cast %407 : vector<1xf32> to vector<1x1x1xf32>
    %409 = vector.extract %408[0, 0, 0] : f32 from vector<1x1x1xf32>
    %410 = arith.mulf %409, %35 : f32
    %411 = vector.extract_strided_slice %10 {offsets = [8, 0, 0], sizes = [1, 8, 128], strides = [1, 1, 1]} : vector<9x8x128xf32> to vector<1x8x128xf32>
    %412 = vector.shape_cast %411 : vector<1x8x128xf32> to vector<8x128xf32>
    %413 = arith.mulf %28, %412 : vector<8x128xf32>
    %414 = vector.extract_strided_slice %8 {offsets = [0, 0, 0], sizes = [2, 8, 128], strides = [1, 1, 1]} : vector<4x8x128xf32> to vector<2x8x128xf32>
    %415 = vector.extract_strided_slice %10 {offsets = [4, 0, 0], sizes = [2, 8, 128], strides = [1, 1, 1]} : vector<9x8x128xf32> to vector<2x8x128xf32>
    %416 = math.absf %414 : vector<2x8x128xf32>
    %cst_111 = arith.constant 0.000000e+00 : f32
    %417 = vector.broadcast %cst_111 : f32 to vector<2x8x128xf32>
    %418 = arith.subf %417, %416 : vector<2x8x128xf32>
    %419 = math.exp %418 : vector<2x8x128xf32>
    %cst_112 = arith.constant 1.000000e+00 : f32
    %420 = vector.broadcast %cst_112 : f32 to vector<2x8x128xf32>
    %421 = arith.addf %420, %419 : vector<2x8x128xf32>
    %422 = math.log %421 : vector<2x8x128xf32>
    %cst_113 = arith.constant 0.000000e+00 : f32
    %423 = vector.broadcast %cst_113 : f32 to vector<2x8x128xf32>
    %424 = arith.subf %423, %414 : vector<2x8x128xf32>
    %cst_114 = arith.constant 0.000000e+00 : f32
    %425 = vector.broadcast %cst_114 : f32 to vector<2x8x128xf32>
    %426 = arith.maximumf %424, %425 : vector<2x8x128xf32>
    %427 = arith.addf %426, %422 : vector<2x8x128xf32>
    %cst_115 = arith.constant 0.000000e+00 : f32
    %428 = vector.broadcast %cst_115 : f32 to vector<2x8x128xf32>
    %429 = arith.maximumf %414, %428 : vector<2x8x128xf32>
    %430 = arith.addf %429, %422 : vector<2x8x128xf32>
    %cst_116 = arith.constant 1.000000e+02 : f32
    %431 = vector.broadcast %cst_116 : f32 to vector<2x8x128xf32>
    %432 = arith.minimumf %427, %431 : vector<2x8x128xf32>
    %433 = arith.mulf %415, %432 : vector<2x8x128xf32>
    %cst_117 = arith.constant 1.000000e+00 : f32
    %434 = vector.broadcast %cst_117 : f32 to vector<2x8x128xf32>
    %435 = arith.subf %434, %415 : vector<2x8x128xf32>
    %cst_118 = arith.constant 1.000000e+02 : f32
    %436 = vector.broadcast %cst_118 : f32 to vector<2x8x128xf32>
    %437 = arith.minimumf %430, %436 : vector<2x8x128xf32>
    %438 = arith.mulf %435, %437 : vector<2x8x128xf32>
    %439 = arith.addf %433, %438 : vector<2x8x128xf32>
    %440 = vector.shape_cast %413 : vector<8x128xf32> to vector<1x8x128xf32>
    %441 = vector.broadcast %440 : vector<1x8x128xf32> to vector<2x8x128xf32>
    %442 = arith.mulf %439, %441 : vector<2x8x128xf32>
    %cst_119 = arith.constant dense<0.000000e+00> : vector<8x128xf32>
    %443 = vector.multi_reduction <add>, %442, %cst_119 [0] : vector<2x8x128xf32> to vector<8x128xf32>
    %cst_120 = arith.constant dense<0.000000e+00> : vector<8x1xf32>
    %444 = tpu.matmul %443, %18, %cst_120 {dimension_numbers = #tpu.dot_dimension_numbers<[1], [0], [0], [1], [0, 0, 1, 1], [], []>} : vector<8x128xf32>, vector<128x1xf32>, vector<8x1xf32> -> vector<8x1xf32>
    %445 = vector.shape_cast %444 : vector<8x1xf32> to vector<1x8x1xf32>
    %cst_121 = arith.constant dense<0.000000e+00> : vector<1xf32>
    %446 = vector.multi_reduction <add>, %445, %cst_121 [1, 2] : vector<1x8x1xf32> to vector<1xf32>
    %447 = vector.shape_cast %446 : vector<1xf32> to vector<1x1x1xf32>
    %448 = vector.extract %447[0, 0, 0] : f32 from vector<1x1x1xf32>
    %449 = arith.mulf %448, %35 : f32
    %450 = vector.extract_strided_slice %8 {offsets = [2, 0, 0], sizes = [2, 8, 128], strides = [1, 1, 1]} : vector<4x8x128xf32> to vector<2x8x128xf32>
    %451 = vector.extract_strided_slice %10 {offsets = [6, 0, 0], sizes = [2, 8, 128], strides = [1, 1, 1]} : vector<9x8x128xf32> to vector<2x8x128xf32>
    %452 = arith.subf %450, %451 : vector<2x8x128xf32>
    %453 = arith.mulf %452, %452 : vector<2x8x128xf32>
    %454 = vector.shape_cast %413 : vector<8x128xf32> to vector<1x8x128xf32>
    %455 = vector.broadcast %454 : vector<1x8x128xf32> to vector<2x8x128xf32>
    %456 = arith.mulf %453, %455 : vector<2x8x128xf32>
    %cst_122 = arith.constant dense<0.000000e+00> : vector<8x128xf32>
    %457 = vector.multi_reduction <add>, %456, %cst_122 [0] : vector<2x8x128xf32> to vector<8x128xf32>
    %cst_123 = arith.constant dense<0.000000e+00> : vector<8x1xf32>
    %458 = tpu.matmul %457, %18, %cst_123 {dimension_numbers = #tpu.dot_dimension_numbers<[1], [0], [0], [1], [0, 0, 1, 1], [], []>} : vector<8x128xf32>, vector<128x1xf32>, vector<8x1xf32> -> vector<8x1xf32>
    %459 = vector.shape_cast %458 : vector<8x1xf32> to vector<1x8x1xf32>
    %cst_124 = arith.constant dense<0.000000e+00> : vector<1xf32>
    %460 = vector.multi_reduction <add>, %459, %cst_124 [1, 2] : vector<1x8x1xf32> to vector<1xf32>
    %461 = vector.shape_cast %460 : vector<1xf32> to vector<1x1x1xf32>
    %462 = vector.extract %461[0, 0, 0] : f32 from vector<1x1x1xf32>
    %463 = arith.mulf %462, %35 : f32
    %464 = arith.addf %403, %410 : f32
    %465 = arith.addf %464, %70 : f32
    %466 = arith.addf %465, %449 : f32
    %467 = arith.addf %466, %463 : f32
    %468 = tpu.iota {dimensions = array<i32: 2>} : vector<1x8x128xi32>
    %c0_i32_125 = arith.constant 0 : i32
    %469 = vector.broadcast %c0_i32_125 : i32 to vector<1x8x128xi32>
    %470 = arith.cmpi eq, %468, %469 : vector<1x8x128xi32>
    %cst_126 = arith.constant 0.000000e+00 : f32
    %471 = vector.broadcast %467 : f32 to vector<1x8x128xf32>
    %472 = vector.broadcast %cst_126 : f32 to vector<1x8x128xf32>
    %473 = arith.select %470, %471, %472 : vector<1x8x128xi1>, vector<1x8x128xf32>
    %c1_i32_127 = arith.constant 1 : i32
    %474 = vector.broadcast %c1_i32_127 : i32 to vector<1x8x128xi32>
    %475 = arith.cmpi eq, %468, %474 : vector<1x8x128xi32>
    %cst_128 = arith.constant 0.000000e+00 : f32
    %476 = vector.broadcast %403 : f32 to vector<1x8x128xf32>
    %477 = vector.broadcast %cst_128 : f32 to vector<1x8x128xf32>
    %478 = arith.select %475, %476, %477 : vector<1x8x128xi1>, vector<1x8x128xf32>
    %479 = arith.addf %473, %478 : vector<1x8x128xf32>
    %c2_i32_129 = arith.constant 2 : i32
    %480 = vector.broadcast %c2_i32_129 : i32 to vector<1x8x128xi32>
    %481 = arith.cmpi eq, %468, %480 : vector<1x8x128xi32>
    %cst_130 = arith.constant 0.000000e+00 : f32
    %482 = vector.broadcast %410 : f32 to vector<1x8x128xf32>
    %483 = vector.broadcast %cst_130 : f32 to vector<1x8x128xf32>
    %484 = arith.select %481, %482, %483 : vector<1x8x128xi1>, vector<1x8x128xf32>
    %485 = arith.addf %479, %484 : vector<1x8x128xf32>
    %c3_i32_131 = arith.constant 3 : i32
    %486 = vector.broadcast %c3_i32_131 : i32 to vector<1x8x128xi32>
    %487 = arith.cmpi eq, %468, %486 : vector<1x8x128xi32>
    %cst_132 = arith.constant 0.000000e+00 : f32
    %488 = vector.broadcast %70 : f32 to vector<1x8x128xf32>
    %489 = vector.broadcast %cst_132 : f32 to vector<1x8x128xf32>
    %490 = arith.select %487, %488, %489 : vector<1x8x128xi1>, vector<1x8x128xf32>
    %491 = arith.addf %485, %490 : vector<1x8x128xf32>
    %c4_i32_133 = arith.constant 4 : i32
    %492 = vector.broadcast %c4_i32_133 : i32 to vector<1x8x128xi32>
    %493 = arith.cmpi eq, %468, %492 : vector<1x8x128xi32>
    %cst_134 = arith.constant 0.000000e+00 : f32
    %494 = vector.broadcast %449 : f32 to vector<1x8x128xf32>
    %495 = vector.broadcast %cst_134 : f32 to vector<1x8x128xf32>
    %496 = arith.select %493, %494, %495 : vector<1x8x128xi1>, vector<1x8x128xf32>
    %497 = arith.addf %491, %496 : vector<1x8x128xf32>
    %c5_i32_135 = arith.constant 5 : i32
    %498 = vector.broadcast %c5_i32_135 : i32 to vector<1x8x128xi32>
    %499 = arith.cmpi eq, %468, %498 : vector<1x8x128xi32>
    %cst_136 = arith.constant 0.000000e+00 : f32
    %500 = vector.broadcast %463 : f32 to vector<1x8x128xf32>
    %501 = vector.broadcast %cst_136 : f32 to vector<1x8x128xf32>
    %502 = arith.select %499, %500, %501 : vector<1x8x128xi1>, vector<1x8x128xf32>
    %503 = arith.addf %497, %502 : vector<1x8x128xf32>
    %c0_137 = arith.constant 0 : index
    %c0_138 = arith.constant 0 : index
    %c0_139 = arith.constant 0 : index
    %504 = vector.load %arg5[%c0_137, %c0_138, %c0_139] : memref<1x8x128xf32, #tpu.memory_space<vmem>>, vector<1x8x128xf32>
    tpu.vector_store %arg5[%c0_137, %c0_138, %c0_139], %503 {strides = array<i32>} : memref<1x8x128xf32, #tpu.memory_space<vmem>>, vector<1x8x128xf32>,
    return
  }
  func.func @transform_0(%arg0: i32) -> (i32, i32, i32) {
    %c0_i32 = arith.constant 0 : i32
    %c0_i32_0 = arith.constant 0 : i32
    %c0_i32_1 = arith.constant 0 : i32
    return %arg0, %c0_i32, %c0_i32_0 : i32, i32, i32
  }
  func.func @transform_1(%arg0: i32) -> (i32, i32, i32, i32) {
    %c0_i32 = arith.constant 0 : i32
    %c0_i32_0 = arith.constant 0 : i32
    %c0_i32_1 = arith.constant 0 : i32
    %c0_i32_2 = arith.constant 0 : i32
    return %arg0, %c0_i32, %c0_i32_0, %c0_i32_1 : i32, i32, i32, i32
  }
  func.func @transform_2(%arg0: i32) -> (i32, i32, i32, i32) {
    %c0_i32 = arith.constant 0 : i32
    %c0_i32_0 = arith.constant 0 : i32
    %c0_i32_1 = arith.constant 0 : i32
    %c0_i32_2 = arith.constant 0 : i32
    return %arg0, %c0_i32, %c0_i32_0, %c0_i32_1 : i32, i32, i32, i32
  }
  func.func @transform_3(%arg0: i32) -> (i32, i32, i32, i32) {
    %c0_i32 = arith.constant 0 : i32
    %c0_i32_0 = arith.constant 0 : i32
    %c0_i32_1 = arith.constant 0 : i32
    %c0_i32_2 = arith.constant 0 : i32
    return %arg0, %c0_i32, %c0_i32_0, %c0_i32_1 : i32, i32, i32, i32
  }
  func.func @transform_4(%arg0: i32) -> (i32, i32, i32) {
    %c0_i32 = arith.constant 0 : i32
    %c0_i32_0 = arith.constant 0 : i32
    %c0_i32_1 = arith.constant 0 : i32
    return %arg0, %c0_i32, %c0_i32_0 : i32, i32, i32
  }
}

</mosaic_0001>

<llo_original>
// kernel: yolo_v3_loss.1
$region0: #{yolo_v3_loss.1}
  #allocation0 [shape = 'u32[]', space=smem, size = 0x4, offset = 0x4, fixed_abs, tag = 'smem constant byte address 0x4 - core index']
  #allocation1 [shape = 'u32[144,128]{1,0:T(1,128)}', space=vmem, size = 0x12000, scoped, tag = 'internal scratch']
  %s0 = inlined_call_operand.vmem [shape: bf16[3,8,128], index: 0, kind: input, shape index: {}]
  %s1 = inlined_call_operand.vmem [shape: bf16[3,3,8,128], index: 1, kind: input, shape index: {}]
  %s2 = inlined_call_operand.vmem [shape: bf16[3,4,8,128], index: 2, kind: input, shape index: {}]
  %s3 = inlined_call_operand.vmem [shape: f32[3,9,8,128], index: 3, kind: input, shape index: {}]
  %s4 = inlined_call_operand.vmem [shape: f32[3,8,128], index: 4, kind: output, shape index: {}]
  %s5 = sld [smem:[#allocation0]]
  $region49: #{yolo_v3_loss.1} parent=0
    _
  %s7 = ssub.s32 1, %s5
  %s8 = scalar_select 0, %s7, %s5
  loop: start=0, step=1, limit=5
  $region2: #{yolo_v3_loss.1} parent=0 // loop_pre_header
    _
  $region3: #{yolo_v3_loss.1} parent=0 // loop_header
    %s10 = sphi 0, %s14
    %p11 = scmp.ge.s32.totalorder %s10, 5
    %s20 = sphi 0, %s22
    %s23 = sphi 0, %s20
    %s24 = sphi 0, %s23
    %s40 = sphi 0, %s24
    %s46 = sphi 0, %s48
    %s49 = sphi 0, %s46
    %s50 = sphi 0, %s49
    %s66 = sphi 0, %s50
    %s72 = sphi 0, %s74
    %s75 = sphi 0, %s72
    %s76 = sphi 0, %s75
    %s92 = sphi 0, %s76
    %s98 = sphi 0, %s100
    %s101 = sphi 0, %s98
    %s102 = sphi 0, %s101
    %s118 = sphi 0, %s102
    %s124 = sphi 0, %s126
    %s127 = sphi 0, %s124
    %s128 = sphi 0, %s127
    %s144 = sphi 0, %s128
  $region4: #{yolo_v3_loss.1} parent=0 // loop_header_branch
    %13 = sbr.rel (%p11) target = $region8
  $region5: #{yolo_v3_loss.1} parent=0 // loop_body
    %s15 = ssub.s32 %s10, 1
    %s16 = ssub.s32 %s10, 2
    %s17 = sadd.s32 %s10, 1
    %s18 = ssub.s32 %s10, %s17
    %p19 = scmp.eq.s32.totalorder %s18, 0
    %s21 = sadd.s32 %s20, 1
    %s22 = scalar_select %p19, %s20, %s21
    %p25 = pneg %p19
    %p26 = scmp.eq.s32.totalorder %s10, 2
    %p27 = por %p25, %p26
    %p28 = scmp.ne.s32.totalorder %s20, %s23
    %p29 = scmp.eq.s32.totalorder %s10, 0
    %p30 = por %p28, %p29
    %p31 = scmp.ne.s32.totalorder %s20, %s23
    %p32 = scmp.eq.s32.totalorder %s15, 2
    %p33 = por %p31, %p32
    %p34 = scmp.ne.s32.totalorder %s23, %s24
    %p35 = scmp.eq.s32.totalorder %s15, 0
    %p36 = por %p34, %p35
    %p37 = scmp.ne.s32.totalorder %s23, %s24
    %p38 = scmp.eq.s32.totalorder %s16, 2
    %p39 = por %p37, %p38
    %p41 = scmp.ne.s32.totalorder %s24, %s40
    %p42 = scmp.eq.s32.totalorder %s16, 0
    %p43 = por %p41, %p42
    %s44 = ssub.s32 %s10, %s17
    %p45 = scmp.eq.s32.totalorder %s44, 0
    %s47 = sadd.s32 %s46, 1
    %s48 = scalar_select %p45, %s46, %s47
    %p51 = pneg %p45
    %p52 = scmp.eq.s32.totalorder %s10, 2
    %p53 = por %p51, %p52
    %p54 = scmp.ne.s32.totalorder %s46, %s49
    %p55 = scmp.eq.s32.totalorder %s10, 0
    %p56 = por %p54, %p55
    %p57 = scmp.ne.s32.totalorder %s46, %s49
    %p58 = scmp.eq.s32.totalorder %s15, 2
    %p59 = por %p57, %p58
    %p60 = scmp.ne.s32.totalorder %s49, %s50
    %p61 = scmp.eq.s32.totalorder %s15, 0
    %p62 = por %p60, %p61
    %p63 = scmp.ne.s32.totalorder %s49, %s50
    %p64 = scmp.eq.s32.totalorder %s16, 2
    %p65 = por %p63, %p64
    %p67 = scmp.ne.s32.totalorder %s50, %s66
    %p68 = scmp.eq.s32.totalorder %s16, 0
    %p69 = por %p67, %p68
    %s70 = ssub.s32 %s10, %s17
    %p71 = scmp.eq.s32.totalorder %s70, 0
    %s73 = sadd.s32 %s72, 1
    %s74 = scalar_select %p71, %s72, %s73
    %p77 = pneg %p71
    %p78 = scmp.eq.s32.totalorder %s10, 2
    %p79 = por %p77, %p78
    %p80 = scmp.ne.s32.totalorder %s72, %s75
    %p81 = scmp.eq.s32.totalorder %s10, 0
    %p82 = por %p80, %p81
    %p83 = scmp.ne.s32.totalorder %s72, %s75
    %p84 = scmp.eq.s32.totalorder %s15, 2
    %p85 = por %p83, %p84
    %p86 = scmp.ne.s32.totalorder %s75, %s76
    %p87 = scmp.eq.s32.totalorder %s15, 0
    %p88 = por %p86, %p87
    %p89 = scmp.ne.s32.totalorder %s75, %s76
    %p90 = scmp.eq.s32.totalorder %s16, 2
    %p91 = por %p89, %p90
    %p93 = scmp.ne.s32.totalorder %s76, %s92
    %p94 = scmp.eq.s32.totalorder %s16, 0
    %p95 = por %p93, %p94
    %s96 = ssub.s32 %s10, %s17
    %p97 = scmp.eq.s32.totalorder %s96, 0
    %s99 = sadd.s32 %s98, 1
    %s100 = scalar_select %p97, %s98, %s99
    %p103 = pneg %p97
    %p104 = scmp.eq.s32.totalorder %s10, 2
    %p105 = por %p103, %p104
    %p106 = scmp.ne.s32.totalorder %s98, %s101
    %p107 = scmp.eq.s32.totalorder %s10, 0
    %p108 = por %p106, %p107
    %p109 = scmp.ne.s32.totalorder %s98, %s101
    %p110 = scmp.eq.s32.totalorder %s15, 2
    %p111 = por %p109, %p110
    %p112 = scmp.ne.s32.totalorder %s101, %s102
    %p113 = scmp.eq.s32.totalorder %s15, 0
    %p114 = por %p112, %p113
    %p115 = scmp.ne.s32.totalorder %s101, %s102
    %p116 = scmp.eq.s32.totalorder %s16, 2
    %p117 = por %p115, %p116
    %p119 = scmp.ne.s32.totalorder %s102, %s118
    %p120 = scmp.eq.s32.totalorder %s16, 0
    %p121 = por %p119, %p120
    %s122 = ssub.s32 %s10, %s17
    %p123 = scmp.eq.s32.totalorder %s122, 0
    %s125 = sadd.s32 %s124, 1
    %s126 = scalar_select %p123, %s124, %s125
    %p129 = pneg %p123
    %p130 = scmp.eq.s32.totalorder %s10, 2
    %p131 = por %p129, %p130
    %p132 = scmp.ne.s32.totalorder %s124, %s127
    %p133 = scmp.eq.s32.totalorder %s10, 0
    %p134 = por %p132, %p133
    %p135 = scmp.ne.s32.totalorder %s124, %s127
    %p136 = scmp.eq.s32.totalorder %s15, 2
    %p137 = por %p135, %p136
    %p138 = scmp.ne.s32.totalorder %s127, %s128
    %p139 = scmp.eq.s32.totalorder %s15, 0
    %p140 = por %p138, %p139
    %p141 = scmp.ne.s32.totalorder %s127, %s128
    %p142 = scmp.eq.s32.totalorder %s16, 2
    %p143 = por %p141, %p142
    %p145 = scmp.ne.s32.totalorder %s128, %s144
    %p146 = scmp.eq.s32.totalorder %s16, 0
    %p147 = por %p145, %p146
    %p148 = scmp.le.s32.totalorder 1, %s10
    %p149 = scmp.lt.s32.totalorder %s10, 4
    %p150 = pnand %p148, %p149
    %p151 = pneg %p150
    // Predicated region
    $region9: #{yolo_v3_loss.1} parent=5 // pred_check
      _
    $region10: #{yolo_v3_loss.1} parent=5 // pred_check_branch
      %153 = sbr.rel (%p150) target = $region12
    $region11: #{yolo_v3_loss.1} parent=5 // pred_region
      %s154 = ssub.s32 %s10, 1
    $region12: #{yolo_v3_loss.1} parent=5 // pred_fallthru
      _
    %p155 = scmp.lt.s32.totalorder %s10, 3
    // Predicated region
    $region13: #{yolo_v3_loss.1} parent=5 // pred_check
      %p156 = pneg %p155
    $region14: #{yolo_v3_loss.1} parent=5 // pred_check_branch
      %158 = sbr.rel (%p156) target = $region16
    $region15: #{yolo_v3_loss.1} parent=5 // pred_region
      // Predicated region
      $region17: #{yolo_v3_loss.1} parent=15 // pred_check
        %p159 = pneg %p30
      $region18: #{yolo_v3_loss.1} parent=15 // pred_check_branch
        %161 = sbr.rel (%p159) target = $region20
      $region19: #{yolo_v3_loss.1} parent=15 // pred_region
        %p162 = scmp.lt.s32.totalorder %s10, 2
        %s163 = scalar_select %p162, %s10, 2
        %s164 = smul.addr %s163, 4
        %s165 = scalar_lea.vmem %s0, %s164
      $region20: #{yolo_v3_loss.1} parent=15 // pred_fallthru
        _
      // Predicated region
      $region21: #{yolo_v3_loss.1} parent=15 // pred_check
        %p166 = pneg %p56
      $region22: #{yolo_v3_loss.1} parent=15 // pred_check_branch
        %168 = sbr.rel (%p166) target = $region24
      $region23: #{yolo_v3_loss.1} parent=15 // pred_region
        %p169 = scmp.lt.s32.totalorder %s10, 2
        %s170 = scalar_select %p169, %s10, 2
        %s171 = smul.addr %s170, 3
        %s172 = smul.addr %s171, 4
        %s173 = scalar_lea.vmem %s1, %s172
      $region24: #{yolo_v3_loss.1} parent=15 // pred_fallthru
        _
      // Predicated region
      $region25: #{yolo_v3_loss.1} parent=15 // pred_check
        %p174 = pneg %p82
      $region26: #{yolo_v3_loss.1} parent=15 // pred_check_branch
        %176 = sbr.rel (%p174) target = $region28
      $region27: #{yolo_v3_loss.1} parent=15 // pred_region
        %p177 = scmp.lt.s32.totalorder %s10, 2
        %s178 = scalar_select %p177, %s10, 2
        %s179 = smul.addr %s178, 4
        %s180 = smul.addr %s179, 4
        %s181 = scalar_lea.vmem %s2, %s180
      $region28: #{yolo_v3_loss.1} parent=15 // pred_fallthru
        _
      // Predicated region
      $region29: #{yolo_v3_loss.1} parent=15 // pred_check
        %p182 = pneg %p108
      $region30: #{yolo_v3_loss.1} parent=15 // pred_check_branch
        %184 = sbr.rel (%p182) target = $region32
      $region31: #{yolo_v3_loss.1} parent=15 // pred_region
        %p185 = scmp.lt.s32.totalorder %s10, 2
        %s186 = scalar_select %p185, %s10, 2
        %s187 = smul.addr %s186, 9
        %s188 = smul.addr %s187, 8
        %s189 = scalar_lea.vmem %s3, %s188
      $region32: #{yolo_v3_loss.1} parent=15 // pred_fallthru
        _
    $region16: #{yolo_v3_loss.1} parent=5 // pred_fallthru
      _
    %p190 = scmp.le.s32.totalorder 1, %s10
    %p191 = scmp.lt.s32.totalorder %s10, 4
    %p192 = pnand %p190, %p191
    %p193 = pneg %p192
    // Predicated region
    $region33: #{yolo_v3_loss.1} parent=5 // pred_check
      _
    $region34: #{yolo_v3_loss.1} parent=5 // pred_check_branch
      %195 = sbr.rel (%p192) target = $region36
    $region35: #{yolo_v3_loss.1} parent=5 // pred_region
      %s196 = ssub.s32 %s10, 1
      %p197 = scmp.lt.s32.totalorder %s15, 2
      %s198 = scalar_select %p197, %s15, 2
      %s199 = smul.addr %s198, 4
      %s200 = scalar_lea.vmem %s0, %s199
      %p201 = pneg %p36
      %p202 = pneg %p33
      %p203 = scmp.lt.s32.totalorder %s15, 2
      %s204 = scalar_select %p203, %s15, 2
      %s205 = smul.addr %s204, 3
      %s206 = smul.addr %s205, 4
      %s207 = scalar_lea.vmem %s1, %s206
      %p208 = pneg %p62
      %p209 = pneg %p59
      %p210 = scmp.lt.s32.totalorder %s15, 2
      %s211 = scalar_select %p210, %s15, 2
      %s212 = smul.addr %s211, 4
      %s213 = smul.addr %s212, 4
      %s214 = scalar_lea.vmem %s2, %s213
      %p215 = pneg %p88
      %p216 = pneg %p85
      %p217 = scmp.lt.s32.totalorder %s15, 2
      %s218 = scalar_select %p217, %s15, 2
      %s219 = smul.addr %s218, 9
      %s220 = smul.addr %s219, 8
      %s221 = scalar_lea.vmem %s3, %s220
      %p222 = pneg %p114
      %p223 = pneg %p111
      %p224 = pneg %p140
      %p225 = pneg %p137
      %p226 = scmp.lt.s32.totalorder %s15, 2
      %s227 = scalar_select %p226, %s15, 2
      %s228 = smul.addr %s227, 8
      %s229 = scalar_lea.vmem %s4, %s228
      %p230 = scmp.lt.s32.totalorder %s15, 2
      %s231 = scalar_select %p230, %s15, 2
      %s232 = smul.addr %s231, 4
      %s233 = scalar_lea.vmem %s0, %s232
      %p234 = scmp.lt.s32.totalorder %s15, 2
      %s235 = scalar_select %p234, %s15, 2
      %s236 = smul.addr %s235, 3
      %s237 = smul.addr %s236, 4
      %s238 = scalar_lea.vmem %s1, %s237
      %p239 = scmp.lt.s32.totalorder %s15, 2
      %s240 = scalar_select %p239, %s15, 2
      %s241 = smul.addr %s240, 4
      %s242 = smul.addr %s241, 4
      %s243 = scalar_lea.vmem %s2, %s242
      %p244 = scmp.lt.s32.totalorder %s15, 2
      %s245 = scalar_select %p244, %s15, 2
      %s246 = smul.addr %s245, 9
      %s247 = smul.addr %s246, 8
      %s248 = scalar_lea.vmem %s3, %s247
      %p249 = scmp.lt.s32.totalorder %s15, 2
      %s250 = scalar_select %p249, %s15, 2
      %s251 = smul.addr %s250, 8
      %s252 = scalar_lea.vmem %s4, %s251
      %v253 = vld [vmem:[%s233] sm:$0xf]
      %v254 = vunpack.c.l.bf16 %v253
      %v255 = vld [vmem:[%s238] sm:$0xf]
      %v256 = vld [vmem:[%s238 + $0x4] sm:$0xf]
      %v257 = vld [vmem:[%s238 + $0x8] sm:$0xf]
      %v258 = vunpack.c.l.bf16 %v255
      %v259 = vunpack.c.l.bf16 %v256
      %v260 = vunpack.c.l.bf16 %v257
      %v261 = vld [vmem:[%s243] sm:$0xf]
      %v262 = vld [vmem:[%s243 + $0x4] sm:$0xf]
      %v263 = vld [vmem:[%s243 + $0x8] sm:$0xf]
      %v264 = vld [vmem:[%s243 + $0xc] sm:$0xf]
      %v265 = vunpack.c.l.bf16 %v261
      %v266 = vunpack.c.l.bf16 %v262
      %v267 = vunpack.c.l.bf16 %v263
      %v268 = vunpack.c.l.bf16 %v264
      %v269 = vld [vmem:[%s248] sm:$0xff]
      %v270 = vld [vmem:[%s248 + $0x8] sm:$0xff]
      %v271 = vld [vmem:[%s248 + $0x10] sm:$0xff]
      %v272 = vld [vmem:[%s248 + $0x18] sm:$0xff]
      %v273 = vld [vmem:[%s248 + $0x20] sm:$0xff]
      %v274 = vld [vmem:[%s248 + $0x28] sm:$0xff]
      %v275 = vld [vmem:[%s248 + $0x30] sm:$0xff]
      %v276 = vld [vmem:[%s248 + $0x38] sm:$0xff]
      %v277 = vld [vmem:[%s248 + $0x40] sm:$0xff]
      %v278 = vlaneseq
      %v279 = vshrl.u32 %v278, 7
      %v280 = vmul.u32 %v279, 128
      %v281 = vlaneseq
      %v282 = vand.u32 %v281, 127
      %v283 = vadd.s32 %v280, %v282
      %vm284 = vcmp.lt.s32.totalorder %v283, 507
      %vm285 = vcmp.gt.f32.partialorder %v269, 0.0
      %vm286 = vmand %vm285, %vm284
      %vm287 = vcmp.eq.f32.partialorder %v269, 0.0
      %vm288 = vmand %vm287, %vm284
      %v289 = vsel %vm286, 1, 0
      %v290 = vcvt.s32.f32 %v289
      %291 = vmatprep.subr.mxu0 0.0
      %292 = vmatpush1.msra.mxu0 1.0
      %293 = vmatprep.subr.mxu0 0.0
      %294 = vmatpush1.msra.mxu0 1.0
      %295 = vmatprep.subr.mxu0 0.0
      %296 = vmatpush1.msra.mxu0 1.0
      %297 = vmatprep.subr.mxu0 0.0
      %298 = vmatpush1.msra.mxu0 1.0
      %299 = vmatprep.subr.mxu0 0.0
      %300 = vmatpush1.msra.mxu0 1.0
      %301 = vmatprep.subr.mxu0 0.0
      %302 = vmatpush1.msra.mxu0 1.0
      %303 = vmatprep.subr.mxu0 0.0
      %304 = vmatpush1.msra.mxu0 1.0
      %305 = vmatprep.subr.mxu0 0.0
      %306 = vmatpush1.msra.mxu0 1.0
      %307 = vmatprep.subr.mxu0 0.0
      %308 = vmatpush1.msra.mxu0 1.0
      %309 = vmatprep.subr.mxu0 0.0
      %310 = vmatpush1.msra.mxu0 1.0
      %311 = vmatprep.subr.mxu0 0.0
      %312 = vmatpush1.msra.mxu0 1.0
      %313 = vmatprep.subr.mxu0 0.0
      %314 = vmatpush1.msra.mxu0 1.0
      %315 = vmatprep.subr.mxu0 0.0
      %316 = vmatpush1.msra.mxu0 1.0
      %317 = vmatprep.subr.mxu0 0.0
      %318 = vmatpush1.msra.mxu0 1.0
      %319 = vmatprep.subr.mxu0 0.0
      %320 = vmatpush1.msra.mxu0 1.0
      %321 = vmatprep.subr.mxu0 0.0
      %322 = vmatpush1.msra.mxu0 1.0
      %323 = vmatprep.subr.mxu0 0.0
      %324 = vmatpush1.msra.mxu0 0.0
      %325 = vmatprep.subr.mxu0 0.0
      %326 = vmatpush1.msra.mxu0 0.0
      %327 = vmatprep.subr.mxu0 0.0
      %328 = vmatpush1.msra.mxu0 0.0
      %329 = vmatprep.subr.mxu0 0.0
      %330 = vmatpush1.msra.mxu0 0.0
      %331 = vmatprep.subr.mxu0 0.0
      %332 = vmatpush1.msra.mxu0 0.0
      %333 = vmatprep.subr.mxu0 0.0
      %334 = vmatpush1.msra.mxu0 0.0
      %335 = vmatprep.subr.mxu0 0.0
      %336 = vmatpush1.msra.mxu0 0.0
      %337 = vmatprep.subr.mxu0 0.0
      %338 = vmatpush1.msra.mxu0 0.0
      %339 = vmatprep.subr.mxu0 0.0
      %340 = vmatpush1.msra.mxu0 0.0
      %341 = vmatprep.subr.mxu0 0.0
      %342 = vmatpush1.msra.mxu0 0.0
      %343 = vmatprep.subr.mxu0 0.0
      %344 = vmatpush1.msra.mxu0 0.0
      %345 = vmatprep.subr.mxu0 0.0
      %346 = vmatpush1.msra.mxu0 0.0
      %347 = vmatprep.subr.mxu0 0.0
      %348 = vmatpush1.msra.mxu0 0.0
      %349 = vmatprep.subr.mxu0 0.0
      %350 = vmatpush1.msra.mxu0 0.0
      %351 = vmatprep.subr.mxu0 0.0
      %352 = vmatpush1.msra.mxu0 0.0
      %353 = vmatprep.subr.mxu0 0.0
      %354 = vmatpush1.msra.mxu0 0.0
      %355 = vmatprep.mubr.f32.mxu0 0.0
      %356 = vmatmul.mubr.f32.gmra.mrb[0].mxu0 %v290
      %v357 = vpop.f32.mrb[0].mxu0
      %v358 = vadd.f32 0.0, %v357
      %v359 = vpop.f32.mrb[0].mxu0
      %360 = vdwg.mxu0
      %vm361 = vcmask 7168
      %v362 = vsel %vm361, %v358, 0.0
      %363 = vadd.xlane.f32.xlu0 %v362
      %v364 = vpop.xlane.xlu0 %363
      %v365 = vrot.slane %v364, 4
      %v366 = vadd.f32 %v364, %v365
      %v367 = vrot.slane %v366, 2
      %v368 = vadd.f32 %v366, %v367
      %v369 = vrot.slane %v368, 1
      %v370 = vadd.f32 %v368, %v369
      %s371 = vtos %v370
      %s372 = smax.f32 %s371, 0.0009765625
      %v373 = vstv %s372
      %v374 = vrcp.pop %v373
      %s375 = vtos %v374
      %v376 = vand.u32 2147483647, %v258
      %v377 = vand.u32 2147483647, %v259
      %v378 = vand.u32 2147483647, %v260
      %v379 = vsub.f32 0.0, %v376
      %v380 = vsub.f32 0.0, %v377
      %v381 = vsub.f32 0.0, %v378
      %v382 = vmul.f32 %v379, 1.442695
      %v383 = vpow.pop %v382
      %v384 = vmul.f32 %v380, 1.442695
      %v385 = vpow.pop %v384
      %v386 = vmul.f32 %v381, 1.442695
      %v387 = vpow.pop %v386
      %v388 = vadd.f32 %v383, 1.0
      %v389 = vadd.f32 %v385, 1.0
      %v390 = vadd.f32 %v387, 1.0
      %v391 = vlog2.pop %v388
      %v392 = vmul.f32 %v391, 0.6931472
      %v393 = vlog2.pop %v389
      %v394 = vmul.f32 %v393, 0.6931472
      %v395 = vlog2.pop %v390
      %v396 = vmul.f32 %v395, 0.6931472
      %v397 = vsub.f32 0.0, %v258
      %v398 = vsub.f32 0.0, %v259
      %v399 = vsub.f32 0.0, %v260
      %v400 = vmax.f32 %v397, 0.0
      %v401 = vmax.f32 %v398, 0.0
      %v402 = vmax.f32 %v399, 0.0
      %v403 = vadd.f32 %v400, %v392
      %v404 = vadd.f32 %v401, %v394
      %v405 = vadd.f32 %v402, %v396
      %v406 = vmax.f32 %v258, 0.0
      %v407 = vmax.f32 %v259, 0.0
      %v408 = vmax.f32 %v260, 0.0
      %v409 = vadd.f32 %v406, %v392
      %v410 = vadd.f32 %v407, %v394
      %v411 = vadd.f32 %v408, %v396
      %v412 = vmin.f32 %v403, 100.0
      %v413 = vmin.f32 %v404, 100.0
      %v414 = vmin.f32 %v405, 100.0
      %v415 = vmul.f32 %v270, %v412
      %v416 = vmul.f32 %v271, %v413
      %v417 = vmul.f32 %v272, %v414
      %v418 = vsub.f32 1.0, %v270
      %v419 = vsub.f32 1.0, %v271
      %v420 = vsub.f32 1.0, %v272
      %v421 = vmin.f32 %v409, 100.0
      %v422 = vmin.f32 %v410, 100.0
      %v423 = vmin.f32 %v411, 100.0
      %v424 = vmul.f32 %v418, %v421
      %v425 = vmul.f32 %v419, %v422
      %v426 = vmul.f32 %v420, %v423
      %v427 = vadd.f32 %v415, %v424
      %v428 = vadd.f32 %v416, %v425
      %v429 = vadd.f32 %v417, %v426
      %v430 = vmul.f32 %v427, %v290
      %v431 = vmul.f32 %v428, %v290
      %v432 = vmul.f32 %v429, %v290
      %v433 = vadd.f32 %v430, %v431
      %v434 = vadd.f32 %v433, %v432
      %435 = vmatprep.subr.mxu0 0.0
      %436 = vmatpush1.msra.mxu0 1.0
      %437 = vmatprep.subr.mxu0 0.0
      %438 = vmatpush1.msra.mxu0 1.0
      %439 = vmatprep.subr.mxu0 0.0
      %440 = vmatpush1.msra.mxu0 1.0
      %441 = vmatprep.subr.mxu0 0.0
      %442 = vmatpush1.msra.mxu0 1.0
      %443 = vmatprep.subr.mxu0 0.0
      %444 = vmatpush1.msra.mxu0 1.0
      %445 = vmatprep.subr.mxu0 0.0
      %446 = vmatpush1.msra.mxu0 1.0
      %447 = vmatprep.subr.mxu0 0.0
      %448 = vmatpush1.msra.mxu0 1.0
      %449 = vmatprep.subr.mxu0 0.0
      %450 = vmatpush1.msra.mxu0 1.0
      %451 = vmatprep.subr.mxu0 0.0
      %452 = vmatpush1.msra.mxu0 1.0
      %453 = vmatprep.subr.mxu0 0.0
      %454 = vmatpush1.msra.mxu0 1.0
      %455 = vmatprep.subr.mxu0 0.0
      %456 = vmatpush1.msra.mxu0 1.0
      %457 = vmatprep.subr.mxu0 0.0
      %458 = vmatpush1.msra.mxu0 1.0
      %459 = vmatprep.subr.mxu0 0.0
      %460 = vmatpush1.msra.mxu0 1.0
      %461 = vmatprep.subr.mxu0 0.0
      %462 = vmatpush1.msra.mxu0 1.0
      %463 = vmatprep.subr.mxu0 0.0
      %464 = vmatpush1.msra.mxu0 1.0
      %465 = vmatprep.subr.mxu0 0.0
      %466 = vmatpush1.msra.mxu0 1.0
      %467 = vmatprep.subr.mxu0 0.0
      %468 = vmatpush1.msra.mxu0 0.0
      %469 = vmatprep.subr.mxu0 0.0
      %470 = vmatpush1.msra.mxu0 0.0
      %471 = vmatprep.subr.mxu0 0.0
      %472 = vmatpush1.msra.mxu0 0.0
      %473 = vmatprep.subr.mxu0 0.0
      %474 = vmatpush1.msra.mxu0 0.0
      %475 = vmatprep.subr.mxu0 0.0
      %476 = vmatpush1.msra.mxu0 0.0
      %477 = vmatprep.subr.mxu0 0.0
      %478 = vmatpush1.msra.mxu0 0.0
      %479 = vmatprep.subr.mxu0 0.0
      %480 = vmatpush1.msra.mxu0 0.0
      %481 = vmatprep.subr.mxu0 0.0
      %482 = vmatpush1.msra.mxu0 0.0
      %483 = vmatprep.subr.mxu0 0.0
      %484 = vmatpush1.msra.mxu0 0.0
      %485 = vmatprep.subr.mxu0 0.0
      %486 = vmatpush1.msra.mxu0 0.0
      %487 = vmatprep.subr.mxu0 0.0
      %488 = vmatpush1.msra.mxu0 0.0
      %489 = vmatprep.subr.mxu0 0.0
      %490 = vmatpush1.msra.mxu0 0.0
      %491 = vmatprep.subr.mxu0 0.0
      %492 = vmatpush1.msra.mxu0 0.0
      %493 = vmatprep.subr.mxu0 0.0
      %494 = vmatpush1.msra.mxu0 0.0
      %495 = vmatprep.subr.mxu0 0.0
      %496 = vmatpush1.msra.mxu0 0.0
      %497 = vmatprep.subr.mxu0 0.0
      %498 = vmatpush1.msra.mxu0 0.0
      %499 = vmatprep.mubr.f32.mxu0 0.0
      %500 = vmatmul.mubr.f32.gmra.mrb[0].mxu0 %v434
      %v501 = vpop.f32.mrb[0].mxu0
      %v502 = vadd.f32 0.0, %v501
      %v503 = vpop.f32.mrb[0].mxu0
      %504 = vdwg.mxu0
      %v505 = vsel %vm361, %v502, 0.0
      %506 = vadd.xlane.f32.xlu0 %v505
      %v507 = vpop.xlane.xlu0 %506
      %v508 = vrot.slane %v507, 4
      %v509 = vadd.f32 %v507, %v508
      %v510 = vrot.slane %v509, 2
      %v511 = vadd.f32 %v509, %v510
      %v512 = vrot.slane %v511, 1
      %v513 = vadd.f32 %v511, %v512
      %s514 = vtos %v513
      %s515 = smul.f32 %s514, %s375
      %v516 = vand.u32 2147483647, %v254
      %v517 = vsub.f32 0.0, %v516
      %v518 = vmul.f32 %v517, 1.442695
      %v519 = vpow.pop %v518
      %v520 = vadd.f32 %v519, 1.0
      %v521 = vlog2.pop %v520
      %v522 = vmul.f32 %v521, 0.6931472
      %v523 = vsub.f32 0.0, %v254
      %v524 = vmax.f32 %v523, 0.0
      %v525 = vadd.f32 %v524, %v522
      %v526 = vmax.f32 %v254, 0.0
      %v527 = vadd.f32 %v526, %v522
      %v528 = vmin.f32 %v525, 100.0
      %v529 = vmul.f32 %v269, %v528
      %v530 = vsub.f32 1.0, %v269
      %v531 = vmin.f32 %v527, 100.0
      %v532 = vmul.f32 %v530, %v531
      %v533 = vadd.f32 %v529, %v532
      %v534 = vsel %vm288, %v533, 0.0
      %s535 = smul.f32 %s372, 3.0
      %536 = vmax.xlane.f32.xlu0 %v534
      %v537 = vpop.xlane.xlu0 %536
      %v538 = vrot.slane %v537, 4
      %v539 = vmax.f32 %v537, %v538
      %v540 = vrot.slane %v539, 2
      %v541 = vmax.f32 %v539, %v540
      %v542 = vrot.slane %v541, 1
      %v543 = vmax.f32 %v541, %v542
      %s544 = vtos %v543
      %s545 = sadd.f32 %s544, 0.0
      %s546 = smul.f32 %s545, 0.5
      %v547 = vstv %s546
      %vm548 = vcmp.gt.f32.partialorder %v534, %v547
      %v549 = vsel %vm548, 1, 0
      %v550 = vcvt.s32.f32 %v549
      %551 = vmatprep.subr.mxu0 0.0
      %552 = vmatpush1.msra.mxu0 1.0
      %553 = vmatprep.subr.mxu0 0.0
      %554 = vmatpush1.msra.mxu0 1.0
      %555 = vmatprep.subr.mxu0 0.0
      %556 = vmatpush1.msra.mxu0 1.0
      %557 = vmatprep.subr.mxu0 0.0
      %558 = vmatpush1.msra.mxu0 1.0
      %559 = vmatprep.subr.mxu0 0.0
      %560 = vmatpush1.msra.mxu0 1.0
      %561 = vmatprep.subr.mxu0 0.0
      %562 = vmatpush1.msra.mxu0 1.0
      %563 = vmatprep.subr.mxu0 0.0
      %564 = vmatpush1.msra.mxu0 1.0
      %565 = vmatprep.subr.mxu0 0.0
      %566 = vmatpush1.msra.mxu0 1.0
      %567 = vmatprep.subr.mxu0 0.0
      %568 = vmatpush1.msra.mxu0 1.0
      %569 = vmatprep.subr.mxu0 0.0
      %570 = vmatpush1.msra.mxu0 1.0
      %571 = vmatprep.subr.mxu0 0.0
      %572 = vmatpush1.msra.mxu0 1.0
      %573 = vmatprep.subr.mxu0 0.0
      %574 = vmatpush1.msra.mxu0 1.0
      %575 = vmatprep.subr.mxu0 0.0
      %576 = vmatpush1.msra.mxu0 1.0
      %577 = vmatprep.subr.mxu0 0.0
      %578 = vmatpush1.msra.mxu0 1.0
      %579 = vmatprep.subr.mxu0 0.0
      %580 = vmatpush1.msra.mxu0 1.0
      %581 = vmatprep.subr.mxu0 0.0
      %582 = vmatpush1.msra.mxu0 1.0
      %583 = vmatprep.subr.mxu0 0.0
      %584 = vmatpush1.msra.mxu0 0.0
      %585 = vmatprep.subr.mxu0 0.0
      %586 = vmatpush1.msra.mxu0 0.0
      %587 = vmatprep.subr.mxu0 0.0
      %588 = vmatpush1.msra.mxu0 0.0
      %589 = vmatprep.subr.mxu0 0.0
      %590 = vmatpush1.msra.mxu0 0.0
      %591 = vmatprep.subr.mxu0 0.0
      %592 = vmatpush1.msra.mxu0 0.0
      %593 = vmatprep.subr.mxu0 0.0
      %594 = vmatpush1.msra.mxu0 0.0
      %595 = vmatprep.subr.mxu0 0.0
      %596 = vmatpush1.msra.mxu0 0.0
      %597 = vmatprep.subr.mxu0 0.0
      %598 = vmatpush1.msra.mxu0 0.0
      %599 = vmatprep.subr.mxu0 0.0
      %600 = vmatpush1.msra.mxu0 0.0
      %601 = vmatprep.subr.mxu0 0.0
      %602 = vmatpush1.msra.mxu0 0.0
      %603 = vmatprep.subr.mxu0 0.0
      %604 = vmatpush1.msra.mxu0 0.0
      %605 = vmatprep.subr.mxu0 0.0
      %606 = vmatpush1.msra.mxu0 0.0
      %607 = vmatprep.subr.mxu0 0.0
      %608 = vmatpush1.msra.mxu0 0.0
      %609 = vmatprep.subr.mxu0 0.0
      %610 = vmatpush1.msra.mxu0 0.0
      %611 = vmatprep.subr.mxu0 0.0
      %612 = vmatpush1.msra.mxu0 0.0
      %613 = vmatprep.subr.mxu0 0.0
      %614 = vmatpush1.msra.mxu0 0.0
      %615 = vmatprep.mubr.f32.mxu0 0.0
      %616 = vmatmul.mubr.f32.gmra.mrb[0].mxu0 %v550
      %v617 = vpop.f32.mrb[0].mxu0
      %v618 = vadd.f32 0.0, %v617
      %v619 = vpop.f32.mrb[0].mxu0
      %620 = vdwg.mxu0
      %v621 = vsel %vm361, %v618, 0.0
      %622 = vadd.xlane.f32.xlu0 %v621
      %v623 = vpop.xlane.xlu0 %622
      %v624 = vrot.slane %v623, 4
      %v625 = vadd.f32 %v623, %v624
      %v626 = vrot.slane %v625, 2
      %v627 = vadd.f32 %v625, %v626
      %v628 = vrot.slane %v627, 1
      %v629 = vadd.f32 %v627, %v628
      %s630 = vtos %v629
      %p631 = scmp.le.f32.partialorder %s630, %s535
      %s632 = scalar_select %p631, 0.0, %s546
      %s633 = scalar_select %p631, %s546, %s544
      %s634 = sadd.f32 %s632, %s633
      %s635 = smul.f32 %s634, 0.5
      %v636 = vstv %s635
      %vm637 = vcmp.gt.f32.partialorder %v534, %v636
      %v638 = vsel %vm637, 1, 0
      %v639 = vcvt.s32.f32 %v638
      %640 = vmatprep.subr.mxu0 0.0
      %641 = vmatpush1.msra.mxu0 1.0
      %642 = vmatprep.subr.mxu0 0.0
      %643 = vmatpush1.msra.mxu0 1.0
      %644 = vmatprep.subr.mxu0 0.0
      %645 = vmatpush1.msra.mxu0 1.0
      %646 = vmatprep.subr.mxu0 0.0
      %647 = vmatpush1.msra.mxu0 1.0
      %648 = vmatprep.subr.mxu0 0.0
      %649 = vmatpush1.msra.mxu0 1.0
      %650 = vmatprep.subr.mxu0 0.0
      %651 = vmatpush1.msra.mxu0 1.0
      %652 = vmatprep.subr.mxu0 0.0
      %653 = vmatpush1.msra.mxu0 1.0
      %654 = vmatprep.subr.mxu0 0.0
      %655 = vmatpush1.msra.mxu0 1.0
      %656 = vmatprep.subr.mxu0 0.0
      %657 = vmatpush1.msra.mxu0 1.0
      %658 = vmatprep.subr.mxu0 0.0
      %659 = vmatpush1.msra.mxu0 1.0
      %660 = vmatprep.subr.mxu0 0.0
      %661 = vmatpush1.msra.mxu0 1.0
      %662 = vmatprep.subr.mxu0 0.0
      %663 = vmatpush1.msra.mxu0 1.0
      %664 = vmatprep.subr.mxu0 0.0
      %665 = vmatpush1.msra.mxu0 1.0
      %666 = vmatprep.subr.mxu0 0.0
      %667 = vmatpush1.msra.mxu0 1.0
      %668 = vmatprep.subr.mxu0 0.0
      %669 = vmatpush1.msra.mxu0 1.0
      %670 = vmatprep.subr.mxu0 0.0
      %671 = vmatpush1.msra.mxu0 1.0
      %672 = vmatprep.subr.mxu0 0.0
      %673 = vmatpush1.msra.mxu0 0.0
      %674 = vmatprep.subr.mxu0 0.0
      %675 = vmatpush1.msra.mxu0 0.0
      %676 = vmatprep.subr.mxu0 0.0
      %677 = vmatpush1.msra.mxu0 0.0
      %678 = vmatprep.subr.mxu0 0.0
      %679 = vmatpush1.msra.mxu0 0.0
      %680 = vmatprep.subr.mxu0 0.0
      %681 = vmatpush1.msra.mxu0 0.0
      %682 = vmatprep.subr.mxu0 0.0
      %683 = vmatpush1.msra.mxu0 0.0
      %684 = vmatprep.subr.mxu0 0.0
      %685 = vmatpush1.msra.mxu0 0.0
      %686 = vmatprep.subr.mxu0 0.0
      %687 = vmatpush1.msra.mxu0 0.0
      %688 = vmatprep.subr.mxu0 0.0
      %689 = vmatpush1.msra.mxu0 0.0
      %690 = vmatprep.subr.mxu0 0.0
      %691 = vmatpush1.msra.mxu0 0.0
      %692 = vmatprep.subr.mxu0 0.0
      %693 = vmatpush1.msra.mxu0 0.0
      %694 = vmatprep.subr.mxu0 0.0
      %695 = vmatpush1.msra.mxu0 0.0
      %696 = vmatprep.subr.mxu0 0.0
      %697 = vmatpush1.msra.mxu0 0.0
      %698 = vmatprep.subr.mxu0 0.0
      %699 = vmatpush1.msra.mxu0 0.0
      %700 = vmatprep.subr.mxu0 0.0
      %701 = vmatpush1.msra.mxu0 0.0
      %702 = vmatprep.subr.mxu0 0.0
      %703 = vmatpush1.msra.mxu0 0.0
      %704 = vmatprep.mubr.f32.mxu0 0.0
      %705 = vmatmul.mubr.f32.gmra.mrb[0].mxu0 %v639
      %v706 = vpop.f32.mrb[0].mxu0
      %v707 = vadd.f32 0.0, %v706
      %v708 = vpop.f32.mrb[0].mxu0
      %709 = vdwg.mxu0
      %v710 = vsel %vm361, %v707, 0.0
      %711 = vadd.xlane.f32.xlu0 %v710
      %v712 = vpop.xlane.xlu0 %711
      %v713 = vrot.slane %v712, 4
      %v714 = vadd.f32 %v712, %v713
      %v715 = vrot.slane %v714, 2
      %v716 = vadd.f32 %v714, %v715
      %v717 = vrot.slane %v716, 1
      %v718 = vadd.f32 %v716, %v717
      %s719 = vtos %v718
      %p720 = scmp.le.f32.partialorder %s719, %s535
      %s721 = scalar_select %p720, %s632, %s635
      %s722 = scalar_select %p720, %s635, %s633
      %s723 = sadd.f32 %s721, %s722
      %s724 = smul.f32 %s723, 0.5
      %v725 = vstv %s724
      %vm726 = vcmp.gt.f32.partialorder %v534, %v725
      %v727 = vsel %vm726, 1, 0
      %v728 = vcvt.s32.f32 %v727
      %729 = vmatprep.subr.mxu0 0.0
      %730 = vmatpush1.msra.mxu0 1.0
      %731 = vmatprep.subr.mxu0 0.0
      %732 = vmatpush1.msra.mxu0 1.0
      %733 = vmatprep.subr.mxu0 0.0
      %734 = vmatpush1.msra.mxu0 1.0
      %735 = vmatprep.subr.mxu0 0.0
      %736 = vmatpush1.msra.mxu0 1.0
      %737 = vmatprep.subr.mxu0 0.0
      %738 = vmatpush1.msra.mxu0 1.0
      %739 = vmatprep.subr.mxu0 0.0
      %740 = vmatpush1.msra.mxu0 1.0
      %741 = vmatprep.subr.mxu0 0.0
      %742 = vmatpush1.msra.mxu0 1.0
      %743 = vmatprep.subr.mxu0 0.0
      %744 = vmatpush1.msra.mxu0 1.0
      %745 = vmatprep.subr.mxu0 0.0
      %746 = vmatpush1.msra.mxu0 1.0
      %747 = vmatprep.subr.mxu0 0.0
      %748 = vmatpush1.msra.mxu0 1.0
      %749 = vmatprep.subr.mxu0 0.0
      %750 = vmatpush1.msra.mxu0 1.0
      %751 = vmatprep.subr.mxu0 0.0
      %752 = vmatpush1.msra.mxu0 1.0
      %753 = vmatprep.subr.mxu0 0.0
      %754 = vmatpush1.msra.mxu0 1.0
      %755 = vmatprep.subr.mxu0 0.0
      %756 = vmatpush1.msra.mxu0 1.0
      %757 = vmatprep.subr.mxu0 0.0
      %758 = vmatpush1.msra.mxu0 1.0
      %759 = vmatprep.subr.mxu0 0.0
      %760 = vmatpush1.msra.mxu0 1.0
      %761 = vmatprep.subr.mxu0 0.0
      %762 = vmatpush1.msra.mxu0 0.0
      %763 = vmatprep.subr.mxu0 0.0
      %764 = vmatpush1.msra.mxu0 0.0
      %765 = vmatprep.subr.mxu0 0.0
      %766 = vmatpush1.msra.mxu0 0.0
      %767 = vmatprep.subr.mxu0 0.0
      %768 = vmatpush1.msra.mxu0 0.0
      %769 = vmatprep.subr.mxu0 0.0
      %770 = vmatpush1.msra.mxu0 0.0
      %771 = vmatprep.subr.mxu0 0.0
      %772 = vmatpush1.msra.mxu0 0.0
      %773 = vmatprep.subr.mxu0 0.0
      %774 = vmatpush1.msra.mxu0 0.0
      %775 = vmatprep.subr.mxu0 0.0
      %776 = vmatpush1.msra.mxu0 0.0
      %777 = vmatprep.subr.mxu0 0.0
      %778 = vmatpush1.msra.mxu0 0.0
      %779 = vmatprep.subr.mxu0 0.0
      %780 = vmatpush1.msra.mxu0 0.0
      %781 = vmatprep.subr.mxu0 0.0
      %782 = vmatpush1.msra.mxu0 0.0
      %783 = vmatprep.subr.mxu0 0.0
      %784 = vmatpush1.msra.mxu0 0.0
      %785 = vmatprep.subr.mxu0 0.0
      %786 = vmatpush1.msra.mxu0 0.0
      %787 = vmatprep.subr.mxu0 0.0
      %788 = vmatpush1.msra.mxu0 0.0
      %789 = vmatprep.subr.mxu0 0.0
      %790 = vmatpush1.msra.mxu0 0.0
      %791 = vmatprep.subr.mxu0 0.0
      %792 = vmatpush1.msra.mxu0 0.0
      %793 = vmatprep.mubr.f32.mxu0 0.0
      %794 = vmatmul.mubr.f32.gmra.mrb[0].mxu0 %v728
      %v795 = vpop.f32.mrb[0].mxu0
      %v796 = vadd.f32 0.0, %v795
      %v797 = vpop.f32.mrb[0].mxu0
      %798 = vdwg.mxu0
      %v799 = vsel %vm361, %v796, 0.0
      %800 = vadd.xlane.f32.xlu0 %v799
      %v801 = vpop.xlane.xlu0 %800
      %v802 = vrot.slane %v801, 4
      %v803 = vadd.f32 %v801, %v802
      %v804 = vrot.slane %v803, 2
      %v805 = vadd.f32 %v803, %v804
      %v806 = vrot.slane %v805, 1
      %v807 = vadd.f32 %v805, %v806
      %s808 = vtos %v807
      %p809 = scmp.le.f32.partialorder %s808, %s535
      %s810 = scalar_select %p809, %s721, %s724
      %s811 = scalar_select %p809, %s724, %s722
      %s812 = sadd.f32 %s810, %s811
      %s813 = smul.f32 %s812, 0.5
      %v814 = vstv %s813
      %vm815 = vcmp.gt.f32.partialorder %v534, %v814
      %v816 = vsel %vm815, 1, 0
      %v817 = vcvt.s32.f32 %v816
      %818 = vmatprep.subr.mxu0 0.0
      %819 = vmatpush1.msra.mxu0 1.0
      %820 = vmatprep.subr.mxu0 0.0
      %821 = vmatpush1.msra.mxu0 1.0
      %822 = vmatprep.subr.mxu0 0.0
      %823 = vmatpush1.msra.mxu0 1.0
      %824 = vmatprep.subr.mxu0 0.0
      %825 = vmatpush1.msra.mxu0 1.0
      %826 = vmatprep.subr.mxu0 0.0
      %827 = vmatpush1.msra.mxu0 1.0
      %828 = vmatprep.subr.mxu0 0.0
      %829 = vmatpush1.msra.mxu0 1.0
      %830 = vmatprep.subr.mxu0 0.0
      %831 = vmatpush1.msra.mxu0 1.0
      %832 = vmatprep.subr.mxu0 0.0
      %833 = vmatpush1.msra.mxu0 1.0
      %834 = vmatprep.subr.mxu0 0.0
      %835 = vmatpush1.msra.mxu0 1.0
      %836 = vmatprep.subr.mxu0 0.0
      %837 = vmatpush1.msra.mxu0 1.0
      %838 = vmatprep.subr.mxu0 0.0
      %839 = vmatpush1.msra.mxu0 1.0
      %840 = vmatprep.subr.mxu0 0.0
      %841 = vmatpush1.msra.mxu0 1.0
      %842 = vmatprep.subr.mxu0 0.0
      %843 = vmatpush1.msra.mxu0 1.0
      %844 = vmatprep.subr.mxu0 0.0
      %845 = vmatpush1.msra.mxu0 1.0
      %846 = vmatprep.subr.mxu0 0.0
      %847 = vmatpush1.msra.mxu0 1.0
      %848 = vmatprep.subr.mxu0 0.0
      %849 = vmatpush1.msra.mxu0 1.0
      %850 = vmatprep.subr.mxu0 0.0
      %851 = vmatpush1.msra.mxu0 0.0
      %852 = vmatprep.subr.mxu0 0.0
      %853 = vmatpush1.msra.mxu0 0.0
      %854 = vmatprep.subr.mxu0 0.0
      %855 = vmatpush1.msra.mxu0 0.0
      %856 = vmatprep.subr.mxu0 0.0
      %857 = vmatpush1.msra.mxu0 0.0
      %858 = vmatprep.subr.mxu0 0.0
      %859 = vmatpush1.msra.mxu0 0.0
      %860 = vmatprep.subr.mxu0 0.0
      %861 = vmatpush1.msra.mxu0 0.0
      %862 = vmatprep.subr.mxu0 0.0
      %863 = vmatpush1.msra.mxu0 0.0
      %864 = vmatprep.subr.mxu0 0.0
      %865 = vmatpush1.msra.mxu0 0.0
      %866 = vmatprep.subr.mxu0 0.0
      %867 = vmatpush1.msra.mxu0 0.0
      %868 = vmatprep.subr.mxu0 0.0
      %869 = vmatpush1.msra.mxu0 0.0
      %870 = vmatprep.subr.mxu0 0.0
      %871 = vmatpush1.msra.mxu0 0.0
      %872 = vmatprep.subr.mxu0 0.0
      %873 = vmatpush1.msra.mxu0 0.0
      %874 = vmatprep.subr.mxu0 0.0
      %875 = vmatpush1.msra.mxu0 0.0
      %876 = vmatprep.subr.mxu0 0.0
      %877 = vmatpush1.msra.mxu0 0.0
      %878 = vmatprep.subr.mxu0 0.0
      %879 = vmatpush1.msra.mxu0 0.0
      %880 = vmatprep.subr.mxu0 0.0
      %881 = vmatpush1.msra.mxu0 0.0
      %882 = vmatprep.mubr.f32.mxu0 0.0
      %883 = vmatmul.mubr.f32.gmra.mrb[0].mxu0 %v817
      %v884 = vpop.f32.mrb[0].mxu0
      %v885 = vadd.f32 0.0, %v884
      %v886 = vpop.f32.mrb[0].mxu0
      %887 = vdwg.mxu0
      %v888 = vsel %vm361, %v885, 0.0
      %889 = vadd.xlane.f32.xlu0 %v888
      %v890 = vpop.xlane.xlu0 %889
      %v891 = vrot.slane %v890, 4
      %v892 = vadd.f32 %v890, %v891
      %v893 = vrot.slane %v892, 2
      %v894 = vadd.f32 %v892, %v893
      %v895 = vrot.slane %v894, 1
      %v896 = vadd.f32 %v894, %v895
      %s897 = vtos %v896
      %p898 = scmp.le.f32.partialorder %s897, %s535
      %s899 = scalar_select %p898, %s810, %s813
      %s900 = scalar_select %p898, %s813, %s811
      %s901 = sadd.f32 %s899, %s900
      %s902 = smul.f32 %s901, 0.5
      %v903 = vstv %s902
      %vm904 = vcmp.gt.f32.partialorder %v534, %v903
      %v905 = vsel %vm904, 1, 0
      %v906 = vcvt.s32.f32 %v905
      %907 = vmatprep.subr.mxu0 0.0
      %908 = vmatpush1.msra.mxu0 1.0
      %909 = vmatprep.subr.mxu0 0.0
      %910 = vmatpush1.msra.mxu0 1.0
      %911 = vmatprep.subr.mxu0 0.0
      %912 = vmatpush1.msra.mxu0 1.0
      %913 = vmatprep.subr.mxu0 0.0
      %914 = vmatpush1.msra.mxu0 1.0
      %915 = vmatprep.subr.mxu0 0.0
      %916 = vmatpush1.msra.mxu0 1.0
      %917 = vmatprep.subr.mxu0 0.0
      %918 = vmatpush1.msra.mxu0 1.0
      %919 = vmatprep.subr.mxu0 0.0
      %920 = vmatpush1.msra.mxu0 1.0
      %921 = vmatprep.subr.mxu0 0.0
      %922 = vmatpush1.msra.mxu0 1.0
      %923 = vmatprep.subr.mxu0 0.0
      %924 = vmatpush1.msra.mxu0 1.0
      %925 = vmatprep.subr.mxu0 0.0
      %926 = vmatpush1.msra.mxu0 1.0
      %927 = vmatprep.subr.mxu0 0.0
      %928 = vmatpush1.msra.mxu0 1.0
      %929 = vmatprep.subr.mxu0 0.0
      %930 = vmatpush1.msra.mxu0 1.0
      %931 = vmatprep.subr.mxu0 0.0
      %932 = vmatpush1.msra.mxu0 1.0
      %933 = vmatprep.subr.mxu0 0.0
      %934 = vmatpush1.msra.mxu0 1.0
      %935 = vmatprep.subr.mxu0 0.0
      %936 = vmatpush1.msra.mxu0 1.0
      %937 = vmatprep.subr.mxu0 0.0
      %938 = vmatpush1.msra.mxu0 1.0
      %939 = vmatprep.subr.mxu0 0.0
      %940 = vmatpush1.msra.mxu0 0.0
      %941 = vmatprep.subr.mxu0 0.0
      %942 = vmatpush1.msra.mxu0 0.0
      %943 = vmatprep.subr.mxu0 0.0
      %944 = vmatpush1.msra.mxu0 0.0
      %945 = vmatprep.subr.mxu0 0.0
      %946 = vmatpush1.msra.mxu0 0.0
      %947 = vmatprep.subr.mxu0 0.0
      %948 = vmatpush1.msra.mxu0 0.0
      %949 = vmatprep.subr.mxu0 0.0
      %950 = vmatpush1.msra.mxu0 0.0
      %951 = vmatprep.subr.mxu0 0.0
      %952 = vmatpush1.msra.mxu0 0.0
      %953 = vmatprep.subr.mxu0 0.0
      %954 = vmatpush1.msra.mxu0 0.0
      %955 = vmatprep.subr.mxu0 0.0
      %956 = vmatpush1.msra.mxu0 0.0
      %957 = vmatprep.subr.mxu0 0.0
      %958 = vmatpush1.msra.mxu0 0.0
      %959 = vmatprep.subr.mxu0 0.0
      %960 = vmatpush1.msra.mxu0 0.0
      %961 = vmatprep.subr.mxu0 0.0
      %962 = vmatpush1.msra.mxu0 0.0
      %963 = vmatprep.subr.mxu0 0.0
      %964 = vmatpush1.msra.mxu0 0.0
      %965 = vmatprep.subr.mxu0 0.0
      %966 = vmatpush1.msra.mxu0 0.0
      %967 = vmatprep.subr.mxu0 0.0
      %968 = vmatpush1.msra.mxu0 0.0
      %969 = vmatprep.subr.mxu0 0.0
      %970 = vmatpush1.msra.mxu0 0.0
      %971 = vmatprep.mubr.f32.mxu0 0.0
      %972 = vmatmul.mubr.f32.gmra.mrb[0].mxu0 %v906
      %v973 = vpop.f32.mrb[0].mxu0
      %v974 = vadd.f32 0.0, %v973
      %v975 = vpop.f32.mrb[0].mxu0
      %976 = vdwg.mxu0
      %v977 = vsel %vm361, %v974, 0.0
      %978 = vadd.xlane.f32.xlu0 %v977
      %v979 = vpop.xlane.xlu0 %978
      %v980 = vrot.slane %v979, 4
      %v981 = vadd.f32 %v979, %v980
      %v982 = vrot.slane %v981, 2
      %v983 = vadd.f32 %v981, %v982
      %v984 = vrot.slane %v983, 1
      %v985 = vadd.f32 %v983, %v984
      %s986 = vtos %v985
      %p987 = scmp.le.f32.partialorder %s986, %s535
      %s988 = scalar_select %p987, %s899, %s902
      %s989 = scalar_select %p987, %s902, %s900
      %s990 = sadd.f32 %s988, %s989
      %s991 = smul.f32 %s990, 0.5
      %v992 = vstv %s991
      %vm993 = vcmp.gt.f32.partialorder %v534, %v992
      %v994 = vsel %vm993, 1, 0
      %v995 = vcvt.s32.f32 %v994
      %996 = vmatprep.subr.mxu0 0.0
      %997 = vmatpush1.msra.mxu0 1.0
      %998 = vmatprep.subr.mxu0 0.0
      %999 = vmatpush1.msra.mxu0 1.0
      %1000 = vmatprep.subr.mxu0 0.0
      %1001 = vmatpush1.msra.mxu0 1.0
      %1002 = vmatprep.subr.mxu0 0.0
      %1003 = vmatpush1.msra.mxu0 1.0
      %1004 = vmatprep.subr.mxu0 0.0
      %1005 = vmatpush1.msra.mxu0 1.0
      %1006 = vmatprep.subr.mxu0 0.0
      %1007 = vmatpush1.msra.mxu0 1.0
      %1008 = vmatprep.subr.mxu0 0.0
      %1009 = vmatpush1.msra.mxu0 1.0
      %1010 = vmatprep.subr.mxu0 0.0
      %1011 = vmatpush1.msra.mxu0 1.0
      %1012 = vmatprep.subr.mxu0 0.0
      %1013 = vmatpush1.msra.mxu0 1.0
      %1014 = vmatprep.subr.mxu0 0.0
      %1015 = vmatpush1.msra.mxu0 1.0
      %1016 = vmatprep.subr.mxu0 0.0
      %1017 = vmatpush1.msra.mxu0 1.0
      %1018 = vmatprep.subr.mxu0 0.0
      %1019 = vmatpush1.msra.mxu0 1.0
      %1020 = vmatprep.subr.mxu0 0.0
      %1021 = vmatpush1.msra.mxu0 1.0
      %1022 = vmatprep.subr.mxu0 0.0
      %1023 = vmatpush1.msra.mxu0 1.0
      %1024 = vmatprep.subr.mxu0 0.0
      %1025 = vmatpush1.msra.mxu0 1.0
      %1026 = vmatprep.subr.mxu0 0.0
      %1027 = vmatpush1.msra.mxu0 1.0
      %1028 = vmatprep.subr.mxu0 0.0
      %1029 = vmatpush1.msra.mxu0 0.0
      %1030 = vmatprep.subr.mxu0 0.0
      %1031 = vmatpush1.msra.mxu0 0.0
      %1032 = vmatprep.subr.mxu0 0.0
      %1033 = vmatpush1.msra.mxu0 0.0
      %1034 = vmatprep.subr.mxu0 0.0
      %1035 = vmatpush1.msra.mxu0 0.0
      %1036 = vmatprep.subr.mxu0 0.0
      %1037 = vmatpush1.msra.mxu0 0.0
      %1038 = vmatprep.subr.mxu0 0.0
      %1039 = vmatpush1.msra.mxu0 0.0
      %1040 = vmatprep.subr.mxu0 0.0
      %1041 = vmatpush1.msra.mxu0 0.0
      %1042 = vmatprep.subr.mxu0 0.0
      %1043 = vmatpush1.msra.mxu0 0.0
      %1044 = vmatprep.subr.mxu0 0.0
      %1045 = vmatpush1.msra.mxu0 0.0
      %1046 = vmatprep.subr.mxu0 0.0
      %1047 = vmatpush1.msra.mxu0 0.0
      %1048 = vmatprep.subr.mxu0 0.0
      %1049 = vmatpush1.msra.mxu0 0.0
      %1050 = vmatprep.subr.mxu0 0.0
      %1051 = vmatpush1.msra.mxu0 0.0
      %1052 = vmatprep.subr.mxu0 0.0
      %1053 = vmatpush1.msra.mxu0 0.0
      %1054 = vmatprep.subr.mxu0 0.0
      %1055 = vmatpush1.msra.mxu0 0.0
      %1056 = vmatprep.subr.mxu0 0.0
      %1057 = vmatpush1.msra.mxu0 0.0
      %1058 = vmatprep.subr.mxu0 0.0
      %1059 = vmatpush1.msra.mxu0 0.0
      %1060 = vmatprep.mubr.f32.mxu0 0.0
      %1061 = vmatmul.mubr.f32.gmra.mrb[0].mxu0 %v995
      %v1062 = vpop.f32.mrb[0].mxu0
      %v1063 = vadd.f32 0.0, %v1062
      %v1064 = vpop.f32.mrb[0].mxu0
      %1065 = vdwg.mxu0
      %v1066 = vsel %vm361, %v1063, 0.0
      %1067 = vadd.xlane.f32.xlu0 %v1066
      %v1068 = vpop.xlane.xlu0 %1067
      %v1069 = vrot.slane %v1068, 4
      %v1070 = vadd.f32 %v1068, %v1069
      %v1071 = vrot.slane %v1070, 2
      %v1072 = vadd.f32 %v1070, %v1071
      %v1073 = vrot.slane %v1072, 1
      %v1074 = vadd.f32 %v1072, %v1073
      %s1075 = vtos %v1074
      %p1076 = scmp.le.f32.partialorder %s1075, %s535
      %s1077 = scalar_select %p1076, %s988, %s991
      %s1078 = scalar_select %p1076, %s991, %s989
      %s1079 = sadd.f32 %s1077, %s1078
      %s1080 = smul.f32 %s1079, 0.5
      %v1081 = vstv %s1080
      %vm1082 = vcmp.gt.f32.partialorder %v534, %v1081
      %v1083 = vsel %vm1082, 1, 0
      %v1084 = vcvt.s32.f32 %v1083
      %1085 = vmatprep.subr.mxu0 0.0
      %1086 = vmatpush1.msra.mxu0 1.0
      %1087 = vmatprep.subr.mxu0 0.0
      %1088 = vmatpush1.msra.mxu0 1.0
      %1089 = vmatprep.subr.mxu0 0.0
      %1090 = vmatpush1.msra.mxu0 1.0
      %1091 = vmatprep.subr.mxu0 0.0
      %1092 = vmatpush1.msra.mxu0 1.0
      %1093 = vmatprep.subr.mxu0 0.0
      %1094 = vmatpush1.msra.mxu0 1.0
      %1095 = vmatprep.subr.mxu0 0.0
      %1096 = vmatpush1.msra.mxu0 1.0
      %1097 = vmatprep.subr.mxu0 0.0
      %1098 = vmatpush1.msra.mxu0 1.0
      %1099 = vmatprep.subr.mxu0 0.0
      %1100 = vmatpush1.msra.mxu0 1.0
      %1101 = vmatprep.subr.mxu0 0.0
      %1102 = vmatpush1.msra.mxu0 1.0
      %1103 = vmatprep.subr.mxu0 0.0
      %1104 = vmatpush1.msra.mxu0 1.0
      %1105 = vmatprep.subr.mxu0 0.0
      %1106 = vmatpush1.msra.mxu0 1.0
      %1107 = vmatprep.subr.mxu0 0.0
      %1108 = vmatpush1.msra.mxu0 1.0
      %1109 = vmatprep.subr.mxu0 0.0
      %1110 = vmatpush1.msra.mxu0 1.0
      %1111 = vmatprep.subr.mxu0 0.0
      %1112 = vmatpush1.msra.mxu0 1.0
      %1113 = vmatprep.subr.mxu0 0.0
      %1114 = vmatpush1.msra.mxu0 1.0
      %1115 = vmatprep.subr.mxu0 0.0
      %1116 = vmatpush1.msra.mxu0 1.0
      %1117 = vmatprep.subr.mxu0 0.0
      %1118 = vmatpush1.msra.mxu0 0.0
      %1119 = vmatprep.subr.mxu0 0.0
      %1120 = vmatpush1.msra.mxu0 0.0
      %1121 = vmatprep.subr.mxu0 0.0
      %1122 = vmatpush1.msra.mxu0 0.0
      %1123 = vmatprep.subr.mxu0 0.0
      %1124 = vmatpush1.msra.mxu0 0.0
      %1125 = vmatprep.subr.mxu0 0.0
      %1126 = vmatpush1.msra.mxu0 0.0
      %1127 = vmatprep.subr.mxu0 0.0
      %1128 = vmatpush1.msra.mxu0 0.0
      %1129 = vmatprep.subr.mxu0 0.0
      %1130 = vmatpush1.msra.mxu0 0.0
      %1131 = vmatprep.subr.mxu0 0.0
      %1132 = vmatpush1.msra.mxu0 0.0
      %1133 = vmatprep.subr.mxu0 0.0
      %1134 = vmatpush1.msra.mxu0 0.0
      %1135 = vmatprep.subr.mxu0 0.0
      %1136 = vmatpush1.msra.mxu0 0.0
      %1137 = vmatprep.subr.mxu0 0.0
      %1138 = vmatpush1.msra.mxu0 0.0
      %1139 = vmatprep.subr.mxu0 0.0
      %1140 = vmatpush1.msra.mxu0 0.0
      %1141 = vmatprep.subr.mxu0 0.0
      %1142 = vmatpush1.msra.mxu0 0.0
      %1143 = vmatprep.subr.mxu0 0.0
      %1144 = vmatpush1.msra.mxu0 0.0
      %1145 = vmatprep.subr.mxu0 0.0
      %1146 = vmatpush1.msra.mxu0 0.0
      %1147 = vmatprep.subr.mxu0 0.0
      %1148 = vmatpush1.msra.mxu0 0.0
      %1149 = vmatprep.mubr.f32.mxu0 0.0
      %1150 = vmatmul.mubr.f32.gmra.mrb[0].mxu0 %v1084
      %v1151 = vpop.f32.mrb[0].mxu0
      %v1152 = vadd.f32 0.0, %v1151
      %v1153 = vpop.f32.mrb[0].mxu0
      %1154 = vdwg.mxu0
      %v1155 = vsel %vm361, %v1152, 0.0
      %1156 = vadd.xlane.f32.xlu0 %v1155
      %v1157 = vpop.xlane.xlu0 %1156
      %v1158 = vrot.slane %v1157, 4
      %v1159 = vadd.f32 %v1157, %v1158
      %v1160 = vrot.slane %v1159, 2
      %v1161 = vadd.f32 %v1159, %v1160
      %v1162 = vrot.slane %v1161, 1
      %v1163 = vadd.f32 %v1161, %v1162
      %s1164 = vtos %v1163
      %p1165 = scmp.le.f32.partialorder %s1164, %s535
      %s1166 = scalar_select %p1165, %s1077, %s1080
      %s1167 = scalar_select %p1165, %s1080, %s1078
      %s1168 = sadd.f32 %s1166, %s1167
      %s1169 = smul.f32 %s1168, 0.5
      %v1170 = vstv %s1169
      %vm1171 = vcmp.gt.f32.partialorder %v534, %v1170
      %v1172 = vsel %vm1171, 1, 0
      %v1173 = vcvt.s32.f32 %v1172
      %1174 = vmatprep.subr.mxu0 0.0
      %1175 = vmatpush1.msra.mxu0 1.0
      %1176 = vmatprep.subr.mxu0 0.0
      %1177 = vmatpush1.msra.mxu0 1.0
      %1178 = vmatprep.subr.mxu0 0.0
      %1179 = vmatpush1.msra.mxu0 1.0
      %1180 = vmatprep.subr.mxu0 0.0
      %1181 = vmatpush1.msra.mxu0 1.0
      %1182 = vmatprep.subr.mxu0 0.0
      %1183 = vmatpush1.msra.mxu0 1.0
      %1184 = vmatprep.subr.mxu0 0.0
      %1185 = vmatpush1.msra.mxu0 1.0
      %1186 = vmatprep.subr.mxu0 0.0
      %1187 = vmatpush1.msra.mxu0 1.0
      %1188 = vmatprep.subr.mxu0 0.0
      %1189 = vmatpush1.msra.mxu0 1.0
      %1190 = vmatprep.subr.mxu0 0.0
      %1191 = vmatpush1.msra.mxu0 1.0
      %1192 = vmatprep.subr.mxu0 0.0
      %1193 = vmatpush1.msra.mxu0 1.0
      %1194 = vmatprep.subr.mxu0 0.0
      %1195 = vmatpush1.msra.mxu0 1.0
      %1196 = vmatprep.subr.mxu0 0.0
      %1197 = vmatpush1.msra.mxu0 1.0
      %1198 = vmatprep.subr.mxu0 0.0
      %1199 = vmatpush1.msra.mxu0 1.0
      %1200 = vmatprep.subr.mxu0 0.0
      %1201 = vmatpush1.msra.mxu0 1.0
      %1202 = vmatprep.subr.mxu0 0.0
      %1203 = vmatpush1.msra.mxu0 1.0
      %1204 = vmatprep.subr.mxu0 0.0
      %1205 = vmatpush1.msra.mxu0 1.0
      %1206 = vmatprep.subr.mxu0 0.0
      %1207 = vmatpush1.msra.mxu0 0.0
      %1208 = vmatprep.subr.mxu0 0.0
      %1209 = vmatpush1.msra.mxu0 0.0
      %1210 = vmatprep.subr.mxu0 0.0
      %1211 = vmatpush1.msra.mxu0 0.0
      %1212 = vmatprep.subr.mxu0 0.0
      %1213 = vmatpush1.msra.mxu0 0.0
      %1214 = vmatprep.subr.mxu0 0.0
      %1215 = vmatpush1.msra.mxu0 0.0
      %1216 = vmatprep.subr.mxu0 0.0
      %1217 = vmatpush1.msra.mxu0 0.0
      %1218 = vmatprep.subr.mxu0 0.0
      %1219 = vmatpush1.msra.mxu0 0.0
      %1220 = vmatprep.subr.mxu0 0.0
      %1221 = vmatpush1.msra.mxu0 0.0
      %1222 = vmatprep.subr.mxu0 0.0
      %1223 = vmatpush1.msra.mxu0 0.0
      %1224 = vmatprep.subr.mxu0 0.0
      %1225 = vmatpush1.msra.mxu0 0.0
      %1226 = vmatprep.subr.mxu0 0.0
      %1227 = vmatpush1.msra.mxu0 0.0
      %1228 = vmatprep.subr.mxu0 0.0
      %1229 = vmatpush1.msra.mxu0 0.0
      %1230 = vmatprep.subr.mxu0 0.0
      %1231 = vmatpush1.msra.mxu0 0.0
      %1232 = vmatprep.subr.mxu0 0.0
      %1233 = vmatpush1.msra.mxu0 0.0
      %1234 = vmatprep.subr.mxu0 0.0
      %1235 = vmatpush1.msra.mxu0 0.0
      %1236 = vmatprep.subr.mxu0 0.0
      %1237 = vmatpush1.msra.mxu0 0.0
      %1238 = vmatprep.mubr.f32.mxu0 0.0
      %1239 = vmatmul.mubr.f32.gmra.mrb[0].mxu0 %v1173
      %v1240 = vpop.f32.mrb[0].mxu0
      %v1241 = vadd.f32 0.0, %v1240
      %v1242 = vpop.f32.mrb[0].mxu0
      %1243 = vdwg.mxu0
      %v1244 = vsel %vm361, %v1241, 0.0
      %1245 = vadd.xlane.f32.xlu0 %v1244
      %v1246 = vpop.xlane.xlu0 %1245
      %v1247 = vrot.slane %v1246, 4
      %v1248 = vadd.f32 %v1246, %v1247
      %v1249 = vrot.slane %v1248, 2
      %v1250 = vadd.f32 %v1248, %v1249
      %v1251 = vrot.slane %v1250, 1
      %v1252 = vadd.f32 %v1250, %v1251
      %s1253 = vtos %v1252
      %p1254 = scmp.le.f32.partialorder %s1253, %s535
      %s1255 = scalar_select %p1254, %s1166, %s1169
      %s1256 = scalar_select %p1254, %s1169, %s1167
      %s1257 = sadd.f32 %s1255, %s1256
      %s1258 = smul.f32 %s1257, 0.5
      %v1259 = vstv %s1258
      %vm1260 = vcmp.gt.f32.partialorder %v534, %v1259
      %v1261 = vsel %vm1260, 1, 0
      %v1262 = vcvt.s32.f32 %v1261
      %1263 = vmatprep.subr.mxu0 0.0
      %1264 = vmatpush1.msra.mxu0 1.0
      %1265 = vmatprep.subr.mxu0 0.0
      %1266 = vmatpush1.msra.mxu0 1.0
      %1267 = vmatprep.subr.mxu0 0.0
      %1268 = vmatpush1.msra.mxu0 1.0
      %1269 = vmatprep.subr.mxu0 0.0
      %1270 = vmatpush1.msra.mxu0 1.0
      %1271 = vmatprep.subr.mxu0 0.0
      %1272 = vmatpush1.msra.mxu0 1.0
      %1273 = vmatprep.subr.mxu0 0.0
      %1274 = vmatpush1.msra.mxu0 1.0
      %1275 = vmatprep.subr.mxu0 0.0
      %1276 = vmatpush1.msra.mxu0 1.0
      %1277 = vmatprep.subr.mxu0 0.0
      %1278 = vmatpush1.msra.mxu0 1.0
      %1279 = vmatprep.subr.mxu0 0.0
      %1280 = vmatpush1.msra.mxu0 1.0
      %1281 = vmatprep.subr.mxu0 0.0
      %1282 = vmatpush1.msra.mxu0 1.0
      %1283 = vmatprep.subr.mxu0 0.0
      %1284 = vmatpush1.msra.mxu0 1.0
      %1285 = vmatprep.subr.mxu0 0.0
      %1286 = vmatpush1.msra.mxu0 1.0
      %1287 = vmatprep.subr.mxu0 0.0
      %1288 = vmatpush1.msra.mxu0 1.0
      %1289 = vmatprep.subr.mxu0 0.0
      %1290 = vmatpush1.msra.mxu0 1.0
      %1291 = vmatprep.subr.mxu0 0.0
      %1292 = vmatpush1.msra.mxu0 1.0
      %1293 = vmatprep.subr.mxu0 0.0
      %1294 = vmatpush1.msra.mxu0 1.0
      %1295 = vmatprep.subr.mxu0 0.0
      %1296 = vmatpush1.msra.mxu0 0.0
      %1297 = vmatprep.subr.mxu0 0.0
      %1298 = vmatpush1.msra.mxu0 0.0
      %1299 = vmatprep.subr.mxu0 0.0
      %1300 = vmatpush1.msra.mxu0 0.0
      %1301 = vmatprep.subr.mxu0 0.0
      %1302 = vmatpush1.msra.mxu0 0.0
      %1303 = vmatprep.subr.mxu0 0.0
      %1304 = vmatpush1.msra.mxu0 0.0
      %1305 = vmatprep.subr.mxu0 0.0
      %1306 = vmatpush1.msra.mxu0 0.0
      %1307 = vmatprep.subr.mxu0 0.0
      %1308 = vmatpush1.msra.mxu0 0.0
      %1309 = vmatprep.subr.mxu0 0.0
      %1310 = vmatpush1.msra.mxu0 0.0
      %1311 = vmatprep.subr.mxu0 0.0
      %1312 = vmatpush1.msra.mxu0 0.0
      %1313 = vmatprep.subr.mxu0 0.0
      %1314 = vmatpush1.msra.mxu0 0.0
      %1315 = vmatprep.subr.mxu0 0.0
      %1316 = vmatpush1.msra.mxu0 0.0
      %1317 = vmatprep.subr.mxu0 0.0
      %1318 = vmatpush1.msra.mxu0 0.0
      %1319 = vmatprep.subr.mxu0 0.0
      %1320 = vmatpush1.msra.mxu0 0.0
      %1321 = vmatprep.subr.mxu0 0.0
      %1322 = vmatpush1.msra.mxu0 0.0
      %1323 = vmatprep.subr.mxu0 0.0
      %1324 = vmatpush1.msra.mxu0 0.0
      %1325 = vmatprep.subr.mxu0 0.0
      %1326 = vmatpush1.msra.mxu0 0.0
      %1327 = vmatprep.mubr.f32.mxu0 0.0
      %1328 = vmatmul.mubr.f32.gmra.mrb[0].mxu0 %v1262
      %v1329 = vpop.f32.mrb[0].mxu0
      %v1330 = vadd.f32 0.0, %v1329
      %v1331 = vpop.f32.mrb[0].mxu0
      %1332 = vdwg.mxu0
      %v1333 = vsel %vm361, %v1330, 0.0
      %1334 = vadd.xlane.f32.xlu0 %v1333
      %v1335 = vpop.xlane.xlu0 %1334
      %v1336 = vrot.slane %v1335, 4
      %v1337 = vadd.f32 %v1335, %v1336
      %v1338 = vrot.slane %v1337, 2
      %v1339 = vadd.f32 %v1337, %v1338
      %v1340 = vrot.slane %v1339, 1
      %v1341 = vadd.f32 %v1339, %v1340
      %s1342 = vtos %v1341
      %p1343 = scmp.le.f32.partialorder %s1342, %s535
      %s1344 = scalar_select %p1343, %s1255, %s1258
      %s1345 = scalar_select %p1343, %s1258, %s1256
      %s1346 = sadd.f32 %s1344, %s1345
      %s1347 = smul.f32 %s1346, 0.5
      %v1348 = vstv %s1347
      %vm1349 = vcmp.gt.f32.partialorder %v534, %v1348
      %v1350 = vsel %vm1349, 1, 0
      %v1351 = vcvt.s32.f32 %v1350
      %1352 = vmatprep.subr.mxu0 0.0
      %1353 = vmatpush1.msra.mxu0 1.0
      %1354 = vmatprep.subr.mxu0 0.0
      %1355 = vmatpush1.msra.mxu0 1.0
      %1356 = vmatprep.subr.mxu0 0.0
      %1357 = vmatpush1.msra.mxu0 1.0
      %1358 = vmatprep.subr.mxu0 0.0
      %1359 = vmatpush1.msra.mxu0 1.0
      %1360 = vmatprep.subr.mxu0 0.0
      %1361 = vmatpush1.msra.mxu0 1.0
      %1362 = vmatprep.subr.mxu0 0.0
      %1363 = vmatpush1.msra.mxu0 1.0
      %1364 = vmatprep.subr.mxu0 0.0
      %1365 = vmatpush1.msra.mxu0 1.0
      %1366 = vmatprep.subr.mxu0 0.0
      %1367 = vmatpush1.msra.mxu0 1.0
      %1368 = vmatprep.subr.mxu0 0.0
      %1369 = vmatpush1.msra.mxu0 1.0
      %1370 = vmatprep.subr.mxu0 0.0
      %1371 = vmatpush1.msra.mxu0 1.0
      %1372 = vmatprep.subr.mxu0 0.0
      %1373 = vmatpush1.msra.mxu0 1.0
      %1374 = vmatprep.subr.mxu0 0.0
      %1375 = vmatpush1.msra.mxu0 1.0
      %1376 = vmatprep.subr.mxu0 0.0
      %1377 = vmatpush1.msra.mxu0 1.0
      %1378 = vmatprep.subr.mxu0 0.0
      %1379 = vmatpush1.msra.mxu0 1.0
      %1380 = vmatprep.subr.mxu0 0.0
      %1381 = vmatpush1.msra.mxu0 1.0
      %1382 = vmatprep.subr.mxu0 0.0
      %1383 = vmatpush1.msra.mxu0 1.0
      %1384 = vmatprep.subr.mxu0 0.0
      %1385 = vmatpush1.msra.mxu0 0.0
      %1386 = vmatprep.subr.mxu0 0.0
      %1387 = vmatpush1.msra.mxu0 0.0
      %1388 = vmatprep.subr.mxu0 0.0
      %1389 = vmatpush1.msra.mxu0 0.0
      %1390 = vmatprep.subr.mxu0 0.0
      %1391 = vmatpush1.msra.mxu0 0.0
      %1392 = vmatprep.subr.mxu0 0.0
      %1393 = vmatpush1.msra.mxu0 0.0
      %1394 = vmatprep.subr.mxu0 0.0
      %1395 = vmatpush1.msra.mxu0 0.0
      %1396 = vmatprep.subr.mxu0 0.0
      %1397 = vmatpush1.msra.mxu0 0.0
      %1398 = vmatprep.subr.mxu0 0.0
      %1399 = vmatpush1.msra.mxu0 0.0
      %1400 = vmatprep.subr.mxu0 0.0
      %1401 = vmatpush1.msra.mxu0 0.0
      %1402 = vmatprep.subr.mxu0 0.0
      %1403 = vmatpush1.msra.mxu0 0.0
      %1404 = vmatprep.subr.mxu0 0.0
      %1405 = vmatpush1.msra.mxu0 0.0
      %1406 = vmatprep.subr.mxu0 0.0
      %1407 = vmatpush1.msra.mxu0 0.0
      %1408 = vmatprep.subr.mxu0 0.0
      %1409 = vmatpush1.msra.mxu0 0.0
      %1410 = vmatprep.subr.mxu0 0.0
      %1411 = vmatpush1.msra.mxu0 0.0
      %1412 = vmatprep.subr.mxu0 0.0
      %1413 = vmatpush1.msra.mxu0 0.0
      %1414 = vmatprep.subr.mxu0 0.0
      %1415 = vmatpush1.msra.mxu0 0.0
      %1416 = vmatprep.mubr.f32.mxu0 0.0
      %1417 = vmatmul.mubr.f32.gmra.mrb[0].mxu0 %v1351
      %v1418 = vpop.f32.mrb[0].mxu0
      %v1419 = vadd.f32 0.0, %v1418
      %v1420 = vpop.f32.mrb[0].mxu0
      %1421 = vdwg.mxu0
      %v1422 = vsel %vm361, %v1419, 0.0
      %1423 = vadd.xlane.f32.xlu0 %v1422
      %v1424 = vpop.xlane.xlu0 %1423
      %v1425 = vrot.slane %v1424, 4
      %v1426 = vadd.f32 %v1424, %v1425
      %v1427 = vrot.slane %v1426, 2
      %v1428 = vadd.f32 %v1426, %v1427
      %v1429 = vrot.slane %v1428, 1
      %v1430 = vadd.f32 %v1428, %v1429
      %s1431 = vtos %v1430
      %p1432 = scmp.le.f32.partialorder %s1431, %s535
      %s1433 = scalar_select %p1432, %s1344, %s1347
      %s1434 = scalar_select %p1432, %s1347, %s1345
      %s1435 = sadd.f32 %s1433, %s1434
      %s1436 = smul.f32 %s1435, 0.5
      %v1437 = vstv %s1436
      %vm1438 = vcmp.gt.f32.partialorder %v534, %v1437
      %v1439 = vsel %vm1438, 1, 0
      %v1440 = vcvt.s32.f32 %v1439
      %1441 = vmatprep.subr.mxu0 0.0
      %1442 = vmatpush1.msra.mxu0 1.0
      %1443 = vmatprep.subr.mxu0 0.0
      %1444 = vmatpush1.msra.mxu0 1.0
      %1445 = vmatprep.subr.mxu0 0.0
      %1446 = vmatpush1.msra.mxu0 1.0
      %1447 = vmatprep.subr.mxu0 0.0
      %1448 = vmatpush1.msra.mxu0 1.0
      %1449 = vmatprep.subr.mxu0 0.0
      %1450 = vmatpush1.msra.mxu0 1.0
      %1451 = vmatprep.subr.mxu0 0.0
      %1452 = vmatpush1.msra.mxu0 1.0
      %1453 = vmatprep.subr.mxu0 0.0
      %1454 = vmatpush1.msra.mxu0 1.0
      %1455 = vmatprep.subr.mxu0 0.0
      %1456 = vmatpush1.msra.mxu0 1.0
      %1457 = vmatprep.subr.mxu0 0.0
      %1458 = vmatpush1.msra.mxu0 1.0
      %1459 = vmatprep.subr.mxu0 0.0
      %1460 = vmatpush1.msra.mxu0 1.0
      %1461 = vmatprep.subr.mxu0 0.0
      %1462 = vmatpush1.msra.mxu0 1.0
      %1463 = vmatprep.subr.mxu0 0.0
      %1464 = vmatpush1.msra.mxu0 1.0
      %1465 = vmatprep.subr.mxu0 0.0
      %1466 = vmatpush1.msra.mxu0 1.0
      %1467 = vmatprep.subr.mxu0 0.0
      %1468 = vmatpush1.msra.mxu0 1.0
      %1469 = vmatprep.subr.mxu0 0.0
      %1470 = vmatpush1.msra.mxu0 1.0
      %1471 = vmatprep.subr.mxu0 0.0
      %1472 = vmatpush1.msra.mxu0 1.0
      %1473 = vmatprep.subr.mxu0 0.0
      %1474 = vmatpush1.msra.mxu0 0.0
      %1475 = vmatprep.subr.mxu0 0.0
      %1476 = vmatpush1.msra.mxu0 0.0
      %1477 = vmatprep.subr.mxu0 0.0
      %1478 = vmatpush1.msra.mxu0 0.0
      %1479 = vmatprep.subr.mxu0 0.0
      %1480 = vmatpush1.msra.mxu0 0.0
      %1481 = vmatprep.subr.mxu0 0.0
      %1482 = vmatpush1.msra.mxu0 0.0
      %1483 = vmatprep.subr.mxu0 0.0
      %1484 = vmatpush1.msra.mxu0 0.0
      %1485 = vmatprep.subr.mxu0 0.0
      %1486 = vmatpush1.msra.mxu0 0.0
      %1487 = vmatprep.subr.mxu0 0.0
      %1488 = vmatpush1.msra.mxu0 0.0
      %1489 = vmatprep.subr.mxu0 0.0
      %1490 = vmatpush1.msra.mxu0 0.0
      %1491 = vmatprep.subr.mxu0 0.0
      %1492 = vmatpush1.msra.mxu0 0.0
      %1493 = vmatprep.subr.mxu0 0.0
      %1494 = vmatpush1.msra.mxu0 0.0
      %1495 = vmatprep.subr.mxu0 0.0
      %1496 = vmatpush1.msra.mxu0 0.0
      %1497 = vmatprep.subr.mxu0 0.0
      %1498 = vmatpush1.msra.mxu0 0.0
      %1499 = vmatprep.subr.mxu0 0.0
      %1500 = vmatpush1.msra.mxu0 0.0
      %1501 = vmatprep.subr.mxu0 0.0
      %1502 = vmatpush1.msra.mxu0 0.0
      %1503 = vmatprep.subr.mxu0 0.0
      %1504 = vmatpush1.msra.mxu0 0.0
      %1505 = vmatprep.mubr.f32.mxu0 0.0
      %1506 = vmatmul.mubr.f32.gmra.mrb[0].mxu0 %v1440
      %v1507 = vpop.f32.mrb[0].mxu0
      %v1508 = vadd.f32 0.0, %v1507
      %v1509 = vpop.f32.mrb[0].mxu0
      %1510 = vdwg.mxu0
      %v1511 = vsel %vm361, %v1508, 0.0
      %1512 = vadd.xlane.f32.xlu0 %v1511
      %v1513 = vpop.xlane.xlu0 %1512
      %v1514 = vrot.slane %v1513, 4
      %v1515 = vadd.f32 %v1513, %v1514
      %v1516 = vrot.slane %v1515, 2
      %v1517 = vadd.f32 %v1515, %v1516
      %v1518 = vrot.slane %v1517, 1
      %v1519 = vadd.f32 %v1517, %v1518
      %s1520 = vtos %v1519
      %p1521 = scmp.le.f32.partialorder %s1520, %s535
      %s1522 = scalar_select %p1521, %s1433, %s1436
      %s1523 = scalar_select %p1521, %s1436, %s1434
      %s1524 = sadd.f32 %s1522, %s1523
      %s1525 = smul.f32 %s1524, 0.5
      %v1526 = vstv %s1525
      %vm1527 = vcmp.gt.f32.partialorder %v534, %v1526
      %v1528 = vsel %vm1527, 1, 0
      %v1529 = vcvt.s32.f32 %v1528
      %1530 = vmatprep.subr.mxu0 0.0
      %1531 = vmatpush1.msra.mxu0 1.0
      %1532 = vmatprep.subr.mxu0 0.0
      %1533 = vmatpush1.msra.mxu0 1.0
      %1534 = vmatprep.subr.mxu0 0.0
      %1535 = vmatpush1.msra.mxu0 1.0
      %1536 = vmatprep.subr.mxu0 0.0
      %1537 = vmatpush1.msra.mxu0 1.0
      %1538 = vmatprep.subr.mxu0 0.0
      %1539 = vmatpush1.msra.mxu0 1.0
      %1540 = vmatprep.subr.mxu0 0.0
      %1541 = vmatpush1.msra.mxu0 1.0
      %1542 = vmatprep.subr.mxu0 0.0
      %1543 = vmatpush1.msra.mxu0 1.0
      %1544 = vmatprep.subr.mxu0 0.0
      %1545 = vmatpush1.msra.mxu0 1.0
      %1546 = vmatprep.subr.mxu0 0.0
      %1547 = vmatpush1.msra.mxu0 1.0
      %1548 = vmatprep.subr.mxu0 0.0
      %1549 = vmatpush1.msra.mxu0 1.0
      %1550 = vmatprep.subr.mxu0 0.0
      %1551 = vmatpush1.msra.mxu0 1.0
      %1552 = vmatprep.subr.mxu0 0.0
      %1553 = vmatpush1.msra.mxu0 1.0
      %1554 = vmatprep.subr.mxu0 0.0
      %1555 = vmatpush1.msra.mxu0 1.0
      %1556 = vmatprep.subr.mxu0 0.0
      %1557 = vmatpush1.msra.mxu0 1.0
      %1558 = vmatprep.subr.mxu0 0.0
      %1559 = vmatpush1.msra.mxu0 1.0
      %1560 = vmatprep.subr.mxu0 0.0
      %1561 = vmatpush1.msra.mxu0 1.0
      %1562 = vmatprep.subr.mxu0 0.0
      %1563 = vmatpush1.msra.mxu0 0.0
      %1564 = vmatprep.subr.mxu0 0.0
      %1565 = vmatpush1.msra.mxu0 0.0
      %1566 = vmatprep.subr.mxu0 0.0
      %1567 = vmatpush1.msra.mxu0 0.0
      %1568 = vmatprep.subr.mxu0 0.0
      %1569 = vmatpush1.msra.mxu0 0.0
      %1570 = vmatprep.subr.mxu0 0.0
      %1571 = vmatpush1.msra.mxu0 0.0
      %1572 = vmatprep.subr.mxu0 0.0
      %1573 = vmatpush1.msra.mxu0 0.0
      %1574 = vmatprep.subr.mxu0 0.0
      %1575 = vmatpush1.msra.mxu0 0.0
      %1576 = vmatprep.subr.mxu0 0.0
      %1577 = vmatpush1.msra.mxu0 0.0
      %1578 = vmatprep.subr.mxu0 0.0
      %1579 = vmatpush1.msra.mxu0 0.0
      %1580 = vmatprep.subr.mxu0 0.0
      %1581 = vmatpush1.msra.mxu0 0.0
      %1582 = vmatprep.subr.mxu0 0.0
      %1583 = vmatpush1.msra.mxu0 0.0
      %1584 = vmatprep.subr.mxu0 0.0
      %1585 = vmatpush1.msra.mxu0 0.0
      %1586 = vmatprep.subr.mxu0 0.0
      %1587 = vmatpush1.msra.mxu0 0.0
      %1588 = vmatprep.subr.mxu0 0.0
      %1589 = vmatpush1.msra.mxu0 0.0
      %1590 = vmatprep.subr.mxu0 0.0
      %1591 = vmatpush1.msra.mxu0 0.0
      %1592 = vmatprep.subr.mxu0 0.0
      %1593 = vmatpush1.msra.mxu0 0.0
      %1594 = vmatprep.mubr.f32.mxu0 0.0
      %1595 = vmatmul.mubr.f32.gmra.mrb[0].mxu0 %v1529
      %v1596 = vpop.f32.mrb[0].mxu0
      %v1597 = vadd.f32 0.0, %v1596
      %v1598 = vpop.f32.mrb[0].mxu0
      %1599 = vdwg.mxu0
      %v1600 = vsel %vm361, %v1597, 0.0
      %1601 = vadd.xlane.f32.xlu0 %v1600
      %v1602 = vpop.xlane.xlu0 %1601
      %v1603 = vrot.slane %v1602, 4
      %v1604 = vadd.f32 %v1602, %v1603
      %v1605 = vrot.slane %v1604, 2
      %v1606 = vadd.f32 %v1604, %v1605
      %v1607 = vrot.slane %v1606, 1
      %v1608 = vadd.f32 %v1606, %v1607
      %s1609 = vtos %v1608
      %p1610 = scmp.le.f32.partialorder %s1609, %s535
      %s1611 = scalar_select %p1610, %s1522, %s1525
      %s1612 = scalar_select %p1610, %s1525, %s1523
      %s1613 = sadd.f32 %s1611, %s1612
      %s1614 = smul.f32 %s1613, 0.5
      %v1615 = vstv %s1614
      %vm1616 = vcmp.gt.f32.partialorder %v534, %v1615
      %v1617 = vsel %vm1616, 1, 0
      %v1618 = vcvt.s32.f32 %v1617
      %1619 = vmatprep.subr.mxu0 0.0
      %1620 = vmatpush1.msra.mxu0 1.0
      %1621 = vmatprep.subr.mxu0 0.0
      %1622 = vmatpush1.msra.mxu0 1.0
      %1623 = vmatprep.subr.mxu0 0.0
      %1624 = vmatpush1.msra.mxu0 1.0
      %1625 = vmatprep.subr.mxu0 0.0
      %1626 = vmatpush1.msra.mxu0 1.0
      %1627 = vmatprep.subr.mxu0 0.0
      %1628 = vmatpush1.msra.mxu0 1.0
      %1629 = vmatprep.subr.mxu0 0.0
      %1630 = vmatpush1.msra.mxu0 1.0
      %1631 = vmatprep.subr.mxu0 0.0
      %1632 = vmatpush1.msra.mxu0 1.0
      %1633 = vmatprep.subr.mxu0 0.0
      %1634 = vmatpush1.msra.mxu0 1.0
      %1635 = vmatprep.subr.mxu0 0.0
      %1636 = vmatpush1.msra.mxu0 1.0
      %1637 = vmatprep.subr.mxu0 0.0
      %1638 = vmatpush1.msra.mxu0 1.0
      %1639 = vmatprep.subr.mxu0 0.0
      %1640 = vmatpush1.msra.mxu0 1.0
      %1641 = vmatprep.subr.mxu0 0.0
      %1642 = vmatpush1.msra.mxu0 1.0
      %1643 = vmatprep.subr.mxu0 0.0
      %1644 = vmatpush1.msra.mxu0 1.0
      %1645 = vmatprep.subr.mxu0 0.0
      %1646 = vmatpush1.msra.mxu0 1.0
      %1647 = vmatprep.subr.mxu0 0.0
      %1648 = vmatpush1.msra.mxu0 1.0
      %1649 = vmatprep.subr.mxu0 0.0
      %1650 = vmatpush1.msra.mxu0 1.0
      %1651 = vmatprep.subr.mxu0 0.0
      %1652 = vmatpush1.msra.mxu0 0.0
      %1653 = vmatprep.subr.mxu0 0.0
      %1654 = vmatpush1.msra.mxu0 0.0
      %1655 = vmatprep.subr.mxu0 0.0
      %1656 = vmatpush1.msra.mxu0 0.0
      %1657 = vmatprep.subr.mxu0 0.0
      %1658 = vmatpush1.msra.mxu0 0.0
      %1659 = vmatprep.subr.mxu0 0.0
      %1660 = vmatpush1.msra.mxu0 0.0
      %1661 = vmatprep.subr.mxu0 0.0
      %1662 = vmatpush1.msra.mxu0 0.0
      %1663 = vmatprep.subr.mxu0 0.0
      %1664 = vmatpush1.msra.mxu0 0.0
      %1665 = vmatprep.subr.mxu0 0.0
      %1666 = vmatpush1.msra.mxu0 0.0
      %1667 = vmatprep.subr.mxu0 0.0
      %1668 = vmatpush1.msra.mxu0 0.0
      %1669 = vmatprep.subr.mxu0 0.0
      %1670 = vmatpush1.msra.mxu0 0.0
      %1671 = vmatprep.subr.mxu0 0.0
      %1672 = vmatpush1.msra.mxu0 0.0
      %1673 = vmatprep.subr.mxu0 0.0
      %1674 = vmatpush1.msra.mxu0 0.0
      %1675 = vmatprep.subr.mxu0 0.0
      %1676 = vmatpush1.msra.mxu0 0.0
      %1677 = vmatprep.subr.mxu0 0.0
      %1678 = vmatpush1.msra.mxu0 0.0
      %1679 = vmatprep.subr.mxu0 0.0
      %1680 = vmatpush1.msra.mxu0 0.0
      %1681 = vmatprep.subr.mxu0 0.0
      %1682 = vmatpush1.msra.mxu0 0.0
      %1683 = vmatprep.mubr.f32.mxu0 0.0
      %1684 = vmatmul.mubr.f32.gmra.mrb[0].mxu0 %v1618
      %v1685 = vpop.f32.mrb[0].mxu0
      %v1686 = vadd.f32 0.0, %v1685
      %v1687 = vpop.f32.mrb[0].mxu0
      %1688 = vdwg.mxu0
      %v1689 = vsel %vm361, %v1686, 0.0
      %1690 = vadd.xlane.f32.xlu0 %v1689
      %v1691 = vpop.xlane.xlu0 %1690
      %v1692 = vrot.slane %v1691, 4
      %v1693 = vadd.f32 %v1691, %v1692
      %v1694 = vrot.slane %v1693, 2
      %v1695 = vadd.f32 %v1693, %v1694
      %v1696 = vrot.slane %v1695, 1
      %v1697 = vadd.f32 %v1695, %v1696
      %s1698 = vtos %v1697
      %p1699 = scmp.le.f32.partialorder %s1698, %s535
      %s1700 = scalar_select %p1699, %s1611, %s1614
      %s1701 = scalar_select %p1699, %s1614, %s1612
      %s1702 = sadd.f32 %s1700, %s1701
      %s1703 = smul.f32 %s1702, 0.5
      %v1704 = vstv %s1703
      %vm1705 = vcmp.gt.f32.partialorder %v534, %v1704
      %v1706 = vsel %vm1705, 1, 0
      %v1707 = vcvt.s32.f32 %v1706
      %1708 = vmatprep.subr.mxu0 0.0
      %1709 = vmatpush1.msra.mxu0 1.0
      %1710 = vmatprep.subr.mxu0 0.0
      %1711 = vmatpush1.msra.mxu0 1.0
      %1712 = vmatprep.subr.mxu0 0.0
      %1713 = vmatpush1.msra.mxu0 1.0
      %1714 = vmatprep.subr.mxu0 0.0
      %1715 = vmatpush1.msra.mxu0 1.0
      %1716 = vmatprep.subr.mxu0 0.0
      %1717 = vmatpush1.msra.mxu0 1.0
      %1718 = vmatprep.subr.mxu0 0.0
      %1719 = vmatpush1.msra.mxu0 1.0
      %1720 = vmatprep.subr.mxu0 0.0
      %1721 = vmatpush1.msra.mxu0 1.0
      %1722 = vmatprep.subr.mxu0 0.0
      %1723 = vmatpush1.msra.mxu0 1.0
      %1724 = vmatprep.subr.mxu0 0.0
      %1725 = vmatpush1.msra.mxu0 1.0
      %1726 = vmatprep.subr.mxu0 0.0
      %1727 = vmatpush1.msra.mxu0 1.0
      %1728 = vmatprep.subr.mxu0 0.0
      %1729 = vmatpush1.msra.mxu0 1.0
      %1730 = vmatprep.subr.mxu0 0.0
      %1731 = vmatpush1.msra.mxu0 1.0
      %1732 = vmatprep.subr.mxu0 0.0
      %1733 = vmatpush1.msra.mxu0 1.0
      %1734 = vmatprep.subr.mxu0 0.0
      %1735 = vmatpush1.msra.mxu0 1.0
      %1736 = vmatprep.subr.mxu0 0.0
      %1737 = vmatpush1.msra.mxu0 1.0
      %1738 = vmatprep.subr.mxu0 0.0
      %1739 = vmatpush1.msra.mxu0 1.0
      %1740 = vmatprep.subr.mxu0 0.0
      %1741 = vmatpush1.msra.mxu0 0.0
      %1742 = vmatprep.subr.mxu0 0.0
      %1743 = vmatpush1.msra.mxu0 0.0
      %1744 = vmatprep.subr.mxu0 0.0
      %1745 = vmatpush1.msra.mxu0 0.0
      %1746 = vmatprep.subr.mxu0 0.0
      %1747 = vmatpush1.msra.mxu0 0.0
      %1748 = vmatprep.subr.mxu0 0.0
      %1749 = vmatpush1.msra.mxu0 0.0
      %1750 = vmatprep.subr.mxu0 0.0
      %1751 = vmatpush1.msra.mxu0 0.0
      %1752 = vmatprep.subr.mxu0 0.0
      %1753 = vmatpush1.msra.mxu0 0.0
      %1754 = vmatprep.subr.mxu0 0.0
      %1755 = vmatpush1.msra.mxu0 0.0
      %1756 = vmatprep.subr.mxu0 0.0
      %1757 = vmatpush1.msra.mxu0 0.0
      %1758 = vmatprep.subr.mxu0 0.0
      %1759 = vmatpush1.msra.mxu0 0.0
      %1760 = vmatprep.subr.mxu0 0.0
      %1761 = vmatpush1.msra.mxu0 0.0
      %1762 = vmatprep.subr.mxu0 0.0
      %1763 = vmatpush1.msra.mxu0 0.0
      %1764 = vmatprep.subr.mxu0 0.0
      %1765 = vmatpush1.msra.mxu0 0.0
      %1766 = vmatprep.subr.mxu0 0.0
      %1767 = vmatpush1.msra.mxu0 0.0
      %1768 = vmatprep.subr.mxu0 0.0
      %1769 = vmatpush1.msra.mxu0 0.0
      %1770 = vmatprep.subr.mxu0 0.0
      %1771 = vmatpush1.msra.mxu0 0.0
      %1772 = vmatprep.mubr.f32.mxu0 0.0
      %1773 = vmatmul.mubr.f32.gmra.mrb[0].mxu0 %v1707
      %v1774 = vpop.f32.mrb[0].mxu0
      %v1775 = vadd.f32 0.0, %v1774
      %v1776 = vpop.f32.mrb[0].mxu0
      %1777 = vdwg.mxu0
      %v1778 = vsel %vm361, %v1775, 0.0
      %1779 = vadd.xlane.f32.xlu0 %v1778
      %v1780 = vpop.xlane.xlu0 %1779
      %v1781 = vrot.slane %v1780, 4
      %v1782 = vadd.f32 %v1780, %v1781
      %v1783 = vrot.slane %v1782, 2
      %v1784 = vadd.f32 %v1782, %v1783
      %v1785 = vrot.slane %v1784, 1
      %v1786 = vadd.f32 %v1784, %v1785
      %s1787 = vtos %v1786
      %p1788 = scmp.le.f32.partialorder %s1787, %s535
      %s1789 = scalar_select %p1788, %s1700, %s1703
      %s1790 = scalar_select %p1788, %s1703, %s1701
      %s1791 = sadd.f32 %s1789, %s1790
      %s1792 = smul.f32 %s1791, 0.5
      %v1793 = vstv %s1792
      %vm1794 = vcmp.gt.f32.partialorder %v534, %v1793
      %v1795 = vsel %vm1794, 1, 0
      %v1796 = vcvt.s32.f32 %v1795
      %1797 = vmatprep.subr.mxu0 0.0
      %1798 = vmatpush1.msra.mxu0 1.0
      %1799 = vmatprep.subr.mxu0 0.0
      %1800 = vmatpush1.msra.mxu0 1.0
      %1801 = vmatprep.subr.mxu0 0.0
      %1802 = vmatpush1.msra.mxu0 1.0
      %1803 = vmatprep.subr.mxu0 0.0
      %1804 = vmatpush1.msra.mxu0 1.0
      %1805 = vmatprep.subr.mxu0 0.0
      %1806 = vmatpush1.msra.mxu0 1.0
      %1807 = vmatprep.subr.mxu0 0.0
      %1808 = vmatpush1.msra.mxu0 1.0
      %1809 = vmatprep.subr.mxu0 0.0
      %1810 = vmatpush1.msra.mxu0 1.0
      %1811 = vmatprep.subr.mxu0 0.0
      %1812 = vmatpush1.msra.mxu0 1.0
      %1813 = vmatprep.subr.mxu0 0.0
      %1814 = vmatpush1.msra.mxu0 1.0
      %1815 = vmatprep.subr.mxu0 0.0
      %1816 = vmatpush1.msra.mxu0 1.0
      %1817 = vmatprep.subr.mxu0 0.0
      %1818 = vmatpush1.msra.mxu0 1.0
      %1819 = vmatprep.subr.mxu0 0.0
      %1820 = vmatpush1.msra.mxu0 1.0
      %1821 = vmatprep.subr.mxu0 0.0
      %1822 = vmatpush1.msra.mxu0 1.0
      %1823 = vmatprep.subr.mxu0 0.0
      %1824 = vmatpush1.msra.mxu0 1.0
      %1825 = vmatprep.subr.mxu0 0.0
      %1826 = vmatpush1.msra.mxu0 1.0
      %1827 = vmatprep.subr.mxu0 0.0
      %1828 = vmatpush1.msra.mxu0 1.0
      %1829 = vmatprep.subr.mxu0 0.0
      %1830 = vmatpush1.msra.mxu0 0.0
      %1831 = vmatprep.subr.mxu0 0.0
      %1832 = vmatpush1.msra.mxu0 0.0
      %1833 = vmatprep.subr.mxu0 0.0
      %1834 = vmatpush1.msra.mxu0 0.0
      %1835 = vmatprep.subr.mxu0 0.0
      %1836 = vmatpush1.msra.mxu0 0.0
      %1837 = vmatprep.subr.mxu0 0.0
      %1838 = vmatpush1.msra.mxu0 0.0
      %1839 = vmatprep.subr.mxu0 0.0
      %1840 = vmatpush1.msra.mxu0 0.0
      %1841 = vmatprep.subr.mxu0 0.0
      %1842 = vmatpush1.msra.mxu0 0.0
      %1843 = vmatprep.subr.mxu0 0.0
      %1844 = vmatpush1.msra.mxu0 0.0
      %1845 = vmatprep.subr.mxu0 0.0
      %1846 = vmatpush1.msra.mxu0 0.0
      %1847 = vmatprep.subr.mxu0 0.0
      %1848 = vmatpush1.msra.mxu0 0.0
      %1849 = vmatprep.subr.mxu0 0.0
      %1850 = vmatpush1.msra.mxu0 0.0
      %1851 = vmatprep.subr.mxu0 0.0
      %1852 = vmatpush1.msra.mxu0 0.0
      %1853 = vmatprep.subr.mxu0 0.0
      %1854 = vmatpush1.msra.mxu0 0.0
      %1855 = vmatprep.subr.mxu0 0.0
      %1856 = vmatpush1.msra.mxu0 0.0
      %1857 = vmatprep.subr.mxu0 0.0
      %1858 = vmatpush1.msra.mxu0 0.0
      %1859 = vmatprep.subr.mxu0 0.0
      %1860 = vmatpush1.msra.mxu0 0.0
      %1861 = vmatprep.mubr.f32.mxu0 0.0
      %1862 = vmatmul.mubr.f32.gmra.mrb[0].mxu0 %v1796
      %v1863 = vpop.f32.mrb[0].mxu0
      %v1864 = vadd.f32 0.0, %v1863
      %v1865 = vpop.f32.mrb[0].mxu0
      %1866 = vdwg.mxu0
      %v1867 = vsel %vm361, %v1864, 0.0
      %1868 = vadd.xlane.f32.xlu0 %v1867
      %v1869 = vpop.xlane.xlu0 %1868
      %v1870 = vrot.slane %v1869, 4
      %v1871 = vadd.f32 %v1869, %v1870
      %v1872 = vrot.slane %v1871, 2
      %v1873 = vadd.f32 %v1871, %v1872
      %v1874 = vrot.slane %v1873, 1
      %v1875 = vadd.f32 %v1873, %v1874
      %s1876 = vtos %v1875
      %p1877 = scmp.le.f32.partialorder %s1876, %s535
      %s1878 = scalar_select %p1877, %s1789, %s1792
      %s1879 = scalar_select %p1877, %s1792, %s1790
      %s1880 = sadd.f32 %s1878, %s1879
      %s1881 = smul.f32 %s1880, 0.5
      %v1882 = vstv %s1881
      %vm1883 = vcmp.gt.f32.partialorder %v534, %v1882
      %v1884 = vsel %vm1883, 1, 0
      %v1885 = vcvt.s32.f32 %v1884
      %1886 = vmatprep.subr.mxu0 0.0
      %1887 = vmatpush1.msra.mxu0 1.0
      %1888 = vmatprep.subr.mxu0 0.0
      %1889 = vmatpush1.msra.mxu0 1.0
      %1890 = vmatprep.subr.mxu0 0.0
      %1891 = vmatpush1.msra.mxu0 1.0
      %1892 = vmatprep.subr.mxu0 0.0
      %1893 = vmatpush1.msra.mxu0 1.0
      %1894 = vmatprep.subr.mxu0 0.0
      %1895 = vmatpush1.msra.mxu0 1.0
      %1896 = vmatprep.subr.mxu0 0.0
      %1897 = vmatpush1.msra.mxu0 1.0
      %1898 = vmatprep.subr.mxu0 0.0
      %1899 = vmatpush1.msra.mxu0 1.0
      %1900 = vmatprep.subr.mxu0 0.0
      %1901 = vmatpush1.msra.mxu0 1.0
      %1902 = vmatprep.subr.mxu0 0.0
      %1903 = vmatpush1.msra.mxu0 1.0
      %1904 = vmatprep.subr.mxu0 0.0
      %1905 = vmatpush1.msra.mxu0 1.0
      %1906 = vmatprep.subr.mxu0 0.0
      %1907 = vmatpush1.msra.mxu0 1.0
      %1908 = vmatprep.subr.mxu0 0.0
      %1909 = vmatpush1.msra.mxu0 1.0
      %1910 = vmatprep.subr.mxu0 0.0
      %1911 = vmatpush1.msra.mxu0 1.0
      %1912 = vmatprep.subr.mxu0 0.0
      %1913 = vmatpush1.msra.mxu0 1.0
      %1914 = vmatprep.subr.mxu0 0.0
      %1915 = vmatpush1.msra.mxu0 1.0
      %1916 = vmatprep.subr.mxu0 0.0
      %1917 = vmatpush1.msra.mxu0 1.0
      %1918 = vmatprep.subr.mxu0 0.0
      %1919 = vmatpush1.msra.mxu0 0.0
      %1920 = vmatprep.subr.mxu0 0.0
      %1921 = vmatpush1.msra.mxu0 0.0
      %1922 = vmatprep.subr.mxu0 0.0
      %1923 = vmatpush1.msra.mxu0 0.0
      %1924 = vmatprep.subr.mxu0 0.0
      %1925 = vmatpush1.msra.mxu0 0.0
      %1926 = vmatprep.subr.mxu0 0.0
      %1927 = vmatpush1.msra.mxu0 0.0
      %1928 = vmatprep.subr.mxu0 0.0
      %1929 = vmatpush1.msra.mxu0 0.0
      %1930 = vmatprep.subr.mxu0 0.0
      %1931 = vmatpush1.msra.mxu0 0.0
      %1932 = vmatprep.subr.mxu0 0.0
      %1933 = vmatpush1.msra.mxu0 0.0
      %1934 = vmatprep.subr.mxu0 0.0
      %1935 = vmatpush1.msra.mxu0 0.0
      %1936 = vmatprep.subr.mxu0 0.0
      %1937 = vmatpush1.msra.mxu0 0.0
      %1938 = vmatprep.subr.mxu0 0.0
      %1939 = vmatpush1.msra.mxu0 0.0
      %1940 = vmatprep.subr.mxu0 0.0
      %1941 = vmatpush1.msra.mxu0 0.0
      %1942 = vmatprep.subr.mxu0 0.0
      %1943 = vmatpush1.msra.mxu0 0.0
      %1944 = vmatprep.subr.mxu0 0.0
      %1945 = vmatpush1.msra.mxu0 0.0
      %1946 = vmatprep.subr.mxu0 0.0
      %1947 = vmatpush1.msra.mxu0 0.0
      %1948 = vmatprep.subr.mxu0 0.0
      %1949 = vmatpush1.msra.mxu0 0.0
      %1950 = vmatprep.mubr.f32.mxu0 0.0
      %1951 = vmatmul.mubr.f32.gmra.mrb[0].mxu0 %v1885
      %v1952 = vpop.f32.mrb[0].mxu0
      %v1953 = vadd.f32 0.0, %v1952
      %v1954 = vpop.f32.mrb[0].mxu0
      %1955 = vdwg.mxu0
      %v1956 = vsel %vm361, %v1953, 0.0
      %1957 = vadd.xlane.f32.xlu0 %v1956
      %v1958 = vpop.xlane.xlu0 %1957
      %v1959 = vrot.slane %v1958, 4
      %v1960 = vadd.f32 %v1958, %v1959
      %v1961 = vrot.slane %v1960, 2
      %v1962 = vadd.f32 %v1960, %v1961
      %v1963 = vrot.slane %v1962, 1
      %v1964 = vadd.f32 %v1962, %v1963
      %s1965 = vtos %v1964
      %p1966 = scmp.le.f32.partialorder %s1965, %s535
      %s1967 = scalar_select %p1966, %s1878, %s1881
      %s1968 = scalar_select %p1966, %s1881, %s1879
      %s1969 = sadd.f32 %s1967, %s1968
      %s1970 = smul.f32 %s1969, 0.5
      %v1971 = vstv %s1970
      %vm1972 = vcmp.gt.f32.partialorder %v534, %v1971
      %v1973 = vsel %vm1972, 1, 0
      %v1974 = vcvt.s32.f32 %v1973
      %1975 = vmatprep.subr.mxu0 0.0
      %1976 = vmatpush1.msra.mxu0 1.0
      %1977 = vmatprep.subr.mxu0 0.0
      %1978 = vmatpush1.msra.mxu0 1.0
      %1979 = vmatprep.subr.mxu0 0.0
      %1980 = vmatpush1.msra.mxu0 1.0
      %1981 = vmatprep.subr.mxu0 0.0
      %1982 = vmatpush1.msra.mxu0 1.0
      %1983 = vmatprep.subr.mxu0 0.0
      %1984 = vmatpush1.msra.mxu0 1.0
      %1985 = vmatprep.subr.mxu0 0.0
      %1986 = vmatpush1.msra.mxu0 1.0
      %1987 = vmatprep.subr.mxu0 0.0
      %1988 = vmatpush1.msra.mxu0 1.0
      %1989 = vmatprep.subr.mxu0 0.0
      %1990 = vmatpush1.msra.mxu0 1.0
      %1991 = vmatprep.subr.mxu0 0.0
      %1992 = vmatpush1.msra.mxu0 1.0
      %1993 = vmatprep.subr.mxu0 0.0
      %1994 = vmatpush1.msra.mxu0 1.0
      %1995 = vmatprep.subr.mxu0 0.0
      %1996 = vmatpush1.msra.mxu0 1.0
      %1997 = vmatprep.subr.mxu0 0.0
      %1998 = vmatpush1.msra.mxu0 1.0
      %1999 = vmatprep.subr.mxu0 0.0
      %2000 = vmatpush1.msra.mxu0 1.0
      %2001 = vmatprep.subr.mxu0 0.0
      %2002 = vmatpush1.msra.mxu0 1.0
      %2003 = vmatprep.subr.mxu0 0.0
      %2004 = vmatpush1.msra.mxu0 1.0
      %2005 = vmatprep.subr.mxu0 0.0
      %2006 = vmatpush1.msra.mxu0 1.0
      %2007 = vmatprep.subr.mxu0 0.0
      %2008 = vmatpush1.msra.mxu0 0.0
      %2009 = vmatprep.subr.mxu0 0.0
      %2010 = vmatpush1.msra.mxu0 0.0
      %2011 = vmatprep.subr.mxu0 0.0
      %2012 = vmatpush1.msra.mxu0 0.0
      %2013 = vmatprep.subr.mxu0 0.0
      %2014 = vmatpush1.msra.mxu0 0.0
      %2015 = vmatprep.subr.mxu0 0.0
      %2016 = vmatpush1.msra.mxu0 0.0
      %2017 = vmatprep.subr.mxu0 0.0
      %2018 = vmatpush1.msra.mxu0 0.0
      %2019 = vmatprep.subr.mxu0 0.0
      %2020 = vmatpush1.msra.mxu0 0.0
      %2021 = vmatprep.subr.mxu0 0.0
      %2022 = vmatpush1.msra.mxu0 0.0
      %2023 = vmatprep.subr.mxu0 0.0
      %2024 = vmatpush1.msra.mxu0 0.0
      %2025 = vmatprep.subr.mxu0 0.0
      %2026 = vmatpush1.msra.mxu0 0.0
      %2027 = vmatprep.subr.mxu0 0.0
      %2028 = vmatpush1.msra.mxu0 0.0
      %2029 = vmatprep.subr.mxu0 0.0
      %2030 = vmatpush1.msra.mxu0 0.0
      %2031 = vmatprep.subr.mxu0 0.0
      %2032 = vmatpush1.msra.mxu0 0.0
      %2033 = vmatprep.subr.mxu0 0.0
      %2034 = vmatpush1.msra.mxu0 0.0
      %2035 = vmatprep.subr.mxu0 0.0
      %2036 = vmatpush1.msra.mxu0 0.0
      %2037 = vmatprep.subr.mxu0 0.0
      %2038 = vmatpush1.msra.mxu0 0.0
      %2039 = vmatprep.mubr.f32.mxu0 0.0
      %2040 = vmatmul.mubr.f32.gmra.mrb[0].mxu0 %v1974
      %v2041 = vpop.f32.mrb[0].mxu0
      %v2042 = vadd.f32 0.0, %v2041
      %v2043 = vpop.f32.mrb[0].mxu0
      %2044 = vdwg.mxu0
      %v2045 = vsel %vm361, %v2042, 0.0
      %2046 = vadd.xlane.f32.xlu0 %v2045
      %v2047 = vpop.xlane.xlu0 %2046
      %v2048 = vrot.slane %v2047, 4
      %v2049 = vadd.f32 %v2047, %v2048
      %v2050 = vrot.slane %v2049, 2
      %v2051 = vadd.f32 %v2049, %v2050
      %v2052 = vrot.slane %v2051, 1
      %v2053 = vadd.f32 %v2051, %v2052
      %s2054 = vtos %v2053
      %p2055 = scmp.le.f32.partialorder %s2054, %s535
      %s2056 = scalar_select %p2055, %s1967, %s1970
      %s2057 = scalar_select %p2055, %s1970, %s1968
      %s2058 = sadd.f32 %s2056, %s2057
      %s2059 = smul.f32 %s2058, 0.5
      %v2060 = vstv %s2059
      %vm2061 = vcmp.gt.f32.partialorder %v534, %v2060
      %v2062 = vsel %vm2061, 1, 0
      %v2063 = vcvt.s32.f32 %v2062
      %2064 = vmatprep.subr.mxu0 0.0
      %2065 = vmatpush1.msra.mxu0 1.0
      %2066 = vmatprep.subr.mxu0 0.0
      %2067 = vmatpush1.msra.mxu0 1.0
      %2068 = vmatprep.subr.mxu0 0.0
      %2069 = vmatpush1.msra.mxu0 1.0
      %2070 = vmatprep.subr.mxu0 0.0
      %2071 = vmatpush1.msra.mxu0 1.0
      %2072 = vmatprep.subr.mxu0 0.0
      %2073 = vmatpush1.msra.mxu0 1.0
      %2074 = vmatprep.subr.mxu0 0.0
      %2075 = vmatpush1.msra.mxu0 1.0
      %2076 = vmatprep.subr.mxu0 0.0
      %2077 = vmatpush1.msra.mxu0 1.0
      %2078 = vmatprep.subr.mxu0 0.0
      %2079 = vmatpush1.msra.mxu0 1.0
      %2080 = vmatprep.subr.mxu0 0.0
      %2081 = vmatpush1.msra.mxu0 1.0
      %2082 = vmatprep.subr.mxu0 0.0
      %2083 = vmatpush1.msra.mxu0 1.0
      %2084 = vmatprep.subr.mxu0 0.0
      %2085 = vmatpush1.msra.mxu0 1.0
      %2086 = vmatprep.subr.mxu0 0.0
      %2087 = vmatpush1.msra.mxu0 1.0
      %2088 = vmatprep.subr.mxu0 0.0
      %2089 = vmatpush1.msra.mxu0 1.0
      %2090 = vmatprep.subr.mxu0 0.0
      %2091 = vmatpush1.msra.mxu0 1.0
      %2092 = vmatprep.subr.mxu0 0.0
      %2093 = vmatpush1.msra.mxu0 1.0
      %2094 = vmatprep.subr.mxu0 0.0
      %2095 = vmatpush1.msra.mxu0 1.0
      %2096 = vmatprep.subr.mxu0 0.0
      %2097 = vmatpush1.msra.mxu0 0.0
      %2098 = vmatprep.subr.mxu0 0.0
      %2099 = vmatpush1.msra.mxu0 0.0
      %2100 = vmatprep.subr.mxu0 0.0
      %2101 = vmatpush1.msra.mxu0 0.0
      %2102 = vmatprep.subr.mxu0 0.0
      %2103 = vmatpush1.msra.mxu0 0.0
      %2104 = vmatprep.subr.mxu0 0.0
      %2105 = vmatpush1.msra.mxu0 0.0
      %2106 = vmatprep.subr.mxu0 0.0
      %2107 = vmatpush1.msra.mxu0 0.0
      %2108 = vmatprep.subr.mxu0 0.0
      %2109 = vmatpush1.msra.mxu0 0.0
      %2110 = vmatprep.subr.mxu0 0.0
      %2111 = vmatpush1.msra.mxu0 0.0
      %2112 = vmatprep.subr.mxu0 0.0
      %2113 = vmatpush1.msra.mxu0 0.0
      %2114 = vmatprep.subr.mxu0 0.0
      %2115 = vmatpush1.msra.mxu0 0.0
      %2116 = vmatprep.subr.mxu0 0.0
      %2117 = vmatpush1.msra.mxu0 0.0
      %2118 = vmatprep.subr.mxu0 0.0
      %2119 = vmatpush1.msra.mxu0 0.0
      %2120 = vmatprep.subr.mxu0 0.0
      %2121 = vmatpush1.msra.mxu0 0.0
      %2122 = vmatprep.subr.mxu0 0.0
      %2123 = vmatpush1.msra.mxu0 0.0
      %2124 = vmatprep.subr.mxu0 0.0
      %2125 = vmatpush1.msra.mxu0 0.0
      %2126 = vmatprep.subr.mxu0 0.0
      %2127 = vmatpush1.msra.mxu0 0.0
      %2128 = vmatprep.mubr.f32.mxu0 0.0
      %2129 = vmatmul.mubr.f32.gmra.mrb[0].mxu0 %v2063
      %v2130 = vpop.f32.mrb[0].mxu0
      %v2131 = vadd.f32 0.0, %v2130
      %v2132 = vpop.f32.mrb[0].mxu0
      %2133 = vdwg.mxu0
      %v2134 = vsel %vm361, %v2131, 0.0
      %2135 = vadd.xlane.f32.xlu0 %v2134
      %v2136 = vpop.xlane.xlu0 %2135
      %v2137 = vrot.slane %v2136, 4
      %v2138 = vadd.f32 %v2136, %v2137
      %v2139 = vrot.slane %v2138, 2
      %v2140 = vadd.f32 %v2138, %v2139
      %v2141 = vrot.slane %v2140, 1
      %v2142 = vadd.f32 %v2140, %v2141
      %s2143 = vtos %v2142
      %p2144 = scmp.le.f32.partialorder %s2143, %s535
      %s2145 = scalar_select %p2144, %s2056, %s2059
      %s2146 = scalar_select %p2144, %s2059, %s2057
      %s2147 = sadd.f32 %s2145, %s2146
      %s2148 = smul.f32 %s2147, 0.5
      %v2149 = vstv %s2148
      %vm2150 = vcmp.gt.f32.partialorder %v534, %v2149
      %v2151 = vsel %vm2150, 1, 0
      %v2152 = vcvt.s32.f32 %v2151
      %2153 = vmatprep.subr.mxu0 0.0
      %2154 = vmatpush1.msra.mxu0 1.0
      %2155 = vmatprep.subr.mxu0 0.0
      %2156 = vmatpush1.msra.mxu0 1.0
      %2157 = vmatprep.subr.mxu0 0.0
      %2158 = vmatpush1.msra.mxu0 1.0
      %2159 = vmatprep.subr.mxu0 0.0
      %2160 = vmatpush1.msra.mxu0 1.0
      %2161 = vmatprep.subr.mxu0 0.0
      %2162 = vmatpush1.msra.mxu0 1.0
      %2163 = vmatprep.subr.mxu0 0.0
      %2164 = vmatpush1.msra.mxu0 1.0
      %2165 = vmatprep.subr.mxu0 0.0
      %2166 = vmatpush1.msra.mxu0 1.0
      %2167 = vmatprep.subr.mxu0 0.0
      %2168 = vmatpush1.msra.mxu0 1.0
      %2169 = vmatprep.subr.mxu0 0.0
      %2170 = vmatpush1.msra.mxu0 1.0
      %2171 = vmatprep.subr.mxu0 0.0
      %2172 = vmatpush1.msra.mxu0 1.0
      %2173 = vmatprep.subr.mxu0 0.0
      %2174 = vmatpush1.msra.mxu0 1.0
      %2175 = vmatprep.subr.mxu0 0.0
      %2176 = vmatpush1.msra.mxu0 1.0
      %2177 = vmatprep.subr.mxu0 0.0
      %2178 = vmatpush1.msra.mxu0 1.0
      %2179 = vmatprep.subr.mxu0 0.0
      %2180 = vmatpush1.msra.mxu0 1.0
      %2181 = vmatprep.subr.mxu0 0.0
      %2182 = vmatpush1.msra.mxu0 1.0
      %2183 = vmatprep.subr.mxu0 0.0
      %2184 = vmatpush1.msra.mxu0 1.0
      %2185 = vmatprep.subr.mxu0 0.0
      %2186 = vmatpush1.msra.mxu0 0.0
      %2187 = vmatprep.subr.mxu0 0.0
      %2188 = vmatpush1.msra.mxu0 0.0
      %2189 = vmatprep.subr.mxu0 0.0
      %2190 = vmatpush1.msra.mxu0 0.0
      %2191 = vmatprep.subr.mxu0 0.0
      %2192 = vmatpush1.msra.mxu0 0.0
      %2193 = vmatprep.subr.mxu0 0.0
      %2194 = vmatpush1.msra.mxu0 0.0
      %2195 = vmatprep.subr.mxu0 0.0
      %2196 = vmatpush1.msra.mxu0 0.0
      %2197 = vmatprep.subr.mxu0 0.0
      %2198 = vmatpush1.msra.mxu0 0.0
      %2199 = vmatprep.subr.mxu0 0.0
      %2200 = vmatpush1.msra.mxu0 0.0
      %2201 = vmatprep.subr.mxu0 0.0
      %2202 = vmatpush1.msra.mxu0 0.0
      %2203 = vmatprep.subr.mxu0 0.0
      %2204 = vmatpush1.msra.mxu0 0.0
      %2205 = vmatprep.subr.mxu0 0.0
      %2206 = vmatpush1.msra.mxu0 0.0
      %2207 = vmatprep.subr.mxu0 0.0
      %2208 = vmatpush1.msra.mxu0 0.0
      %2209 = vmatprep.subr.mxu0 0.0
      %2210 = vmatpush1.msra.mxu0 0.0
      %2211 = vmatprep.subr.mxu0 0.0
      %2212 = vmatpush1.msra.mxu0 0.0
      %2213 = vmatprep.subr.mxu0 0.0
      %2214 = vmatpush1.msra.mxu0 0.0
      %2215 = vmatprep.subr.mxu0 0.0
      %2216 = vmatpush1.msra.mxu0 0.0
      %2217 = vmatprep.mubr.f32.mxu0 0.0
      %2218 = vmatmul.mubr.f32.gmra.mrb[0].mxu0 %v2152
      %v2219 = vpop.f32.mrb[0].mxu0
      %v2220 = vadd.f32 0.0, %v2219
      %v2221 = vpop.f32.mrb[0].mxu0
      %2222 = vdwg.mxu0
      %v2223 = vsel %vm361, %v2220, 0.0
      %2224 = vadd.xlane.f32.xlu0 %v2223
      %v2225 = vpop.xlane.xlu0 %2224
      %v2226 = vrot.slane %v2225, 4
      %v2227 = vadd.f32 %v2225, %v2226
      %v2228 = vrot.slane %v2227, 2
      %v2229 = vadd.f32 %v2227, %v2228
      %v2230 = vrot.slane %v2229, 1
      %v2231 = vadd.f32 %v2229, %v2230
      %s2232 = vtos %v2231
      %p2233 = scmp.le.f32.partialorder %s2232, %s535
      %s2234 = scalar_select %p2233, %s2145, %s2148
      %s2235 = scalar_select %p2233, %s2148, %s2146
      %s2236 = sadd.f32 %s2234, %s2235
      %s2237 = smul.f32 %s2236, 0.5
      %v2238 = vstv %s2237
      %vm2239 = vcmp.gt.f32.partialorder %v534, %v2238
      %v2240 = vsel %vm2239, 1, 0
      %v2241 = vcvt.s32.f32 %v2240
      %2242 = vmatprep.subr.mxu0 0.0
      %2243 = vmatpush1.msra.mxu0 1.0
      %2244 = vmatprep.subr.mxu0 0.0
      %2245 = vmatpush1.msra.mxu0 1.0
      %2246 = vmatprep.subr.mxu0 0.0
      %2247 = vmatpush1.msra.mxu0 1.0
      %2248 = vmatprep.subr.mxu0 0.0
      %2249 = vmatpush1.msra.mxu0 1.0
      %2250 = vmatprep.subr.mxu0 0.0
      %2251 = vmatpush1.msra.mxu0 1.0
      %2252 = vmatprep.subr.mxu0 0.0
      %2253 = vmatpush1.msra.mxu0 1.0
      %2254 = vmatprep.subr.mxu0 0.0
      %2255 = vmatpush1.msra.mxu0 1.0
      %2256 = vmatprep.subr.mxu0 0.0
      %2257 = vmatpush1.msra.mxu0 1.0
      %2258 = vmatprep.subr.mxu0 0.0
      %2259 = vmatpush1.msra.mxu0 1.0
      %2260 = vmatprep.subr.mxu0 0.0
      %2261 = vmatpush1.msra.mxu0 1.0
      %2262 = vmatprep.subr.mxu0 0.0
      %2263 = vmatpush1.msra.mxu0 1.0
      %2264 = vmatprep.subr.mxu0 0.0
      %2265 = vmatpush1.msra.mxu0 1.0
      %2266 = vmatprep.subr.mxu0 0.0
      %2267 = vmatpush1.msra.mxu0 1.0
      %2268 = vmatprep.subr.mxu0 0.0
      %2269 = vmatpush1.msra.mxu0 1.0
      %2270 = vmatprep.subr.mxu0 0.0
      %2271 = vmatpush1.msra.mxu0 1.0
      %2272 = vmatprep.subr.mxu0 0.0
      %2273 = vmatpush1.msra.mxu0 1.0
      %2274 = vmatprep.subr.mxu0 0.0
      %2275 = vmatpush1.msra.mxu0 0.0
      %2276 = vmatprep.subr.mxu0 0.0
      %2277 = vmatpush1.msra.mxu0 0.0
      %2278 = vmatprep.subr.mxu0 0.0
      %2279 = vmatpush1.msra.mxu0 0.0
      %2280 = vmatprep.subr.mxu0 0.0
      %2281 = vmatpush1.msra.mxu0 0.0
      %2282 = vmatprep.subr.mxu0 0.0
      %2283 = vmatpush1.msra.mxu0 0.0
      %2284 = vmatprep.subr.mxu0 0.0
      %2285 = vmatpush1.msra.mxu0 0.0
      %2286 = vmatprep.subr.mxu0 0.0
      %2287 = vmatpush1.msra.mxu0 0.0
      %2288 = vmatprep.subr.mxu0 0.0
      %2289 = vmatpush1.msra.mxu0 0.0
      %2290 = vmatprep.subr.mxu0 0.0
      %2291 = vmatpush1.msra.mxu0 0.0
      %2292 = vmatprep.subr.mxu0 0.0
      %2293 = vmatpush1.msra.mxu0 0.0
      %2294 = vmatprep.subr.mxu0 0.0
      %2295 = vmatpush1.msra.mxu0 0.0
      %2296 = vmatprep.subr.mxu0 0.0
      %2297 = vmatpush1.msra.mxu0 0.0
      %2298 = vmatprep.subr.mxu0 0.0
      %2299 = vmatpush1.msra.mxu0 0.0
      %2300 = vmatprep.subr.mxu0 0.0
      %2301 = vmatpush1.msra.mxu0 0.0
      %2302 = vmatprep.subr.mxu0 0.0
      %2303 = vmatpush1.msra.mxu0 0.0
      %2304 = vmatprep.subr.mxu0 0.0
      %2305 = vmatpush1.msra.mxu0 0.0
      %2306 = vmatprep.mubr.f32.mxu0 0.0
      %2307 = vmatmul.mubr.f32.gmra.mrb[0].mxu0 %v2241
      %v2308 = vpop.f32.mrb[0].mxu0
      %v2309 = vadd.f32 0.0, %v2308
      %v2310 = vpop.f32.mrb[0].mxu0
      %2311 = vdwg.mxu0
      %v2312 = vsel %vm361, %v2309, 0.0
      %2313 = vadd.xlane.f32.xlu0 %v2312
      %v2314 = vpop.xlane.xlu0 %2313
      %v2315 = vrot.slane %v2314, 4
      %v2316 = vadd.f32 %v2314, %v2315
      %v2317 = vrot.slane %v2316, 2
      %v2318 = vadd.f32 %v2316, %v2317
      %v2319 = vrot.slane %v2318, 1
      %v2320 = vadd.f32 %v2318, %v2319
      %s2321 = vtos %v2320
      %p2322 = scmp.le.f32.partialorder %s2321, %s535
      %s2323 = scalar_select %p2322, %s2237, %s2235
      %vm2324 = vcmp.gt.f32.partialorder %v534, 0.0
      %v2325 = vsel %vm2324, 1, 0
      %v2326 = vcvt.s32.f32 %v2325
      %2327 = vmatprep.subr.mxu0 0.0
      %2328 = vmatpush1.msra.mxu0 1.0
      %2329 = vmatprep.subr.mxu0 0.0
      %2330 = vmatpush1.msra.mxu0 1.0
      %2331 = vmatprep.subr.mxu0 0.0
      %2332 = vmatpush1.msra.mxu0 1.0
      %2333 = vmatprep.subr.mxu0 0.0
      %2334 = vmatpush1.msra.mxu0 1.0
      %2335 = vmatprep.subr.mxu0 0.0
      %2336 = vmatpush1.msra.mxu0 1.0
      %2337 = vmatprep.subr.mxu0 0.0
      %2338 = vmatpush1.msra.mxu0 1.0
      %2339 = vmatprep.subr.mxu0 0.0
      %2340 = vmatpush1.msra.mxu0 1.0
      %2341 = vmatprep.subr.mxu0 0.0
      %2342 = vmatpush1.msra.mxu0 1.0
      %2343 = vmatprep.subr.mxu0 0.0
      %2344 = vmatpush1.msra.mxu0 1.0
      %2345 = vmatprep.subr.mxu0 0.0
      %2346 = vmatpush1.msra.mxu0 1.0
      %2347 = vmatprep.subr.mxu0 0.0
      %2348 = vmatpush1.msra.mxu0 1.0
      %2349 = vmatprep.subr.mxu0 0.0
      %2350 = vmatpush1.msra.mxu0 1.0
      %2351 = vmatprep.subr.mxu0 0.0
      %2352 = vmatpush1.msra.mxu0 1.0
      %2353 = vmatprep.subr.mxu0 0.0
      %2354 = vmatpush1.msra.mxu0 1.0
      %2355 = vmatprep.subr.mxu0 0.0
      %2356 = vmatpush1.msra.mxu0 1.0
      %2357 = vmatprep.subr.mxu0 0.0
      %2358 = vmatpush1.msra.mxu0 1.0
      %2359 = vmatprep.subr.mxu0 0.0
      %2360 = vmatpush1.msra.mxu0 0.0
      %2361 = vmatprep.subr.mxu0 0.0
      %2362 = vmatpush1.msra.mxu0 0.0
      %2363 = vmatprep.subr.mxu0 0.0
      %2364 = vmatpush1.msra.mxu0 0.0
      %2365 = vmatprep.subr.mxu0 0.0
      %2366 = vmatpush1.msra.mxu0 0.0
      %2367 = vmatprep.subr.mxu0 0.0
      %2368 = vmatpush1.msra.mxu0 0.0
      %2369 = vmatprep.subr.mxu0 0.0
      %2370 = vmatpush1.msra.mxu0 0.0
      %2371 = vmatprep.subr.mxu0 0.0
      %2372 = vmatpush1.msra.mxu0 0.0
      %2373 = vmatprep.subr.mxu0 0.0
      %2374 = vmatpush1.msra.mxu0 0.0
      %2375 = vmatprep.subr.mxu0 0.0
      %2376 = vmatpush1.msra.mxu0 0.0
      %2377 = vmatprep.subr.mxu0 0.0
      %2378 = vmatpush1.msra.mxu0 0.0
      %2379 = vmatprep.subr.mxu0 0.0
      %2380 = vmatpush1.msra.mxu0 0.0
      %2381 = vmatprep.subr.mxu0 0.0
      %2382 = vmatpush1.msra.mxu0 0.0
      %2383 = vmatprep.subr.mxu0 0.0
      %2384 = vmatpush1.msra.mxu0 0.0
      %2385 = vmatprep.subr.mxu0 0.0
      %2386 = vmatpush1.msra.mxu0 0.0
      %2387 = vmatprep.subr.mxu0 0.0
      %2388 = vmatpush1.msra.mxu0 0.0
      %2389 = vmatprep.subr.mxu0 0.0
      %2390 = vmatpush1.msra.mxu0 0.0
      %2391 = vmatprep.mubr.f32.mxu0 0.0
      %2392 = vmatmul.mubr.f32.gmra.mrb[0].mxu0 %v2326
      %v2393 = vpop.f32.mrb[0].mxu0
      %v2394 = vadd.f32 0.0, %v2393
      %v2395 = vpop.f32.mrb[0].mxu0
      %2396 = vdwg.mxu0
      %v2397 = vsel %vm361, %v2394, 0.0
      %2398 = vadd.xlane.f32.xlu0 %v2397
      %v2399 = vpop.xlane.xlu0 %2398
      %v2400 = vrot.slane %v2399, 4
      %v2401 = vadd.f32 %v2399, %v2400
      %v2402 = vrot.slane %v2401, 2
      %v2403 = vadd.f32 %v2401, %v2402
      %v2404 = vrot.slane %v2403, 1
      %v2405 = vadd.f32 %v2403, %v2404
      %s2406 = vtos %v2405
      %p2407 = scmp.le.f32.partialorder %s2406, %s535
      %s2408 = scalar_select %p2407, 0.0, %s2323
      %v2409 = vstv %s2408
      %vm2410 = vcmp.gt.f32.partialorder %v534, %v2409
      %v2411 = vsel %vm2410, 1, 0
      %v2412 = vcvt.s32.f32 %v2411
      %v2413 = vmul.f32 %v533, %v290
      %2414 = vmatprep.subr.mxu0 0.0
      %2415 = vmatpush1.msra.mxu0 1.0
      %2416 = vmatprep.subr.mxu0 0.0
      %2417 = vmatpush1.msra.mxu0 1.0
      %2418 = vmatprep.subr.mxu0 0.0
      %2419 = vmatpush1.msra.mxu0 1.0
      %2420 = vmatprep.subr.mxu0 0.0
      %2421 = vmatpush1.msra.mxu0 1.0
      %2422 = vmatprep.subr.mxu0 0.0
      %2423 = vmatpush1.msra.mxu0 1.0
      %2424 = vmatprep.subr.mxu0 0.0
      %2425 = vmatpush1.msra.mxu0 1.0
      %2426 = vmatprep.subr.mxu0 0.0
      %2427 = vmatpush1.msra.mxu0 1.0
      %2428 = vmatprep.subr.mxu0 0.0
      %2429 = vmatpush1.msra.mxu0 1.0
      %2430 = vmatprep.subr.mxu0 0.0
      %2431 = vmatpush1.msra.mxu0 1.0
      %2432 = vmatprep.subr.mxu0 0.0
      %2433 = vmatpush1.msra.mxu0 1.0
      %2434 = vmatprep.subr.mxu0 0.0
      %2435 = vmatpush1.msra.mxu0 1.0
      %2436 = vmatprep.subr.mxu0 0.0
      %2437 = vmatpush1.msra.mxu0 1.0
      %2438 = vmatprep.subr.mxu0 0.0
      %2439 = vmatpush1.msra.mxu0 1.0
      %2440 = vmatprep.subr.mxu0 0.0
      %2441 = vmatpush1.msra.mxu0 1.0
      %2442 = vmatprep.subr.mxu0 0.0
      %2443 = vmatpush1.msra.mxu0 1.0
      %2444 = vmatprep.subr.mxu0 0.0
      %2445 = vmatpush1.msra.mxu0 1.0
      %2446 = vmatprep.subr.mxu0 0.0
      %2447 = vmatpush1.msra.mxu0 0.0
      %2448 = vmatprep.subr.mxu0 0.0
      %2449 = vmatpush1.msra.mxu0 0.0
      %2450 = vmatprep.subr.mxu0 0.0
      %2451 = vmatpush1.msra.mxu0 0.0
      %2452 = vmatprep.subr.mxu0 0.0
      %2453 = vmatpush1.msra.mxu0 0.0
      %2454 = vmatprep.subr.mxu0 0.0
      %2455 = vmatpush1.msra.mxu0 0.0
      %2456 = vmatprep.subr.mxu0 0.0
      %2457 = vmatpush1.msra.mxu0 0.0
      %2458 = vmatprep.subr.mxu0 0.0
      %2459 = vmatpush1.msra.mxu0 0.0
      %2460 = vmatprep.subr.mxu0 0.0
      %2461 = vmatpush1.msra.mxu0 0.0
      %2462 = vmatprep.subr.mxu0 0.0
      %2463 = vmatpush1.msra.mxu0 0.0
      %2464 = vmatprep.subr.mxu0 0.0
      %2465 = vmatpush1.msra.mxu0 0.0
      %2466 = vmatprep.subr.mxu0 0.0
      %2467 = vmatpush1.msra.mxu0 0.0
      %2468 = vmatprep.subr.mxu0 0.0
      %2469 = vmatpush1.msra.mxu0 0.0
      %2470 = vmatprep.subr.mxu0 0.0
      %2471 = vmatpush1.msra.mxu0 0.0
      %2472 = vmatprep.subr.mxu0 0.0
      %2473 = vmatpush1.msra.mxu0 0.0
      %2474 = vmatprep.subr.mxu0 0.0
      %2475 = vmatpush1.msra.mxu0 0.0
      %2476 = vmatprep.subr.mxu0 0.0
      %2477 = vmatpush1.msra.mxu0 0.0
      %2478 = vmatprep.mubr.f32.mxu0 0.0
      %2479 = vmatmul.mubr.f32.gmra.mrb[0].mxu0 %v2413
      %v2480 = vpop.f32.mrb[0].mxu0
      %v2481 = vadd.f32 0.0, %v2480
      %v2482 = vpop.f32.mrb[0].mxu0
      %2483 = vdwg.mxu0
      %v2484 = vsel %vm361, %v2481, 0.0
      %2485 = vadd.xlane.f32.xlu0 %v2484
      %v2486 = vpop.xlane.xlu0 %2485
      %v2487 = vrot.slane %v2486, 4
      %v2488 = vadd.f32 %v2486, %v2487
      %v2489 = vrot.slane %v2488, 2
      %v2490 = vadd.f32 %v2488, %v2489
      %v2491 = vrot.slane %v2490, 1
      %v2492 = vadd.f32 %v2490, %v2491
      %s2493 = vtos %v2492
      %s2494 = smul.f32 %s2493, %s375
      %v2495 = vmul.f32 %v533, %v2412
      %2496 = vmatprep.subr.mxu0 0.0
      %2497 = vmatpush1.msra.mxu0 1.0
      %2498 = vmatprep.subr.mxu0 0.0
      %2499 = vmatpush1.msra.mxu0 1.0
      %2500 = vmatprep.subr.mxu0 0.0
      %2501 = vmatpush1.msra.mxu0 1.0
      %2502 = vmatprep.subr.mxu0 0.0
      %2503 = vmatpush1.msra.mxu0 1.0
      %2504 = vmatprep.subr.mxu0 0.0
      %2505 = vmatpush1.msra.mxu0 1.0
      %2506 = vmatprep.subr.mxu0 0.0
      %2507 = vmatpush1.msra.mxu0 1.0
      %2508 = vmatprep.subr.mxu0 0.0
      %2509 = vmatpush1.msra.mxu0 1.0
      %2510 = vmatprep.subr.mxu0 0.0
      %2511 = vmatpush1.msra.mxu0 1.0
      %2512 = vmatprep.subr.mxu0 0.0
      %2513 = vmatpush1.msra.mxu0 1.0
      %2514 = vmatprep.subr.mxu0 0.0
      %2515 = vmatpush1.msra.mxu0 1.0
      %2516 = vmatprep.subr.mxu0 0.0
      %2517 = vmatpush1.msra.mxu0 1.0
      %2518 = vmatprep.subr.mxu0 0.0
      %2519 = vmatpush1.msra.mxu0 1.0
      %2520 = vmatprep.subr.mxu0 0.0
      %2521 = vmatpush1.msra.mxu0 1.0
      %2522 = vmatprep.subr.mxu0 0.0
      %2523 = vmatpush1.msra.mxu0 1.0
      %2524 = vmatprep.subr.mxu0 0.0
      %2525 = vmatpush1.msra.mxu0 1.0
      %2526 = vmatprep.subr.mxu0 0.0
      %2527 = vmatpush1.msra.mxu0 1.0
      %2528 = vmatprep.subr.mxu0 0.0
      %2529 = vmatpush1.msra.mxu0 0.0
      %2530 = vmatprep.subr.mxu0 0.0
      %2531 = vmatpush1.msra.mxu0 0.0
      %2532 = vmatprep.subr.mxu0 0.0
      %2533 = vmatpush1.msra.mxu0 0.0
      %2534 = vmatprep.subr.mxu0 0.0
      %2535 = vmatpush1.msra.mxu0 0.0
      %2536 = vmatprep.subr.mxu0 0.0
      %2537 = vmatpush1.msra.mxu0 0.0
      %2538 = vmatprep.subr.mxu0 0.0
      %2539 = vmatpush1.msra.mxu0 0.0
      %2540 = vmatprep.subr.mxu0 0.0
      %2541 = vmatpush1.msra.mxu0 0.0
      %2542 = vmatprep.subr.mxu0 0.0
      %2543 = vmatpush1.msra.mxu0 0.0
      %2544 = vmatprep.subr.mxu0 0.0
      %2545 = vmatpush1.msra.mxu0 0.0
      %2546 = vmatprep.subr.mxu0 0.0
      %2547 = vmatpush1.msra.mxu0 0.0
      %2548 = vmatprep.subr.mxu0 0.0
      %2549 = vmatpush1.msra.mxu0 0.0
      %2550 = vmatprep.subr.mxu0 0.0
      %2551 = vmatpush1.msra.mxu0 0.0
      %2552 = vmatprep.subr.mxu0 0.0
      %2553 = vmatpush1.msra.mxu0 0.0
      %2554 = vmatprep.subr.mxu0 0.0
      %2555 = vmatpush1.msra.mxu0 0.0
      %2556 = vmatprep.subr.mxu0 0.0
      %2557 = vmatpush1.msra.mxu0 0.0
      %2558 = vmatprep.subr.mxu0 0.0
      %2559 = vmatpush1.msra.mxu0 0.0
      %2560 = vmatprep.mubr.f32.mxu0 0.0
      %2561 = vmatmul.mubr.f32.gmra.mrb[0].mxu0 %v2495
      %v2562 = vpop.f32.mrb[0].mxu0
      %v2563 = vadd.f32 0.0, %v2562
      %v2564 = vpop.f32.mrb[0].mxu0
      %2565 = vdwg.mxu0
      %v2566 = vsel %vm361, %v2563, 0.0
      %2567 = vadd.xlane.f32.xlu0 %v2566
      %v2568 = vpop.xlane.xlu0 %2567
      %v2569 = vrot.slane %v2568, 4
      %v2570 = vadd.f32 %v2568, %v2569
      %v2571 = vrot.slane %v2570, 2
      %v2572 = vadd.f32 %v2570, %v2571
      %v2573 = vrot.slane %v2572, 1
      %v2574 = vadd.f32 %v2572, %v2573
      %s2575 = vtos %v2574
      %s2576 = smul.f32 %s2575, %s375
      %v2577 = vmul.f32 %v290, %v277
      %v2578 = vand.u32 2147483647, %v265
      %v2579 = vand.u32 2147483647, %v266
      %v2580 = vsub.f32 0.0, %v2578
      %v2581 = vsub.f32 0.0, %v2579
      %v2582 = vmul.f32 %v2580, 1.442695
      %v2583 = vpow.pop %v2582
      %v2584 = vmul.f32 %v2581, 1.442695
      %v2585 = vpow.pop %v2584
      %v2586 = vadd.f32 %v2583, 1.0
      %v2587 = vadd.f32 %v2585, 1.0
      %v2588 = vlog2.pop %v2586
      %v2589 = vmul.f32 %v2588, 0.6931472
      %v2590 = vlog2.pop %v2587
      %v2591 = vmul.f32 %v2590, 0.6931472
      %v2592 = vsub.f32 0.0, %v265
      %v2593 = vsub.f32 0.0, %v266
      %v2594 = vmax.f32 %v2592, 0.0
      %v2595 = vmax.f32 %v2593, 0.0
      %v2596 = vadd.f32 %v2594, %v2589
      %v2597 = vadd.f32 %v2595, %v2591
      %v2598 = vmax.f32 %v265, 0.0
      %v2599 = vmax.f32 %v266, 0.0
      %v2600 = vadd.f32 %v2598, %v2589
      %v2601 = vadd.f32 %v2599, %v2591
      %v2602 = vmin.f32 %v2596, 100.0
      %v2603 = vmin.f32 %v2597, 100.0
      %v2604 = vmul.f32 %v273, %v2602
      %v2605 = vmul.f32 %v274, %v2603
      %v2606 = vsub.f32 1.0, %v273
      %v2607 = vsub.f32 1.0, %v274
      %v2608 = vmin.f32 %v2600, 100.0
      %v2609 = vmin.f32 %v2601, 100.0
      %v2610 = vmul.f32 %v2606, %v2608
      %v2611 = vmul.f32 %v2607, %v2609
      %v2612 = vadd.f32 %v2604, %v2610
      %v2613 = vadd.f32 %v2605, %v2611
      %v2614 = vmul.f32 %v2612, %v2577
      %v2615 = vmul.f32 %v2613, %v2577
      %v2616 = vadd.f32 %v2614, %v2615
      %2617 = vmatprep.subr.mxu0 0.0
      %2618 = vmatpush1.msra.mxu0 1.0
      %2619 = vmatprep.subr.mxu0 0.0
      %2620 = vmatpush1.msra.mxu0 1.0
      %2621 = vmatprep.subr.mxu0 0.0
      %2622 = vmatpush1.msra.mxu0 1.0
      %2623 = vmatprep.subr.mxu0 0.0
      %2624 = vmatpush1.msra.mxu0 1.0
      %2625 = vmatprep.subr.mxu0 0.0
      %2626 = vmatpush1.msra.mxu0 1.0
      %2627 = vmatprep.subr.mxu0 0.0
      %2628 = vmatpush1.msra.mxu0 1.0
      %2629 = vmatprep.subr.mxu0 0.0
      %2630 = vmatpush1.msra.mxu0 1.0
      %2631 = vmatprep.subr.mxu0 0.0
      %2632 = vmatpush1.msra.mxu0 1.0
      %2633 = vmatprep.subr.mxu0 0.0
      %2634 = vmatpush1.msra.mxu0 1.0
      %2635 = vmatprep.subr.mxu0 0.0
      %2636 = vmatpush1.msra.mxu0 1.0
      %2637 = vmatprep.subr.mxu0 0.0
      %2638 = vmatpush1.msra.mxu0 1.0
      %2639 = vmatprep.subr.mxu0 0.0
      %2640 = vmatpush1.msra.mxu0 1.0
      %2641 = vmatprep.subr.mxu0 0.0
      %2642 = vmatpush1.msra.mxu0 1.0
      %2643 = vmatprep.subr.mxu0 0.0
      %2644 = vmatpush1.msra.mxu0 1.0
      %2645 = vmatprep.subr.mxu0 0.0
      %2646 = vmatpush1.msra.mxu0 1.0
      %2647 = vmatprep.subr.mxu0 0.0
      %2648 = vmatpush1.msra.mxu0 1.0
      %2649 = vmatprep.subr.mxu0 0.0
      %2650 = vmatpush1.msra.mxu0 0.0
      %2651 = vmatprep.subr.mxu0 0.0
      %2652 = vmatpush1.msra.mxu0 0.0
      %2653 = vmatprep.subr.mxu0 0.0
      %2654 = vmatpush1.msra.mxu0 0.0
      %2655 = vmatprep.subr.mxu0 0.0
      %2656 = vmatpush1.msra.mxu0 0.0
      %2657 = vmatprep.subr.mxu0 0.0
      %2658 = vmatpush1.msra.mxu0 0.0
      %2659 = vmatprep.subr.mxu0 0.0
      %2660 = vmatpush1.msra.mxu0 0.0
      %2661 = vmatprep.subr.mxu0 0.0
      %2662 = vmatpush1.msra.mxu0 0.0
      %2663 = vmatprep.subr.mxu0 0.0
      %2664 = vmatpush1.msra.mxu0 0.0
      %2665 = vmatprep.subr.mxu0 0.0
      %2666 = vmatpush1.msra.mxu0 0.0
      %2667 = vmatprep.subr.mxu0 0.0
      %2668 = vmatpush1.msra.mxu0 0.0
      %2669 = vmatprep.subr.mxu0 0.0
      %2670 = vmatpush1.msra.mxu0 0.0
      %2671 = vmatprep.subr.mxu0 0.0
      %2672 = vmatpush1.msra.mxu0 0.0
      %2673 = vmatprep.subr.mxu0 0.0
      %2674 = vmatpush1.msra.mxu0 0.0
      %2675 = vmatprep.subr.mxu0 0.0
      %2676 = vmatpush1.msra.mxu0 0.0
      %2677 = vmatprep.subr.mxu0 0.0
      %2678 = vmatpush1.msra.mxu0 0.0
      %2679 = vmatprep.subr.mxu0 0.0
      %2680 = vmatpush1.msra.mxu0 0.0
      %2681 = vmatprep.mubr.f32.mxu0 0.0
      %2682 = vmatmul.mubr.f32.gmra.mrb[0].mxu0 %v2616
      %v2683 = vpop.f32.mrb[0].mxu0
      %v2684 = vadd.f32 0.0, %v2683
      %v2685 = vpop.f32.mrb[0].mxu0
      %2686 = vdwg.mxu0
      %v2687 = vsel %vm361, %v2684, 0.0
      %2688 = vadd.xlane.f32.xlu0 %v2687
      %v2689 = vpop.xlane.xlu0 %2688
      %v2690 = vrot.slane %v2689, 4
      %v2691 = vadd.f32 %v2689, %v2690
      %v2692 = vrot.slane %v2691, 2
      %v2693 = vadd.f32 %v2691, %v2692
      %v2694 = vrot.slane %v2693, 1
      %v2695 = vadd.f32 %v2693, %v2694
      %s2696 = vtos %v2695
      %s2697 = smul.f32 %s2696, %s375
      %v2698 = vsub.f32 %v267, %v275
      %v2699 = vsub.f32 %v268, %v276
      %v2700 = vmul.f32 %v2698, %v2698
      %v2701 = vmul.f32 %v2699, %v2699
      %v2702 = vmul.f32 %v2700, %v2577
      %v2703 = vmul.f32 %v2701, %v2577
      %v2704 = vadd.f32 %v2702, %v2703
      %2705 = vmatprep.subr.mxu0 0.0
      %2706 = vmatpush1.msra.mxu0 1.0
      %2707 = vmatprep.subr.mxu0 0.0
      %2708 = vmatpush1.msra.mxu0 1.0
      %2709 = vmatprep.subr.mxu0 0.0
      %2710 = vmatpush1.msra.mxu0 1.0
      %2711 = vmatprep.subr.mxu0 0.0
      %2712 = vmatpush1.msra.mxu0 1.0
      %2713 = vmatprep.subr.mxu0 0.0
      %2714 = vmatpush1.msra.mxu0 1.0
      %2715 = vmatprep.subr.mxu0 0.0
      %2716 = vmatpush1.msra.mxu0 1.0
      %2717 = vmatprep.subr.mxu0 0.0
      %2718 = vmatpush1.msra.mxu0 1.0
      %2719 = vmatprep.subr.mxu0 0.0
      %2720 = vmatpush1.msra.mxu0 1.0
      %2721 = vmatprep.subr.mxu0 0.0
      %2722 = vmatpush1.msra.mxu0 1.0
      %2723 = vmatprep.subr.mxu0 0.0
      %2724 = vmatpush1.msra.mxu0 1.0
      %2725 = vmatprep.subr.mxu0 0.0
      %2726 = vmatpush1.msra.mxu0 1.0
      %2727 = vmatprep.subr.mxu0 0.0
      %2728 = vmatpush1.msra.mxu0 1.0
      %2729 = vmatprep.subr.mxu0 0.0
      %2730 = vmatpush1.msra.mxu0 1.0
      %2731 = vmatprep.subr.mxu0 0.0
      %2732 = vmatpush1.msra.mxu0 1.0
      %2733 = vmatprep.subr.mxu0 0.0
      %2734 = vmatpush1.msra.mxu0 1.0
      %2735 = vmatprep.subr.mxu0 0.0
      %2736 = vmatpush1.msra.mxu0 1.0
      %2737 = vmatprep.subr.mxu0 0.0
      %2738 = vmatpush1.msra.mxu0 0.0
      %2739 = vmatprep.subr.mxu0 0.0
      %2740 = vmatpush1.msra.mxu0 0.0
      %2741 = vmatprep.subr.mxu0 0.0
      %2742 = vmatpush1.msra.mxu0 0.0
      %2743 = vmatprep.subr.mxu0 0.0
      %2744 = vmatpush1.msra.mxu0 0.0
      %2745 = vmatprep.subr.mxu0 0.0
      %2746 = vmatpush1.msra.mxu0 0.0
      %2747 = vmatprep.subr.mxu0 0.0
      %2748 = vmatpush1.msra.mxu0 0.0
      %2749 = vmatprep.subr.mxu0 0.0
      %2750 = vmatpush1.msra.mxu0 0.0
      %2751 = vmatprep.subr.mxu0 0.0
      %2752 = vmatpush1.msra.mxu0 0.0
      %2753 = vmatprep.subr.mxu0 0.0
      %2754 = vmatpush1.msra.mxu0 0.0
      %2755 = vmatprep.subr.mxu0 0.0
      %2756 = vmatpush1.msra.mxu0 0.0
      %2757 = vmatprep.subr.mxu0 0.0
      %2758 = vmatpush1.msra.mxu0 0.0
      %2759 = vmatprep.subr.mxu0 0.0
      %2760 = vmatpush1.msra.mxu0 0.0
      %2761 = vmatprep.subr.mxu0 0.0
      %2762 = vmatpush1.msra.mxu0 0.0
      %2763 = vmatprep.subr.mxu0 0.0
      %2764 = vmatpush1.msra.mxu0 0.0
      %2765 = vmatprep.subr.mxu0 0.0
      %2766 = vmatpush1.msra.mxu0 0.0
      %2767 = vmatprep.subr.mxu0 0.0
      %2768 = vmatpush1.msra.mxu0 0.0
      %2769 = vmatprep.mubr.f32.mxu0 0.0
      %2770 = vmatmul.mubr.f32.gmra.mrb[0].mxu0 %v2704
      %v2771 = vpop.f32.mrb[0].mxu0
      %v2772 = vadd.f32 0.0, %v2771
      %v2773 = vpop.f32.mrb[0].mxu0
      %2774 = vdwg.mxu0
      %v2775 = vsel %vm361, %v2772, 0.0
      %2776 = vadd.xlane.f32.xlu0 %v2775
      %v2777 = vpop.xlane.xlu0 %2776
      %v2778 = vrot.slane %v2777, 4
      %v2779 = vadd.f32 %v2777, %v2778
      %v2780 = vrot.slane %v2779, 2
      %v2781 = vadd.f32 %v2779, %v2780
      %v2782 = vrot.slane %v2781, 1
      %v2783 = vadd.f32 %v2781, %v2782
      %s2784 = vtos %v2783
      %s2785 = smul.f32 %s2784, %s375
      %s2786 = sadd.f32 %s2494, %s2576
      %s2787 = sadd.f32 %s2786, %s515
      %s2788 = sadd.f32 %s2787, %s2697
      %s2789 = sadd.f32 %s2788, %s2785
      %vm2790 = vcmp.eq.s32.totalorder %v282, 0
      %v2791 = vstv %s2789
      %v2792 = vsel %vm2790, %v2791, 0.0
      %vm2793 = vcmp.eq.s32.totalorder %v282, 1
      %v2794 = vstv %s2494
      %v2795 = vsel %vm2793, %v2794, 0.0
      %v2796 = vadd.f32 %v2792, %v2795
      %vm2797 = vcmp.eq.s32.totalorder %v282, 2
      %v2798 = vstv %s2576
      %v2799 = vsel %vm2797, %v2798, 0.0
      %v2800 = vadd.f32 %v2796, %v2799
      %vm2801 = vcmp.eq.s32.totalorder %v282, 3
      %v2802 = vstv %s515
      %v2803 = vsel %vm2801, %v2802, 0.0
      %v2804 = vadd.f32 %v2800, %v2803
      %vm2805 = vcmp.eq.s32.totalorder %v282, 4
      %v2806 = vstv %s2697
      %v2807 = vsel %vm2805, %v2806, 0.0
      %v2808 = vadd.f32 %v2804, %v2807
      %vm2809 = vcmp.eq.s32.totalorder %v282, 5
      %v2810 = vstv %s2785
      %v2811 = vsel %vm2809, %v2810, 0.0
      %v2812 = vadd.f32 %v2808, %v2811
      %2813 = vst [vmem:[%s252] sm:$0xff] %v2812
      %p2814 = scmp.lt.s32.totalorder %s15, 2
      %s2815 = scalar_select %p2814, %s15, 2
      %s2816 = smul.addr %s2815, 8
      %s2817 = scalar_lea.vmem %s4, %s2816
      // Predicated region
      $region37: #{yolo_v3_loss.1} parent=35 // pred_check
        %p2818 = pneg %p137
      $region38: #{yolo_v3_loss.1} parent=35 // pred_check_branch
        %2820 = sbr.rel (%p2818) target = $region40
      $region39: #{yolo_v3_loss.1} parent=35 // pred_region
        _
      $region40: #{yolo_v3_loss.1} parent=35 // pred_fallthru
        _
    $region36: #{yolo_v3_loss.1} parent=5 // pred_fallthru
      _
    %p2821 = scmp.le.s32.totalorder 2, %s10
    // Predicated region
    $region41: #{yolo_v3_loss.1} parent=5 // pred_check
      %p2822 = pneg %p2821
    $region42: #{yolo_v3_loss.1} parent=5 // pred_check_branch
      %2824 = sbr.rel (%p2822) target = $region44
    $region43: #{yolo_v3_loss.1} parent=5 // pred_region
      %s2825 = ssub.s32 %s10, 2
      // Predicated region
      $region45: #{yolo_v3_loss.1} parent=43 // pred_check
        %p2826 = pneg %p143
      $region46: #{yolo_v3_loss.1} parent=43 // pred_check_branch
        %2828 = sbr.rel (%p2826) target = $region48
      $region47: #{yolo_v3_loss.1} parent=43 // pred_region
        %p2829 = scmp.lt.s32.totalorder %s16, 2
        %s2830 = scalar_select %p2829, %s16, 2
        %s2831 = smul.addr %s2830, 8
        %s2832 = scalar_lea.vmem %s4, %s2831
      $region48: #{yolo_v3_loss.1} parent=43 // pred_fallthru
        _
    $region44: #{yolo_v3_loss.1} parent=5 // pred_fallthru
      _
  $region6: #{yolo_v3_loss.1} parent=0 // loop_footer
    %s14 = sadd.s32 1, %s10
  $region7: #{yolo_v3_loss.1} parent=0 // loop_footer_branch
    %9 = sbr.rel target = $region3
  $region8: #{yolo_v3_loss.1} parent=0 // loop_exit
    _

</llo_original>
